<compile_context>
chip_gen: v6e
topology: v6e:2x2x1
jax: 0.10.0
libtpu: 0.0.40
codegen_flags: <defaults>
</compile_context>

<pallas_src>
import numpy as np
import jax
import jax.numpy as jnp
from jax import lax
from jax.experimental import pallas as pl
from jax.experimental.pallas import tpu as pltpu

SIZ = 5            # siz = window_size = 5 in the module
PIX = SIZ * SIZ    # 25 pixels per frame


def _relu(v):
    return jnp.maximum(v, 0.0)


def mentalnet_kernel(x_ref, m_in_ref, m_pl_ref, m_ls_ref,
                     w1_ref, b1_ref, wres_ref, bres_ref,
                     wlstm_ref, blstm_ref,
                     wcat_ref, dsel_ref, ocol_ref, selT_ref, bfc_ref,
                     out_ref):
    # x_ref   : (R, Cin)  all frames of all samples, row = (t*B+b)*25 + i*5 + j
    # m_*_ref : 0/1 masks, per-row tap validity broadcast over channels
    rr, _ = x_ref.shape
    planes = w1_ref.shape[1]
    rf = m_ls_ref.shape[0]            # B*25 rows per LSTM time step
    steps = rr // rf

    def conv3x3(x, mask, w_flat, bias):
        # x: (r, c) f32, mask: (r, 9*c) f32 {0,1}, w_flat: (9*c, cout) bf16.
        # One fused matmul over the 9 shifted-and-masked copies of x.
        r, c = x.shape
        zpad = jnp.zeros((6, c), jnp.float32)
        padded = jnp.concatenate([zpad, x, zpad], axis=0)           # (r+12, c)
        taps = [lax.slice(padded, (6 + SIZ * a + b, 0),
                          (6 + SIZ * a + b + r, c))
                for a in (-1, 0, 1) for b in (-1, 0, 1)]
        stack = (jnp.concatenate(taps, axis=1) * mask).astype(jnp.bfloat16)
        acc = lax.dot_general(stack, w_flat, (((1,), (0,)), ((), ())),
                              preferred_element_type=jnp.float32)
        return acc if bias is None else acc + bias

    mask_in = m_in_ref[...]
    mask_pl = m_pl_ref[...]
    mask_ls = m_ls_ref[...]

    # ---- ResNet5: conv3x3 + 2 residual blocks (5 convs total) --------------
    x = x_ref[...]
    h = _relu(conv3x3(x, mask_in, w1_ref[...], b1_ref[...]))
    y = _relu(conv3x3(h, mask_pl, wres_ref[0], bres_ref[0]))
    y = conv3x3(y, mask_pl, wres_ref[1], bres_ref[1])
    h = _relu(h + y)
    y = _relu(conv3x3(h, mask_pl, wres_ref[2], bres_ref[2]))
    y = conv3x3(y, mask_pl, wres_ref[3], bres_ref[3])
    h = _relu(h + y)                                  # (R, planes) f32

    # ---- ConvLSTM: one fused conv per time step (4 gates, x & h paths) -----
    wl = wlstm_ref[...]
    bl = blstm_ref[...]
    hs = jnp.zeros((rf, planes), jnp.float32)
    cs = jnp.zeros((rf, planes), jnp.float32)
    for t in range(steps):        # steps is tiny; switch to fori_loop if large
        xt = h[t * rf:(t + 1) * rf, :]
        g = conv3x3(jnp.concatenate([xt, hs], axis=1), mask_ls, wl, bl)
        gi = jax.nn.sigmoid(g[:, 0 * planes:1 * planes])
        gf = jax.nn.sigmoid(g[:, 1 * planes:2 * planes])
        gg = jnp.tanh(g[:, 2 * planes:3 * planes])
        go = jax.nn.sigmoid(g[:, 3 * planes:4 * planes])
        cs = gf * cs + gi * gg
        hs = go * jnp.tanh(cs)

    # ---- relu -> fc1 -> relu -> softmax (batched, 3 small matmuls) ---------
    # u[r, p*n+o]  = sum_c hf[r,c] * W[o, c*25+p]
    # v[r, o]      = u[r, (r%25)*n + o]      (diagonal pick via dsel/ocol)
    # logits[b, o] = sum_{p} v[b*25+p, o]    (per-sample pixel sum via selT)
    hf = _relu(hs).astype(jnp.bfloat16)                # (B*25, planes)
    u = lax.dot_general(hf, wcat_ref[...], (((1,), (0,)), ((), ())),
                        preferred_element_type=jnp.float32)
    v = lax.dot_general(u * dsel_ref[...], ocol_ref[...],
                        (((1,), (0,)), ((), ())),
                        preferred_element_type=jnp.float32)
    logits = lax.dot_general(selT_ref[...], v, (((1,), (0,)), ((), ())),
                             preferred_element_type=jnp.float32)  # (B, n_out)
    logits = _relu(logits + bfc_ref[...])
    m = jnp.max(logits, axis=1, keepdims=True)
    e = jnp.exp(logits - m)
    out_ref[...] = e / jnp.sum(e, axis=1, keepdims=True)


def _conv_w9(w):
    # PyTorch conv weight (Cout, Cin, 3, 3) -> (9, Cin, Cout), tap k = di*3+dj
    cout, cin = w.shape[0], w.shape[1]
    return jnp.transpose(w, (2, 3, 1, 0)).reshape(9, cin, cout)


def _conv_w9_flat(w):
    # -> (9*Cin, Cout), row = k*Cin + ci  (matches the lane-concatenated stack)
    cout, cin = w.shape[0], w.shape[1]
    return _conv_w9(w).reshape(9 * cin, cout)


def _frame_mask9():
    # mask[p, k] = 1 iff conv tap k = (di*3+dj) reads an in-frame pixel
    ii = np.repeat(np.arange(SIZ), SIZ)
    jj = np.tile(np.arange(SIZ), SIZ)
    cols = []
    for a in (-1, 0, 1):
        for b in (-1, 0, 1):
            valid = (ii + a >= 0) & (ii + a < SIZ) & (jj + b >= 0) & (jj + b < SIZ)
            cols.append(valid.astype(np.float32))
    return np.stack(cols, axis=1)                      # (25, 9)


def mentalnet_forward(x_bsc55, params):
    """x_bsc55: (B, steps, Cin, 5, 5) float32 (PyTorch NCHW per frame)."""
    bsz, steps, cin, hh, ww = x_bsc55.shape
    assert hh == SIZ and ww == SIZ
    planes = params["conv1_w"].shape[0]
    n_out = params["fc_w"].shape[0]
    rf = bsz * PIX                 # rows per LSTM step (batch folded into rows)
    rr = steps * rf                # total rows; frame order f = t*B + b

    # channels-last rows: row = (t*B + b)*25 + i*5 + j
    x_rows = jnp.transpose(x_bsc55, (1, 0, 3, 4, 2)).reshape(rr, cin)

    # masks precomputed at (rows, 9*C) granularity (broadcast over channels)
    m9 = _frame_mask9()
    def tap_mask(c, nframes):
        return jnp.asarray(np.tile(np.repeat(m9, c, axis=1), (nframes, 1)),
                           jnp.float32)
    mask_in = tap_mask(cin, steps * bsz)               # (R, 9*cin)
    mask_pl = tap_mask(planes, steps * bsz)            # (R, 9*planes)
    mask_ls = tap_mask(2 * planes, bsz)                # (B*25, 9*2*planes)

    bf16 = jnp.bfloat16
    w1 = _conv_w9_flat(params["conv1_w"]).astype(bf16)
    b1 = params["conv1_b"].reshape(1, planes)
    wres = jnp.stack([_conv_w9_flat(params[f"res{i}_w"]) for i in range(4)],
                     axis=0).astype(bf16)              # (4, 9*planes, planes)
    bres = jnp.stack([params[f"res{i}_b"].reshape(1, planes) for i in range(4)],
                     axis=0)                           # (4, 1, planes)

    # fused ConvLSTM weight: rows = tap-major [x-channels | h-channels],
    # cols = gate-major (i, f, g, o); only the x-path has a bias.
    wx = jnp.stack([_conv_w9(params[f"lstm_wx{g}"]) for g in "ifgo"], 0)
    wh = jnp.stack([_conv_w9(params[f"lstm_wh{g}"]) for g in "ifgo"], 0)
    wxp = jnp.transpose(wx, (1, 2, 0, 3)).reshape(9, planes, 4 * planes)
    whp = jnp.transpose(wh, (1, 2, 0, 3)).reshape(9, planes, 4 * planes)
    wlstm = jnp.concatenate([wxp, whp], axis=1).reshape(
        9 * 2 * planes, 4 * planes).astype(bf16)
    blstm = jnp.concatenate([params[f"lstm_bx{g}"] for g in "ifgo"],
                            axis=0).reshape(1, 4 * planes)

    # fc1 helpers (PyTorch flattening order is (c, i, j) -> index c*25 + p)
    wcat = jnp.transpose(params["fc_w"].reshape(n_out, planes, PIX),
                         (1, 2, 0)).reshape(planes, PIX * n_out).astype(bf16)
    dsel_np = np.zeros((PIX, PIX * n_out), np.float32)
    for p in range(PIX):
        dsel_np[p, p * n_out:(p + 1) * n_out] = 1.0
    dsel = jnp.asarray(np.tile(dsel_np, (bsz, 1)))     # (B*25, 25*n_out)
    ocol = jnp.asarray(np.tile(np.eye(n_out, dtype=np.float32), (PIX, 1)))
    selT = jnp.asarray(np.kron(np.eye(bsz, dtype=np.float32),
                               np.ones((1, PIX), np.float32)))   # (B, B*25)
    bfc = params["fc_b"].reshape(1, n_out)

    inputs = (x_rows, mask_in, mask_pl, mask_ls, w1, b1, wres, bres,
              wlstm, blstm, wcat, dsel, ocol, selT, bfc)

    def full_spec(a):
        if a.ndim == 3:
            return pl.BlockSpec(a.shape, lambda i: (0, 0, 0))
        return pl.BlockSpec(a.shape, lambda i: (0, 0))

    grid_spec = pltpu.PrefetchScalarGridSpec(
        num_scalar_prefetch=0,
        grid=(1,),                                     # whole batch in one step
        in_specs=[full_spec(a) for a in inputs],
        out_specs=pl.BlockSpec((bsz, n_out), lambda i: (0, 0)),
    )
    out = pl.pallas_call(
        mentalnet_kernel,
        out_shape=jax.ShapeDtypeStruct((bsz, n_out), jnp.float32),
        grid_spec=grid_spec,
        compiler_params=pltpu.CompilerParams(
            dimension_semantics=("arbitrary",)),
    )(*inputs)
    return out


def init_params(key, cin, planes, outputs):
    keys = jax.random.split(key, 24)
    ks = iter(keys)

    def conv_w(k, cout, cin_):
        return jax.random.normal(k, (cout, cin_, 3, 3), jnp.float32) * 0.15

    def vec(k, n):
        return jax.random.normal(k, (n,), jnp.float32) * 0.05

    p = {}
    p["conv1_w"] = conv_w(next(ks), planes, cin)
    p["conv1_b"] = vec(next(ks), planes)
    for i in range(4):
        p[f"res{i}_w"] = conv_w(next(ks), planes, planes)
        p[f"res{i}_b"] = vec(next(ks), planes)
    for g in "ifgo":
        p[f"lstm_wx{g}"] = conv_w(next(ks), planes, planes)
        p[f"lstm_bx{g}"] = vec(next(ks), planes)
        p[f"lstm_wh{g}"] = conv_w(next(ks), planes, planes)
    p["fc_w"] = jax.random.normal(next(ks), (outputs, planes * PIX),
                                  jnp.float32) * 0.05
    p["fc_b"] = vec(next(ks), outputs)
    return p


if __name__ == "__main__":
    key = jax.random.PRNGKey(0)
    kx, kp = jax.random.split(key)
    # module defaults: input_channels=4, hidden_channels=[8], step=1, outputs=2
    batch, steps, in_ch, planes, outputs = 2, 1, 4, 8, 2
    x = jax.random.normal(kx, (batch, steps, in_ch, SIZ, SIZ), jnp.float32)
    params = init_params(kp, in_ch, planes, outputs)
    out = jax.block_until_ready(mentalnet_forward(x, params))
    assert out.shape == (batch, outputs)
    assert bool(jnp.all(jnp.isfinite(out)))
    assert bool(jnp.allclose(jnp.sum(out, axis=1), 1.0, atol=1e-5))
    print("KERNEL_OK")
</pallas_src>

<mosaic_0001>
module attributes {stable_mosaic.version = 11 : i64} {
  func.func @mentalnet_kernel(%arg0: i32, %arg1: memref<50x4xf32, #tpu.memory_space<vmem>>, %arg2: memref<50x36xf32, #tpu.memory_space<vmem>>, %arg3: memref<50x72xf32, #tpu.memory_space<vmem>>, %arg4: memref<50x144xf32, #tpu.memory_space<vmem>>, %arg5: memref<36x8xbf16, #tpu.memory_space<vmem>>, %arg6: memref<1x8xf32, #tpu.memory_space<vmem>>, %arg7: memref<4x72x8xbf16, #tpu.memory_space<vmem>>, %arg8: memref<4x1x8xf32, #tpu.memory_space<vmem>>, %arg9: memref<144x32xbf16, #tpu.memory_space<vmem>>, %arg10: memref<1x32xf32, #tpu.memory_space<vmem>>, %arg11: memref<8x50xbf16, #tpu.memory_space<vmem>>, %arg12: memref<50x50xf32, #tpu.memory_space<vmem>>, %arg13: memref<50x2xf32, #tpu.memory_space<vmem>>, %arg14: memref<2x50xf32, #tpu.memory_space<vmem>>, %arg15: memref<1x2xf32, #tpu.memory_space<vmem>>, %arg16: memref<2x2xf32, #tpu.memory_space<vmem>>) attributes {dimension_semantics = [#tpu.dimension_semantics<arbitrary>], iteration_bounds = array<i64: 1>, scalar_prefetch = 0 : i64, scratch_operands = 0 : i64, tpu.core_type = #tpu.core_type<tc>, window_params = [{pipeline_mode = #tpu.pipeline_mode<synchronous>, transform_indices = @transform_0, window_bounds = array<i64: 50, 4>}, {pipeline_mode = #tpu.pipeline_mode<synchronous>, transform_indices = @transform_1, window_bounds = array<i64: 50, 36>}, {pipeline_mode = #tpu.pipeline_mode<synchronous>, transform_indices = @transform_2, window_bounds = array<i64: 50, 72>}, {pipeline_mode = #tpu.pipeline_mode<synchronous>, transform_indices = @transform_3, window_bounds = array<i64: 50, 144>}, {pipeline_mode = #tpu.pipeline_mode<synchronous>, transform_indices = @transform_4, window_bounds = array<i64: 36, 8>}, {pipeline_mode = #tpu.pipeline_mode<synchronous>, transform_indices = @transform_5, window_bounds = array<i64: 1, 8>}, {pipeline_mode = #tpu.pipeline_mode<synchronous>, transform_indices = @transform_6, window_bounds = array<i64: 4, 72, 8>}, {pipeline_mode = #tpu.pipeline_mode<synchronous>, transform_indices = @transform_7, window_bounds = array<i64: 4, 1, 8>}, {pipeline_mode = #tpu.pipeline_mode<synchronous>, transform_indices = @transform_8, window_bounds = array<i64: 144, 32>}, {pipeline_mode = #tpu.pipeline_mode<synchronous>, transform_indices = @transform_9, window_bounds = array<i64: 1, 32>}, {pipeline_mode = #tpu.pipeline_mode<synchronous>, transform_indices = @transform_10, window_bounds = array<i64: 8, 50>}, {pipeline_mode = #tpu.pipeline_mode<synchronous>, transform_indices = @transform_11, window_bounds = array<i64: 50, 50>}, {pipeline_mode = #tpu.pipeline_mode<synchronous>, transform_indices = @transform_12, window_bounds = array<i64: 50, 2>}, {pipeline_mode = #tpu.pipeline_mode<synchronous>, transform_indices = @transform_13, window_bounds = array<i64: 2, 50>}, {pipeline_mode = #tpu.pipeline_mode<synchronous>, transform_indices = @transform_14, window_bounds = array<i64: 1, 2>}, {pipeline_mode = #tpu.pipeline_mode<synchronous>, transform_indices = @transform_15, window_bounds = array<i64: 2, 2>}]} {
    %c0 = arith.constant 0 : index
    %c0_0 = arith.constant 0 : index
    %0 = vector.load %arg2[%c0, %c0_0] : memref<50x36xf32, #tpu.memory_space<vmem>>, vector<50x36xf32>
    %c0_1 = arith.constant 0 : index
    %c0_2 = arith.constant 0 : index
    %1 = vector.load %arg3[%c0_1, %c0_2] : memref<50x72xf32, #tpu.memory_space<vmem>>, vector<50x72xf32>
    %c0_3 = arith.constant 0 : index
    %c0_4 = arith.constant 0 : index
    %2 = vector.load %arg4[%c0_3, %c0_4] : memref<50x144xf32, #tpu.memory_space<vmem>>, vector<50x144xf32>
    %c0_5 = arith.constant 0 : index
    %c0_6 = arith.constant 0 : index
    %3 = vector.load %arg1[%c0_5, %c0_6] : memref<50x4xf32, #tpu.memory_space<vmem>>, vector<50x4xf32>
    %c0_7 = arith.constant 0 : index
    %c0_8 = arith.constant 0 : index
    %4 = vector.load %arg5[%c0_7, %c0_8] : memref<36x8xbf16, #tpu.memory_space<vmem>>, vector<36x8xbf16>
    %c0_9 = arith.constant 0 : index
    %c0_10 = arith.constant 0 : index
    %5 = vector.load %arg6[%c0_9, %c0_10] : memref<1x8xf32, #tpu.memory_space<vmem>>, vector<1x8xf32>
    %cst = arith.constant 0.000000e+00 : f32
    %6 = vector.broadcast %cst : f32 to vector<6x4xf32>
    %7 = tpu.concatenate %6, %3, %6 in 0 : vector<6x4xf32>, vector<50x4xf32>, vector<6x4xf32> -> vector<62x4xf32>
    %8 = vector.extract_strided_slice %7 {offsets = [0, 0], sizes = [50, 4], strides = [1, 1]} : vector<62x4xf32> to vector<50x4xf32>
    %9 = vector.extract_strided_slice %7 {offsets = [1, 0], sizes = [50, 4], strides = [1, 1]} : vector<62x4xf32> to vector<50x4xf32>
    %10 = vector.extract_strided_slice %7 {offsets = [2, 0], sizes = [50, 4], strides = [1, 1]} : vector<62x4xf32> to vector<50x4xf32>
    %11 = vector.extract_strided_slice %7 {offsets = [5, 0], sizes = [50, 4], strides = [1, 1]} : vector<62x4xf32> to vector<50x4xf32>
    %12 = vector.extract_strided_slice %7 {offsets = [6, 0], sizes = [50, 4], strides = [1, 1]} : vector<62x4xf32> to vector<50x4xf32>
    %13 = vector.extract_strided_slice %7 {offsets = [7, 0], sizes = [50, 4], strides = [1, 1]} : vector<62x4xf32> to vector<50x4xf32>
    %14 = vector.extract_strided_slice %7 {offsets = [10, 0], sizes = [50, 4], strides = [1, 1]} : vector<62x4xf32> to vector<50x4xf32>
    %15 = vector.extract_strided_slice %7 {offsets = [11, 0], sizes = [50, 4], strides = [1, 1]} : vector<62x4xf32> to vector<50x4xf32>
    %16 = vector.extract_strided_slice %7 {offsets = [12, 0], sizes = [50, 4], strides = [1, 1]} : vector<62x4xf32> to vector<50x4xf32>
    %17 = tpu.concatenate %8, %9, %10, %11, %12, %13, %14, %15, %16 in 1 : vector<50x4xf32>, vector<50x4xf32>, vector<50x4xf32>, vector<50x4xf32>, vector<50x4xf32>, vector<50x4xf32>, vector<50x4xf32>, vector<50x4xf32>, vector<50x4xf32> -> vector<50x36xf32>
    %18 = arith.mulf %17, %0 : vector<50x36xf32>
    %19 = arith.truncf %18 : vector<50x36xf32> to vector<50x36xbf16>
    %cst_11 = arith.constant dense<0.000000e+00> : vector<50x8xf32>
    %20 = tpu.matmul %19, %4, %cst_11 {dimension_numbers = #tpu.dot_dimension_numbers<[1], [0], [0], [1], [0, 0, 1, 1], [], []>} : vector<50x36xbf16>, vector<36x8xbf16>, vector<50x8xf32> -> vector<50x8xf32>
    %21 = vector.broadcast %5 : vector<1x8xf32> to vector<50x8xf32>
    %22 = arith.addf %20, %21 : vector<50x8xf32>
    %cst_12 = arith.constant 0.000000e+00 : f32
    %23 = vector.broadcast %cst_12 : f32 to vector<50x8xf32>
    %24 = arith.maximumf %22, %23 : vector<50x8xf32>
    %c0_13 = arith.constant 0 : index
    %c0_14 = arith.constant 0 : index
    %c0_15 = arith.constant 0 : index
    %25 = vector.load %arg7[%c0_13, %c0_14, %c0_15] : memref<4x72x8xbf16, #tpu.memory_space<vmem>>, vector<1x72x8xbf16>
    %26 = vector.shape_cast %25 : vector<1x72x8xbf16> to vector<72x8xbf16>
    %c0_16 = arith.constant 0 : index
    %c0_17 = arith.constant 0 : index
    %c0_18 = arith.constant 0 : index
    %27 = vector.load %arg8[%c0_16, %c0_17, %c0_18] : memref<4x1x8xf32, #tpu.memory_space<vmem>>, vector<1x1x8xf32>
    %28 = vector.shape_cast %27 : vector<1x1x8xf32> to vector<1x8xf32>
    %cst_19 = arith.constant 0.000000e+00 : f32
    %29 = vector.broadcast %cst_19 : f32 to vector<6x8xf32>
    %30 = tpu.concatenate %29, %24, %29 in 0 : vector<6x8xf32>, vector<50x8xf32>, vector<6x8xf32> -> vector<62x8xf32>
    %31 = vector.extract_strided_slice %30 {offsets = [0, 0], sizes = [50, 8], strides = [1, 1]} : vector<62x8xf32> to vector<50x8xf32>
    %32 = vector.extract_strided_slice %30 {offsets = [1, 0], sizes = [50, 8], strides = [1, 1]} : vector<62x8xf32> to vector<50x8xf32>
    %33 = vector.extract_strided_slice %30 {offsets = [2, 0], sizes = [50, 8], strides = [1, 1]} : vector<62x8xf32> to vector<50x8xf32>
    %34 = vector.extract_strided_slice %30 {offsets = [5, 0], sizes = [50, 8], strides = [1, 1]} : vector<62x8xf32> to vector<50x8xf32>
    %35 = vector.extract_strided_slice %30 {offsets = [6, 0], sizes = [50, 8], strides = [1, 1]} : vector<62x8xf32> to vector<50x8xf32>
    %36 = vector.extract_strided_slice %30 {offsets = [7, 0], sizes = [50, 8], strides = [1, 1]} : vector<62x8xf32> to vector<50x8xf32>
    %37 = vector.extract_strided_slice %30 {offsets = [10, 0], sizes = [50, 8], strides = [1, 1]} : vector<62x8xf32> to vector<50x8xf32>
    %38 = vector.extract_strided_slice %30 {offsets = [11, 0], sizes = [50, 8], strides = [1, 1]} : vector<62x8xf32> to vector<50x8xf32>
    %39 = vector.extract_strided_slice %30 {offsets = [12, 0], sizes = [50, 8], strides = [1, 1]} : vector<62x8xf32> to vector<50x8xf32>
    %40 = tpu.concatenate %31, %32, %33, %34, %35, %36, %37, %38, %39 in 1 : vector<50x8xf32>, vector<50x8xf32>, vector<50x8xf32>, vector<50x8xf32>, vector<50x8xf32>, vector<50x8xf32>, vector<50x8xf32>, vector<50x8xf32>, vector<50x8xf32> -> vector<50x72xf32>
    %41 = arith.mulf %40, %1 : vector<50x72xf32>
    %42 = arith.truncf %41 : vector<50x72xf32> to vector<50x72xbf16>
    %cst_20 = arith.constant dense<0.000000e+00> : vector<50x8xf32>
    %43 = tpu.matmul %42, %26, %cst_20 {dimension_numbers = #tpu.dot_dimension_numbers<[1], [0], [0], [1], [0, 0, 1, 1], [], []>} : vector<50x72xbf16>, vector<72x8xbf16>, vector<50x8xf32> -> vector<50x8xf32>
    %44 = vector.broadcast %28 : vector<1x8xf32> to vector<50x8xf32>
    %45 = arith.addf %43, %44 : vector<50x8xf32>
    %cst_21 = arith.constant 0.000000e+00 : f32
    %46 = vector.broadcast %cst_21 : f32 to vector<50x8xf32>
    %47 = arith.maximumf %45, %46 : vector<50x8xf32>
    %c1 = arith.constant 1 : index
    %c0_22 = arith.constant 0 : index
    %c0_23 = arith.constant 0 : index
    %48 = vector.load %arg7[%c1, %c0_22, %c0_23] : memref<4x72x8xbf16, #tpu.memory_space<vmem>>, vector<1x72x8xbf16>
    %49 = vector.shape_cast %48 : vector<1x72x8xbf16> to vector<72x8xbf16>
    %c1_24 = arith.constant 1 : index
    %c0_25 = arith.constant 0 : index
    %c0_26 = arith.constant 0 : index
    %50 = vector.load %arg8[%c1_24, %c0_25, %c0_26] : memref<4x1x8xf32, #tpu.memory_space<vmem>>, vector<1x1x8xf32>
    %51 = vector.shape_cast %50 : vector<1x1x8xf32> to vector<1x8xf32>
    %cst_27 = arith.constant 0.000000e+00 : f32
    %52 = vector.broadcast %cst_27 : f32 to vector<6x8xf32>
    %53 = tpu.concatenate %52, %47, %52 in 0 : vector<6x8xf32>, vector<50x8xf32>, vector<6x8xf32> -> vector<62x8xf32>
    %54 = vector.extract_strided_slice %53 {offsets = [0, 0], sizes = [50, 8], strides = [1, 1]} : vector<62x8xf32> to vector<50x8xf32>
    %55 = vector.extract_strided_slice %53 {offsets = [1, 0], sizes = [50, 8], strides = [1, 1]} : vector<62x8xf32> to vector<50x8xf32>
    %56 = vector.extract_strided_slice %53 {offsets = [2, 0], sizes = [50, 8], strides = [1, 1]} : vector<62x8xf32> to vector<50x8xf32>
    %57 = vector.extract_strided_slice %53 {offsets = [5, 0], sizes = [50, 8], strides = [1, 1]} : vector<62x8xf32> to vector<50x8xf32>
    %58 = vector.extract_strided_slice %53 {offsets = [6, 0], sizes = [50, 8], strides = [1, 1]} : vector<62x8xf32> to vector<50x8xf32>
    %59 = vector.extract_strided_slice %53 {offsets = [7, 0], sizes = [50, 8], strides = [1, 1]} : vector<62x8xf32> to vector<50x8xf32>
    %60 = vector.extract_strided_slice %53 {offsets = [10, 0], sizes = [50, 8], strides = [1, 1]} : vector<62x8xf32> to vector<50x8xf32>
    %61 = vector.extract_strided_slice %53 {offsets = [11, 0], sizes = [50, 8], strides = [1, 1]} : vector<62x8xf32> to vector<50x8xf32>
    %62 = vector.extract_strided_slice %53 {offsets = [12, 0], sizes = [50, 8], strides = [1, 1]} : vector<62x8xf32> to vector<50x8xf32>
    %63 = tpu.concatenate %54, %55, %56, %57, %58, %59, %60, %61, %62 in 1 : vector<50x8xf32>, vector<50x8xf32>, vector<50x8xf32>, vector<50x8xf32>, vector<50x8xf32>, vector<50x8xf32>, vector<50x8xf32>, vector<50x8xf32>, vector<50x8xf32> -> vector<50x72xf32>
    %64 = arith.mulf %63, %1 : vector<50x72xf32>
    %65 = arith.truncf %64 : vector<50x72xf32> to vector<50x72xbf16>
    %cst_28 = arith.constant dense<0.000000e+00> : vector<50x8xf32>
    %66 = tpu.matmul %65, %49, %cst_28 {dimension_numbers = #tpu.dot_dimension_numbers<[1], [0], [0], [1], [0, 0, 1, 1], [], []>} : vector<50x72xbf16>, vector<72x8xbf16>, vector<50x8xf32> -> vector<50x8xf32>
    %67 = vector.broadcast %51 : vector<1x8xf32> to vector<50x8xf32>
    %68 = arith.addf %66, %67 : vector<50x8xf32>
    %69 = arith.addf %24, %68 : vector<50x8xf32>
    %cst_29 = arith.constant 0.000000e+00 : f32
    %70 = vector.broadcast %cst_29 : f32 to vector<50x8xf32>
    %71 = arith.maximumf %69, %70 : vector<50x8xf32>
    %c2 = arith.constant 2 : index
    %c0_30 = arith.constant 0 : index
    %c0_31 = arith.constant 0 : index
    %72 = vector.load %arg7[%c2, %c0_30, %c0_31] : memref<4x72x8xbf16, #tpu.memory_space<vmem>>, vector<1x72x8xbf16>
    %73 = vector.shape_cast %72 : vector<1x72x8xbf16> to vector<72x8xbf16>
    %c2_32 = arith.constant 2 : index
    %c0_33 = arith.constant 0 : index
    %c0_34 = arith.constant 0 : index
    %74 = vector.load %arg8[%c2_32, %c0_33, %c0_34] : memref<4x1x8xf32, #tpu.memory_space<vmem>>, vector<1x1x8xf32>
    %75 = vector.shape_cast %74 : vector<1x1x8xf32> to vector<1x8xf32>
    %cst_35 = arith.constant 0.000000e+00 : f32
    %76 = vector.broadcast %cst_35 : f32 to vector<6x8xf32>
    %77 = tpu.concatenate %76, %71, %76 in 0 : vector<6x8xf32>, vector<50x8xf32>, vector<6x8xf32> -> vector<62x8xf32>
    %78 = vector.extract_strided_slice %77 {offsets = [0, 0], sizes = [50, 8], strides = [1, 1]} : vector<62x8xf32> to vector<50x8xf32>
    %79 = vector.extract_strided_slice %77 {offsets = [1, 0], sizes = [50, 8], strides = [1, 1]} : vector<62x8xf32> to vector<50x8xf32>
    %80 = vector.extract_strided_slice %77 {offsets = [2, 0], sizes = [50, 8], strides = [1, 1]} : vector<62x8xf32> to vector<50x8xf32>
    %81 = vector.extract_strided_slice %77 {offsets = [5, 0], sizes = [50, 8], strides = [1, 1]} : vector<62x8xf32> to vector<50x8xf32>
    %82 = vector.extract_strided_slice %77 {offsets = [6, 0], sizes = [50, 8], strides = [1, 1]} : vector<62x8xf32> to vector<50x8xf32>
    %83 = vector.extract_strided_slice %77 {offsets = [7, 0], sizes = [50, 8], strides = [1, 1]} : vector<62x8xf32> to vector<50x8xf32>
    %84 = vector.extract_strided_slice %77 {offsets = [10, 0], sizes = [50, 8], strides = [1, 1]} : vector<62x8xf32> to vector<50x8xf32>
    %85 = vector.extract_strided_slice %77 {offsets = [11, 0], sizes = [50, 8], strides = [1, 1]} : vector<62x8xf32> to vector<50x8xf32>
    %86 = vector.extract_strided_slice %77 {offsets = [12, 0], sizes = [50, 8], strides = [1, 1]} : vector<62x8xf32> to vector<50x8xf32>
    %87 = tpu.concatenate %78, %79, %80, %81, %82, %83, %84, %85, %86 in 1 : vector<50x8xf32>, vector<50x8xf32>, vector<50x8xf32>, vector<50x8xf32>, vector<50x8xf32>, vector<50x8xf32>, vector<50x8xf32>, vector<50x8xf32>, vector<50x8xf32> -> vector<50x72xf32>
    %88 = arith.mulf %87, %1 : vector<50x72xf32>
    %89 = arith.truncf %88 : vector<50x72xf32> to vector<50x72xbf16>
    %cst_36 = arith.constant dense<0.000000e+00> : vector<50x8xf32>
    %90 = tpu.matmul %89, %73, %cst_36 {dimension_numbers = #tpu.dot_dimension_numbers<[1], [0], [0], [1], [0, 0, 1, 1], [], []>} : vector<50x72xbf16>, vector<72x8xbf16>, vector<50x8xf32> -> vector<50x8xf32>
    %91 = vector.broadcast %75 : vector<1x8xf32> to vector<50x8xf32>
    %92 = arith.addf %90, %91 : vector<50x8xf32>
    %cst_37 = arith.constant 0.000000e+00 : f32
    %93 = vector.broadcast %cst_37 : f32 to vector<50x8xf32>
    %94 = arith.maximumf %92, %93 : vector<50x8xf32>
    %c3 = arith.constant 3 : index
    %c0_38 = arith.constant 0 : index
    %c0_39 = arith.constant 0 : index
    %95 = vector.load %arg7[%c3, %c0_38, %c0_39] : memref<4x72x8xbf16, #tpu.memory_space<vmem>>, vector<1x72x8xbf16>
    %96 = vector.shape_cast %95 : vector<1x72x8xbf16> to vector<72x8xbf16>
    %c3_40 = arith.constant 3 : index
    %c0_41 = arith.constant 0 : index
    %c0_42 = arith.constant 0 : index
    %97 = vector.load %arg8[%c3_40, %c0_41, %c0_42] : memref<4x1x8xf32, #tpu.memory_space<vmem>>, vector<1x1x8xf32>
    %98 = vector.shape_cast %97 : vector<1x1x8xf32> to vector<1x8xf32>
    %cst_43 = arith.constant 0.000000e+00 : f32
    %99 = vector.broadcast %cst_43 : f32 to vector<6x8xf32>
    %100 = tpu.concatenate %99, %94, %99 in 0 : vector<6x8xf32>, vector<50x8xf32>, vector<6x8xf32> -> vector<62x8xf32>
    %101 = vector.extract_strided_slice %100 {offsets = [0, 0], sizes = [50, 8], strides = [1, 1]} : vector<62x8xf32> to vector<50x8xf32>
    %102 = vector.extract_strided_slice %100 {offsets = [1, 0], sizes = [50, 8], strides = [1, 1]} : vector<62x8xf32> to vector<50x8xf32>
    %103 = vector.extract_strided_slice %100 {offsets = [2, 0], sizes = [50, 8], strides = [1, 1]} : vector<62x8xf32> to vector<50x8xf32>
    %104 = vector.extract_strided_slice %100 {offsets = [5, 0], sizes = [50, 8], strides = [1, 1]} : vector<62x8xf32> to vector<50x8xf32>
    %105 = vector.extract_strided_slice %100 {offsets = [6, 0], sizes = [50, 8], strides = [1, 1]} : vector<62x8xf32> to vector<50x8xf32>
    %106 = vector.extract_strided_slice %100 {offsets = [7, 0], sizes = [50, 8], strides = [1, 1]} : vector<62x8xf32> to vector<50x8xf32>
    %107 = vector.extract_strided_slice %100 {offsets = [10, 0], sizes = [50, 8], strides = [1, 1]} : vector<62x8xf32> to vector<50x8xf32>
    %108 = vector.extract_strided_slice %100 {offsets = [11, 0], sizes = [50, 8], strides = [1, 1]} : vector<62x8xf32> to vector<50x8xf32>
    %109 = vector.extract_strided_slice %100 {offsets = [12, 0], sizes = [50, 8], strides = [1, 1]} : vector<62x8xf32> to vector<50x8xf32>
    %110 = tpu.concatenate %101, %102, %103, %104, %105, %106, %107, %108, %109 in 1 : vector<50x8xf32>, vector<50x8xf32>, vector<50x8xf32>, vector<50x8xf32>, vector<50x8xf32>, vector<50x8xf32>, vector<50x8xf32>, vector<50x8xf32>, vector<50x8xf32> -> vector<50x72xf32>
    %111 = arith.mulf %110, %1 : vector<50x72xf32>
    %112 = arith.truncf %111 : vector<50x72xf32> to vector<50x72xbf16>
    %cst_44 = arith.constant dense<0.000000e+00> : vector<50x8xf32>
    %113 = tpu.matmul %112, %96, %cst_44 {dimension_numbers = #tpu.dot_dimension_numbers<[1], [0], [0], [1], [0, 0, 1, 1], [], []>} : vector<50x72xbf16>, vector<72x8xbf16>, vector<50x8xf32> -> vector<50x8xf32>
    %114 = vector.broadcast %98 : vector<1x8xf32> to vector<50x8xf32>
    %115 = arith.addf %113, %114 : vector<50x8xf32>
    %116 = arith.addf %71, %115 : vector<50x8xf32>
    %cst_45 = arith.constant 0.000000e+00 : f32
    %117 = vector.broadcast %cst_45 : f32 to vector<50x8xf32>
    %118 = arith.maximumf %116, %117 : vector<50x8xf32>
    %c0_46 = arith.constant 0 : index
    %c0_47 = arith.constant 0 : index
    %119 = vector.load %arg9[%c0_46, %c0_47] : memref<144x32xbf16, #tpu.memory_space<vmem>>, vector<144x32xbf16>
    %c0_48 = arith.constant 0 : index
    %c0_49 = arith.constant 0 : index
    %120 = vector.load %arg10[%c0_48, %c0_49] : memref<1x32xf32, #tpu.memory_space<vmem>>, vector<1x32xf32>
    %cst_50 = arith.constant 0.000000e+00 : f32
    %121 = vector.broadcast %cst_50 : f32 to vector<50x8xf32>
    %cst_51 = arith.constant 0.000000e+00 : f32
    %122 = vector.broadcast %cst_51 : f32 to vector<50x8xf32>
    %123 = tpu.concatenate %118, %121 in 1 : vector<50x8xf32>, vector<50x8xf32> -> vector<50x16xf32>
    %cst_52 = arith.constant 0.000000e+00 : f32
    %124 = vector.broadcast %cst_52 : f32 to vector<6x16xf32>
    %125 = tpu.concatenate %124, %123, %124 in 0 : vector<6x16xf32>, vector<50x16xf32>, vector<6x16xf32> -> vector<62x16xf32>
    %126 = vector.extract_strided_slice %125 {offsets = [0, 0], sizes = [50, 16], strides = [1, 1]} : vector<62x16xf32> to vector<50x16xf32>
    %127 = vector.extract_strided_slice %125 {offsets = [1, 0], sizes = [50, 16], strides = [1, 1]} : vector<62x16xf32> to vector<50x16xf32>
    %128 = vector.extract_strided_slice %125 {offsets = [2, 0], sizes = [50, 16], strides = [1, 1]} : vector<62x16xf32> to vector<50x16xf32>
    %129 = vector.extract_strided_slice %125 {offsets = [5, 0], sizes = [50, 16], strides = [1, 1]} : vector<62x16xf32> to vector<50x16xf32>
    %130 = vector.extract_strided_slice %125 {offsets = [6, 0], sizes = [50, 16], strides = [1, 1]} : vector<62x16xf32> to vector<50x16xf32>
    %131 = vector.extract_strided_slice %125 {offsets = [7, 0], sizes = [50, 16], strides = [1, 1]} : vector<62x16xf32> to vector<50x16xf32>
    %132 = vector.extract_strided_slice %125 {offsets = [10, 0], sizes = [50, 16], strides = [1, 1]} : vector<62x16xf32> to vector<50x16xf32>
    %133 = vector.extract_strided_slice %125 {offsets = [11, 0], sizes = [50, 16], strides = [1, 1]} : vector<62x16xf32> to vector<50x16xf32>
    %134 = vector.extract_strided_slice %125 {offsets = [12, 0], sizes = [50, 16], strides = [1, 1]} : vector<62x16xf32> to vector<50x16xf32>
    %135 = tpu.concatenate %126, %127, %128, %129, %130, %131, %132, %133, %134 in 1 : vector<50x16xf32>, vector<50x16xf32>, vector<50x16xf32>, vector<50x16xf32>, vector<50x16xf32>, vector<50x16xf32>, vector<50x16xf32>, vector<50x16xf32>, vector<50x16xf32> -> vector<50x144xf32>
    %136 = arith.mulf %135, %2 : vector<50x144xf32>
    %137 = arith.truncf %136 : vector<50x144xf32> to vector<50x144xbf16>
    %cst_53 = arith.constant dense<0.000000e+00> : vector<50x32xf32>
    %138 = tpu.matmul %137, %119, %cst_53 {dimension_numbers = #tpu.dot_dimension_numbers<[1], [0], [0], [1], [0, 0, 1, 1], [], []>} : vector<50x144xbf16>, vector<144x32xbf16>, vector<50x32xf32> -> vector<50x32xf32>
    %139 = vector.broadcast %120 : vector<1x32xf32> to vector<50x32xf32>
    %140 = arith.addf %138, %139 : vector<50x32xf32>
    %141 = vector.extract_strided_slice %140 {offsets = [0, 0], sizes = [50, 8], strides = [1, 1]} : vector<50x32xf32> to vector<50x8xf32>
    %142 = arith.negf %141 : vector<50x8xf32>
    %143 = math.exp %142 : vector<50x8xf32>
    %cst_54 = arith.constant 1.000000e+00 : f32
    %144 = vector.broadcast %cst_54 : f32 to vector<50x8xf32>
    %145 = arith.addf %144, %143 : vector<50x8xf32>
    %146 = arith.divf %144, %145 : vector<50x8xf32>
    %147 = vector.extract_strided_slice %140 {offsets = [0, 8], sizes = [50, 8], strides = [1, 1]} : vector<50x32xf32> to vector<50x8xf32>
    %148 = arith.negf %147 : vector<50x8xf32>
    %149 = math.exp %148 : vector<50x8xf32>
    %cst_55 = arith.constant 1.000000e+00 : f32
    %150 = vector.broadcast %cst_55 : f32 to vector<50x8xf32>
    %151 = arith.addf %150, %149 : vector<50x8xf32>
    %152 = arith.divf %150, %151 : vector<50x8xf32>
    %153 = vector.extract_strided_slice %140 {offsets = [0, 16], sizes = [50, 8], strides = [1, 1]} : vector<50x32xf32> to vector<50x8xf32>
    %154 = math.tanh %153 : vector<50x8xf32>
    %155 = vector.extract_strided_slice %140 {offsets = [0, 24], sizes = [50, 8], strides = [1, 1]} : vector<50x32xf32> to vector<50x8xf32>
    %156 = arith.negf %155 : vector<50x8xf32>
    %157 = math.exp %156 : vector<50x8xf32>
    %cst_56 = arith.constant 1.000000e+00 : f32
    %158 = vector.broadcast %cst_56 : f32 to vector<50x8xf32>
    %159 = arith.addf %158, %157 : vector<50x8xf32>
    %160 = arith.divf %158, %159 : vector<50x8xf32>
    %161 = arith.mulf %152, %122 : vector<50x8xf32>
    %162 = arith.mulf %146, %154 : vector<50x8xf32>
    %163 = arith.addf %161, %162 : vector<50x8xf32>
    %164 = math.tanh %163 : vector<50x8xf32>
    %165 = arith.mulf %160, %164 : vector<50x8xf32>
    %cst_57 = arith.constant 0.000000e+00 : f32
    %166 = vector.broadcast %cst_57 : f32 to vector<50x8xf32>
    %167 = arith.maximumf %165, %166 : vector<50x8xf32>
    %168 = arith.truncf %167 : vector<50x8xf32> to vector<50x8xbf16>
    %c0_58 = arith.constant 0 : index
    %c0_59 = arith.constant 0 : index
    %169 = vector.load %arg11[%c0_58, %c0_59] : memref<8x50xbf16, #tpu.memory_space<vmem>>, vector<8x50xbf16>
    %cst_60 = arith.constant dense<0.000000e+00> : vector<50x50xf32>
    %170 = tpu.matmul %168, %169, %cst_60 {dimension_numbers = #tpu.dot_dimension_numbers<[1], [0], [0], [1], [0, 0, 1, 1], [], []>} : vector<50x8xbf16>, vector<8x50xbf16>, vector<50x50xf32> -> vector<50x50xf32>
    %c0_61 = arith.constant 0 : index
    %c0_62 = arith.constant 0 : index
    %171 = vector.load %arg12[%c0_61, %c0_62] : memref<50x50xf32, #tpu.memory_space<vmem>>, vector<50x50xf32>
    %172 = arith.mulf %170, %171 : vector<50x50xf32>
    %c0_63 = arith.constant 0 : index
    %c0_64 = arith.constant 0 : index
    %173 = vector.load %arg13[%c0_63, %c0_64] : memref<50x2xf32, #tpu.memory_space<vmem>>, vector<50x2xf32>
    %cst_65 = arith.constant dense<0.000000e+00> : vector<50x2xf32>
    %174 = tpu.matmul %172, %173, %cst_65 {dimension_numbers = #tpu.dot_dimension_numbers<[1], [0], [0], [1], [0, 0, 1, 1], [], []>} : vector<50x50xf32>, vector<50x2xf32>, vector<50x2xf32> -> vector<50x2xf32>
    %c0_66 = arith.constant 0 : index
    %c0_67 = arith.constant 0 : index
    %175 = vector.load %arg14[%c0_66, %c0_67] : memref<2x50xf32, #tpu.memory_space<vmem>>, vector<2x50xf32>
    %cst_68 = arith.constant dense<0.000000e+00> : vector<2x2xf32>
    %176 = tpu.matmul %175, %174, %cst_68 {dimension_numbers = #tpu.dot_dimension_numbers<[1], [0], [0], [1], [0, 0, 1, 1], [], []>} : vector<2x50xf32>, vector<50x2xf32>, vector<2x2xf32> -> vector<2x2xf32>
    %c0_69 = arith.constant 0 : index
    %c0_70 = arith.constant 0 : index
    %177 = vector.load %arg15[%c0_69, %c0_70] : memref<1x2xf32, #tpu.memory_space<vmem>>, vector<1x2xf32>
    %178 = vector.broadcast %177 : vector<1x2xf32> to vector<2x2xf32>
    %179 = arith.addf %176, %178 : vector<2x2xf32>
    %cst_71 = arith.constant 0.000000e+00 : f32
    %180 = vector.broadcast %cst_71 : f32 to vector<2x2xf32>
    %181 = arith.maximumf %179, %180 : vector<2x2xf32>
    %cst_72 = arith.constant dense<0xFF800000> : vector<2xf32>
    %182 = vector.multi_reduction <maximumf>, %181, %cst_72 [1] : vector<2x2xf32> to vector<2xf32>
    %183 = vector.shape_cast %182 : vector<2xf32> to vector<2x1xf32>
    %184 = vector.broadcast %183 : vector<2x1xf32> to vector<2x2xf32>
    %185 = arith.subf %181, %184 : vector<2x2xf32>
    %186 = math.exp %185 : vector<2x2xf32>
    %cst_73 = arith.constant dense<0.000000e+00> : vector<2xf32>
    %187 = vector.multi_reduction <add>, %186, %cst_73 [1] : vector<2x2xf32> to vector<2xf32>
    %188 = vector.shape_cast %187 : vector<2xf32> to vector<2x1xf32>
    %189 = vector.broadcast %188 : vector<2x1xf32> to vector<2x2xf32>
    %190 = arith.divf %186, %189 : vector<2x2xf32>
    %c0_74 = arith.constant 0 : index
    %c0_75 = arith.constant 0 : index
    %191 = vector.load %arg16[%c0_74, %c0_75] : memref<2x2xf32, #tpu.memory_space<vmem>>, vector<2x2xf32>
    tpu.vector_store %arg16[%c0_74, %c0_75], %190 {strides = array<i32>} : memref<2x2xf32, #tpu.memory_space<vmem>>, vector<2x2xf32>,
    return
  }
  func.func @transform_0(%arg0: i32) -> (i32, i32) {
    %c0_i32 = arith.constant 0 : i32
    %c0_i32_0 = arith.constant 0 : i32
    %c0_i32_1 = arith.constant 0 : i32
    return %c0_i32, %c0_i32_0 : i32, i32
  }
  func.func @transform_1(%arg0: i32) -> (i32, i32) {
    %c0_i32 = arith.constant 0 : i32
    %c0_i32_0 = arith.constant 0 : i32
    %c0_i32_1 = arith.constant 0 : i32
    return %c0_i32, %c0_i32_0 : i32, i32
  }
  func.func @transform_2(%arg0: i32) -> (i32, i32) {
    %c0_i32 = arith.constant 0 : i32
    %c0_i32_0 = arith.constant 0 : i32
    %c0_i32_1 = arith.constant 0 : i32
    return %c0_i32, %c0_i32_0 : i32, i32
  }
  func.func @transform_3(%arg0: i32) -> (i32, i32) {
    %c0_i32 = arith.constant 0 : i32
    %c0_i32_0 = arith.constant 0 : i32
    %c0_i32_1 = arith.constant 0 : i32
    return %c0_i32, %c0_i32_0 : i32, i32
  }
  func.func @transform_4(%arg0: i32) -> (i32, i32) {
    %c0_i32 = arith.constant 0 : i32
    %c0_i32_0 = arith.constant 0 : i32
    %c0_i32_1 = arith.constant 0 : i32
    return %c0_i32, %c0_i32_0 : i32, i32
  }
  func.func @transform_5(%arg0: i32) -> (i32, i32) {
    %c0_i32 = arith.constant 0 : i32
    %c0_i32_0 = arith.constant 0 : i32
    %c0_i32_1 = arith.constant 0 : i32
    return %c0_i32, %c0_i32_0 : i32, i32
  }
  func.func @transform_6(%arg0: i32) -> (i32, i32, i32) {
    %c0_i32 = arith.constant 0 : i32
    %c0_i32_0 = arith.constant 0 : i32
    %c0_i32_1 = arith.constant 0 : i32
    %c0_i32_2 = arith.constant 0 : i32
    return %c0_i32, %c0_i32_0, %c0_i32_1 : i32, i32, i32
  }
  func.func @transform_7(%arg0: i32) -> (i32, i32, i32) {
    %c0_i32 = arith.constant 0 : i32
    %c0_i32_0 = arith.constant 0 : i32
    %c0_i32_1 = arith.constant 0 : i32
    %c0_i32_2 = arith.constant 0 : i32
    return %c0_i32, %c0_i32_0, %c0_i32_1 : i32, i32, i32
  }
  func.func @transform_8(%arg0: i32) -> (i32, i32) {
    %c0_i32 = arith.constant 0 : i32
    %c0_i32_0 = arith.constant 0 : i32
    %c0_i32_1 = arith.constant 0 : i32
    return %c0_i32, %c0_i32_0 : i32, i32
  }
  func.func @transform_9(%arg0: i32) -> (i32, i32) {
    %c0_i32 = arith.constant 0 : i32
    %c0_i32_0 = arith.constant 0 : i32
    %c0_i32_1 = arith.constant 0 : i32
    return %c0_i32, %c0_i32_0 : i32, i32
  }
  func.func @transform_10(%arg0: i32) -> (i32, i32) {
    %c0_i32 = arith.constant 0 : i32
    %c0_i32_0 = arith.constant 0 : i32
    %c0_i32_1 = arith.constant 0 : i32
    return %c0_i32, %c0_i32_0 : i32, i32
  }
  func.func @transform_11(%arg0: i32) -> (i32, i32) {
    %c0_i32 = arith.constant 0 : i32
    %c0_i32_0 = arith.constant 0 : i32
    %c0_i32_1 = arith.constant 0 : i32
    return %c0_i32, %c0_i32_0 : i32, i32
  }
  func.func @transform_12(%arg0: i32) -> (i32, i32) {
    %c0_i32 = arith.constant 0 : i32
    %c0_i32_0 = arith.constant 0 : i32
    %c0_i32_1 = arith.constant 0 : i32
    return %c0_i32, %c0_i32_0 : i32, i32
  }
  func.func @transform_13(%arg0: i32) -> (i32, i32) {
    %c0_i32 = arith.constant 0 : i32
    %c0_i32_0 = arith.constant 0 : i32
    %c0_i32_1 = arith.constant 0 : i32
    return %c0_i32, %c0_i32_0 : i32, i32
  }
  func.func @transform_14(%arg0: i32) -> (i32, i32) {
    %c0_i32 = arith.constant 0 : i32
    %c0_i32_0 = arith.constant 0 : i32
    %c0_i32_1 = arith.constant 0 : i32
    return %c0_i32, %c0_i32_0 : i32, i32
  }
  func.func @transform_15(%arg0: i32) -> (i32, i32) {
    %c0_i32 = arith.constant 0 : i32
    %c0_i32_0 = arith.constant 0 : i32
    %c0_i32_1 = arith.constant 0 : i32
    return %c0_i32, %c0_i32_0 : i32, i32
  }
}

</mosaic_0001>

<llo_original>
// kernel: tpu_custom_call.1
$region0: #{tpu_custom_call.1}
  #allocation0 [shape = 'u32[]', space=smem, size = 0x4, offset = 0x4, fixed_abs, tag = 'smem constant byte address 0x4 - core index']
  #allocation1 [shape = 'u32[144,128]{1,0:T(1,128)}', space=vmem, size = 0x12000, scoped, tag = 'internal scratch']
  %s0 = inlined_call_operand.vmem [shape: f32[50,4], index: 0, kind: input, shape index: {}]
  %s1 = inlined_call_operand.vmem [shape: f32[50,36], index: 1, kind: input, shape index: {}]
  %s2 = inlined_call_operand.vmem [shape: f32[50,72], index: 2, kind: input, shape index: {}]
  %s3 = inlined_call_operand.vmem [shape: f32[50,144], index: 3, kind: input, shape index: {}]
  %s4 = inlined_call_operand.vmem [shape: bf16[36,8], index: 4, kind: input, shape index: {}]
  %s5 = inlined_call_operand.vmem [shape: f32[1,8], index: 5, kind: input, shape index: {}]
  %s6 = inlined_call_operand.vmem [shape: bf16[4,72,8], index: 6, kind: input, shape index: {}]
  %s7 = inlined_call_operand.vmem [shape: f32[4,1,8], index: 7, kind: input, shape index: {}]
  %s8 = inlined_call_operand.vmem [shape: bf16[144,32], index: 8, kind: input, shape index: {}]
  %s9 = inlined_call_operand.vmem [shape: f32[1,32], index: 9, kind: input, shape index: {}]
  %s10 = inlined_call_operand.vmem [shape: bf16[8,50], index: 10, kind: input, shape index: {}]
  %s11 = inlined_call_operand.vmem [shape: f32[50,50], index: 11, kind: input, shape index: {}]
  %s12 = inlined_call_operand.vmem [shape: f32[50,2], index: 12, kind: input, shape index: {}]
  %s13 = inlined_call_operand.vmem [shape: f32[2,50], index: 13, kind: input, shape index: {}]
  %s14 = inlined_call_operand.vmem [shape: f32[1,2], index: 14, kind: input, shape index: {}]
  %s15 = inlined_call_operand.hbm [shape: f32[2,2], index: 15, kind: output, shape index: {}]
  %s16 = sld [smem:[#allocation0]]
  $region70: #{tpu_custom_call.1} parent=0
    _
  %s18 = ssub.s32 1, %s16
  %s19 = scalar_select 0, %s18, %s16
  $region1: #{tpu_custom_call.1} parent=0
    #allocation2 [shape = 'u8[1024]{0}', space=vmem, size = 0x400, scoped, tag = 'output window, operand 0, single buffered']
    #allocation3 [shape = 's32[1]{0}', space=sflag, size = 0x4, scoped, tag = 'scoped memory for tpu_custom_call.1']
    %20 = vsyncpa [#allocation3], 0
    // Predicated region
    $region2: #{tpu_custom_call.1} parent=1 // pred_check
      _
    $region3: #{tpu_custom_call.1} parent=1 // pred_check_branch
      %22 = sbr.rel (0) target = $region5
    $region4: #{tpu_custom_call.1} parent=1 // pred_region
      _
    $region5: #{tpu_custom_call.1} parent=1 // pred_fallthru
      _
    // Predicated region
    $region6: #{tpu_custom_call.1} parent=1 // pred_check
      _
    $region7: #{tpu_custom_call.1} parent=1 // pred_check_branch
      %24 = sbr.rel (0) target = $region9
    $region8: #{tpu_custom_call.1} parent=1 // pred_region
      _
    $region9: #{tpu_custom_call.1} parent=1 // pred_fallthru
      _
    // Predicated region
    $region10: #{tpu_custom_call.1} parent=1 // pred_check
      _
    $region11: #{tpu_custom_call.1} parent=1 // pred_check_branch
      %26 = sbr.rel (0) target = $region13
    $region12: #{tpu_custom_call.1} parent=1 // pred_region
      _
    $region13: #{tpu_custom_call.1} parent=1 // pred_fallthru
      _
    // Predicated region
    $region14: #{tpu_custom_call.1} parent=1 // pred_check
      _
    $region15: #{tpu_custom_call.1} parent=1 // pred_check_branch
      %28 = sbr.rel (0) target = $region17
    $region16: #{tpu_custom_call.1} parent=1 // pred_region
      _
    $region17: #{tpu_custom_call.1} parent=1 // pred_fallthru
      _
    // Predicated region
    $region18: #{tpu_custom_call.1} parent=1 // pred_check
      _
    $region19: #{tpu_custom_call.1} parent=1 // pred_check_branch
      %30 = sbr.rel (0) target = $region21
    $region20: #{tpu_custom_call.1} parent=1 // pred_region
      _
    $region21: #{tpu_custom_call.1} parent=1 // pred_fallthru
      _
    // Predicated region
    $region22: #{tpu_custom_call.1} parent=1 // pred_check
      _
    $region23: #{tpu_custom_call.1} parent=1 // pred_check_branch
      %32 = sbr.rel (0) target = $region25
    $region24: #{tpu_custom_call.1} parent=1 // pred_region
      _
    $region25: #{tpu_custom_call.1} parent=1 // pred_fallthru
      _
    // Predicated region
    $region26: #{tpu_custom_call.1} parent=1 // pred_check
      _
    $region27: #{tpu_custom_call.1} parent=1 // pred_check_branch
      %34 = sbr.rel (0) target = $region29
    $region28: #{tpu_custom_call.1} parent=1 // pred_region
      _
    $region29: #{tpu_custom_call.1} parent=1 // pred_fallthru
      _
    // Predicated region
    $region30: #{tpu_custom_call.1} parent=1 // pred_check
      _
    $region31: #{tpu_custom_call.1} parent=1 // pred_check_branch
      %36 = sbr.rel (0) target = $region33
    $region32: #{tpu_custom_call.1} parent=1 // pred_region
      _
    $region33: #{tpu_custom_call.1} parent=1 // pred_fallthru
      _
    // Predicated region
    $region34: #{tpu_custom_call.1} parent=1 // pred_check
      _
    $region35: #{tpu_custom_call.1} parent=1 // pred_check_branch
      %38 = sbr.rel (0) target = $region37
    $region36: #{tpu_custom_call.1} parent=1 // pred_region
      _
    $region37: #{tpu_custom_call.1} parent=1 // pred_fallthru
      _
    // Predicated region
    $region38: #{tpu_custom_call.1} parent=1 // pred_check
      _
    $region39: #{tpu_custom_call.1} parent=1 // pred_check_branch
      %40 = sbr.rel (0) target = $region41
    $region40: #{tpu_custom_call.1} parent=1 // pred_region
      _
    $region41: #{tpu_custom_call.1} parent=1 // pred_fallthru
      _
    // Predicated region
    $region42: #{tpu_custom_call.1} parent=1 // pred_check
      _
    $region43: #{tpu_custom_call.1} parent=1 // pred_check_branch
      %42 = sbr.rel (0) target = $region45
    $region44: #{tpu_custom_call.1} parent=1 // pred_region
      _
    $region45: #{tpu_custom_call.1} parent=1 // pred_fallthru
      _
    // Predicated region
    $region46: #{tpu_custom_call.1} parent=1 // pred_check
      _
    $region47: #{tpu_custom_call.1} parent=1 // pred_check_branch
      %44 = sbr.rel (0) target = $region49
    $region48: #{tpu_custom_call.1} parent=1 // pred_region
      _
    $region49: #{tpu_custom_call.1} parent=1 // pred_fallthru
      _
    // Predicated region
    $region50: #{tpu_custom_call.1} parent=1 // pred_check
      _
    $region51: #{tpu_custom_call.1} parent=1 // pred_check_branch
      %46 = sbr.rel (0) target = $region53
    $region52: #{tpu_custom_call.1} parent=1 // pred_region
      _
    $region53: #{tpu_custom_call.1} parent=1 // pred_fallthru
      _
    // Predicated region
    $region54: #{tpu_custom_call.1} parent=1 // pred_check
      _
    $region55: #{tpu_custom_call.1} parent=1 // pred_check_branch
      %48 = sbr.rel (0) target = $region57
    $region56: #{tpu_custom_call.1} parent=1 // pred_region
      _
    $region57: #{tpu_custom_call.1} parent=1 // pred_fallthru
      _
    // Predicated region
    $region58: #{tpu_custom_call.1} parent=1 // pred_check
      _
    $region59: #{tpu_custom_call.1} parent=1 // pred_check_branch
      %50 = sbr.rel (0) target = $region61
    $region60: #{tpu_custom_call.1} parent=1 // pred_region
      _
    $region61: #{tpu_custom_call.1} parent=1 // pred_fallthru
      _
    %v52 = vld [vmem:[%s1] sm:$0xff]
    %v53 = vld [vmem:[%s1 + $0x8] sm:$0xff]
    %v54 = vld [vmem:[%s1 + $0x10] sm:$0xff]
    %v55 = vld [vmem:[%s1 + $0x18] sm:$0xff]
    %v56 = vld [vmem:[%s1 + $0x20] sm:$0xff]
    %v57 = vld [vmem:[%s1 + $0x28] sm:$0xff]
    %v58 = vld [vmem:[%s1 + $0x30] sm:$0x3]
    %v59 = vld [vmem:[%s2] sm:$0xff]
    %v60 = vld [vmem:[%s2 + $0x8] sm:$0xff]
    %v61 = vld [vmem:[%s2 + $0x10] sm:$0xff]
    %v62 = vld [vmem:[%s2 + $0x18] sm:$0xff]
    %v63 = vld [vmem:[%s2 + $0x20] sm:$0xff]
    %v64 = vld [vmem:[%s2 + $0x28] sm:$0xff]
    %v65 = vld [vmem:[%s2 + $0x30] sm:$0x3]
    %v66 = vld [vmem:[%s3] sm:$0xff]
    %v67 = vld [vmem:[%s3 + $0x8] sm:$0xff]
    %v68 = vld [vmem:[%s3 + $0x10] sm:$0xff]
    %v69 = vld [vmem:[%s3 + $0x18] sm:$0xff]
    %v70 = vld [vmem:[%s3 + $0x20] sm:$0xff]
    %v71 = vld [vmem:[%s3 + $0x28] sm:$0xff]
    %v72 = vld [vmem:[%s3 + $0x30] sm:$0xff]
    %v73 = vld [vmem:[%s3 + $0x38] sm:$0xff]
    %v74 = vld [vmem:[%s3 + $0x40] sm:$0xff]
    %v75 = vld [vmem:[%s3 + $0x48] sm:$0xff]
    %v76 = vld [vmem:[%s3 + $0x50] sm:$0xff]
    %v77 = vld [vmem:[%s3 + $0x58] sm:$0xff]
    %v78 = vld [vmem:[%s3 + $0x60] sm:$0x3]
    %v79 = vld [vmem:[%s3 + $0x68] sm:$0x3]
    %v80 = vld [vmem:[%s0] sm:$0xff]
    %v81 = vld [vmem:[%s0 + $0x8] sm:$0xff]
    %v82 = vld [vmem:[%s0 + $0x10] sm:$0xff]
    %v83 = vld [vmem:[%s0 + $0x18] sm:$0xff]
    %v84 = vld [vmem:[%s0 + $0x20] sm:$0xff]
    %v85 = vld [vmem:[%s0 + $0x28] sm:$0xff]
    %v86 = vld [vmem:[%s0 + $0x30] sm:$0x3]
    %v87 = vld [vmem:[%s4] sm:$0xf]
    %v88 = vld [vmem:[%s4 + $0x4] sm:$0xf]
    %v89 = vld [vmem:[%s4 + $0x8] sm:$0xf]
    %v90 = vld [vmem:[%s4 + $0xc] sm:$0xf]
    %v91 = vld [vmem:[%s4 + $0x10] sm:$0x3]
    %v92 = vld [vmem:[%s5] sm:$0x1]
    %vm100 = vcmask 1045504
    %v101 = vrot.slane %v80, 2
    %v102 = vrot.slane %v81, 2
    %v103 = vsel %vm100, %v101, %v102
    %v104 = vrot.slane %v82, 2
    %v105 = vsel %vm100, %v102, %v104
    %v106 = vrot.slane %v83, 2
    %v107 = vsel %vm100, %v104, %v106
    %v108 = vrot.slane %v84, 2
    %v109 = vsel %vm100, %v106, %v108
    %v110 = vrot.slane %v85, 2
    %v111 = vsel %vm100, %v108, %v110
    %v112 = vrot.slane %v86, 2
    %v113 = vsel %vm100, %v110, %v112
    %v121 = vsel %vm100, 0.0, %v101
    %vm123 = vcmask 1046528
    %v124 = vrot.slane %v121, 1
    %v125 = vrot.slane %v103, 1
    %v126 = vsel %vm123, %v124, %v125
    %v127 = vrot.slane %v105, 1
    %v128 = vsel %vm123, %v125, %v127
    %v129 = vrot.slane %v107, 1
    %v130 = vsel %vm123, %v127, %v129
    %v131 = vrot.slane %v109, 1
    %v132 = vsel %vm123, %v129, %v131
    %v133 = vrot.slane %v111, 1
    %v134 = vsel %vm123, %v131, %v133
    %v135 = vrot.slane %v113, 1
    %v136 = vsel %vm123, %v133, %v135
    %137 = vrot.lane.b32.xlu0 %v126, 4
    %v138 = vpop.permute.xlu0 %137
    %139 = vrot.lane.b32.xlu0 %v128, 4
    %v140 = vpop.permute.xlu0 %139
    %141 = vrot.lane.b32.xlu0 %v130, 4
    %v142 = vpop.permute.xlu0 %141
    %143 = vrot.lane.b32.xlu0 %v132, 4
    %v144 = vpop.permute.xlu0 %143
    %145 = vrot.lane.b32.xlu0 %v134, 4
    %v146 = vpop.permute.xlu0 %145
    %147 = vrot.lane.b32.xlu0 %v136, 4
    %v148 = vpop.permute.xlu0 %147
    %149 = vrot.lane.b32.xlu0 %v135, 4
    %v150 = vpop.permute.xlu0 %149
    %v158 = vrot.slane %v121, 2
    %v159 = vrot.slane %v103, 2
    %v160 = vsel %vm100, %v158, %v159
    %v161 = vrot.slane %v105, 2
    %v162 = vsel %vm100, %v159, %v161
    %v163 = vrot.slane %v107, 2
    %v164 = vsel %vm100, %v161, %v163
    %v165 = vrot.slane %v109, 2
    %v166 = vsel %vm100, %v163, %v165
    %v167 = vrot.slane %v111, 2
    %v168 = vsel %vm100, %v165, %v167
    %v169 = vrot.slane %v113, 2
    %v170 = vsel %vm100, %v167, %v169
    %171 = vrot.lane.b32.xlu0 %v160, 8
    %v172 = vpop.permute.xlu0 %171
    %173 = vrot.lane.b32.xlu0 %v162, 8
    %v174 = vpop.permute.xlu0 %173
    %175 = vrot.lane.b32.xlu0 %v164, 8
    %v176 = vpop.permute.xlu0 %175
    %177 = vrot.lane.b32.xlu0 %v166, 8
    %v178 = vpop.permute.xlu0 %177
    %179 = vrot.lane.b32.xlu0 %v168, 8
    %v180 = vpop.permute.xlu0 %179
    %181 = vrot.lane.b32.xlu0 %v170, 8
    %v182 = vpop.permute.xlu0 %181
    %183 = vrot.lane.b32.xlu0 %v169, 8
    %v184 = vpop.permute.xlu0 %183
    %vm192 = vcmask 1042432
    %v193 = vrot.slane %v121, 5
    %v194 = vrot.slane %v103, 5
    %v195 = vsel %vm192, %v193, %v194
    %v196 = vrot.slane %v105, 5
    %v197 = vsel %vm192, %v194, %v196
    %v198 = vrot.slane %v107, 5
    %v199 = vsel %vm192, %v196, %v198
    %v200 = vrot.slane %v109, 5
    %v201 = vsel %vm192, %v198, %v200
    %v202 = vrot.slane %v111, 5
    %v203 = vsel %vm192, %v200, %v202
    %v204 = vrot.slane %v113, 5
    %v205 = vsel %vm192, %v202, %v204
    %206 = vrot.lane.b32.xlu0 %v195, 12
    %v207 = vpop.permute.xlu0 %206
    %208 = vrot.lane.b32.xlu0 %v197, 12
    %v209 = vpop.permute.xlu0 %208
    %210 = vrot.lane.b32.xlu0 %v199, 12
    %v211 = vpop.permute.xlu0 %210
    %212 = vrot.lane.b32.xlu0 %v201, 12
    %v213 = vpop.permute.xlu0 %212
    %214 = vrot.lane.b32.xlu0 %v203, 12
    %v215 = vpop.permute.xlu0 %214
    %216 = vrot.lane.b32.xlu0 %v205, 12
    %v217 = vpop.permute.xlu0 %216
    %218 = vrot.lane.b32.xlu0 %v204, 12
    %v219 = vpop.permute.xlu0 %218
    %vm227 = vcmask 1041408
    %v228 = vrot.slane %v121, 6
    %v229 = vrot.slane %v103, 6
    %v230 = vsel %vm227, %v228, %v229
    %v231 = vrot.slane %v105, 6
    %v232 = vsel %vm227, %v229, %v231
    %v233 = vrot.slane %v107, 6
    %v234 = vsel %vm227, %v231, %v233
    %v235 = vrot.slane %v109, 6
    %v236 = vsel %vm227, %v233, %v235
    %v237 = vrot.slane %v111, 6
    %v238 = vsel %vm227, %v235, %v237
    %v239 = vrot.slane %v113, 6
    %v240 = vsel %vm227, %v237, %v239
    %241 = vrot.lane.b32.xlu0 %v230, 16
    %v242 = vpop.permute.xlu0 %241
    %243 = vrot.lane.b32.xlu0 %v232, 16
    %v244 = vpop.permute.xlu0 %243
    %245 = vrot.lane.b32.xlu0 %v234, 16
    %v246 = vpop.permute.xlu0 %245
    %247 = vrot.lane.b32.xlu0 %v236, 16
    %v248 = vpop.permute.xlu0 %247
    %249 = vrot.lane.b32.xlu0 %v238, 16
    %v250 = vpop.permute.xlu0 %249
    %251 = vrot.lane.b32.xlu0 %v240, 16
    %v252 = vpop.permute.xlu0 %251
    %253 = vrot.lane.b32.xlu0 %v239, 16
    %v254 = vpop.permute.xlu0 %253
    %vm263 = vcmask 1040384
    %v264 = vrot.slane %v121, 7
    %v265 = vrot.slane %v103, 7
    %v266 = vsel %vm263, %v264, %v265
    %v267 = vrot.slane %v105, 7
    %v268 = vsel %vm263, %v265, %v267
    %v269 = vrot.slane %v107, 7
    %v270 = vsel %vm263, %v267, %v269
    %v271 = vrot.slane %v109, 7
    %v272 = vsel %vm263, %v269, %v271
    %v273 = vrot.slane %v111, 7
    %v274 = vsel %vm263, %v271, %v273
    %v275 = vrot.slane %v113, 7
    %v276 = vsel %vm263, %v273, %v275
    %v277 = vrot.slane 0.0, 7
    %v278 = vsel %vm263, %v275, %v277
    %279 = vrot.lane.b32.xlu0 %v266, 20
    %v280 = vpop.permute.xlu0 %279
    %281 = vrot.lane.b32.xlu0 %v268, 20
    %v282 = vpop.permute.xlu0 %281
    %283 = vrot.lane.b32.xlu0 %v270, 20
    %v284 = vpop.permute.xlu0 %283
    %285 = vrot.lane.b32.xlu0 %v272, 20
    %v286 = vpop.permute.xlu0 %285
    %287 = vrot.lane.b32.xlu0 %v274, 20
    %v288 = vpop.permute.xlu0 %287
    %289 = vrot.lane.b32.xlu0 %v276, 20
    %v290 = vpop.permute.xlu0 %289
    %291 = vrot.lane.b32.xlu0 %v278, 20
    %v292 = vpop.permute.xlu0 %291
    %v300 = vrot.slane 0.0, 2
    %v301 = vsel %vm100, %v169, %v300
    %302 = vrot.lane.b32.xlu0 %v162, 24
    %v303 = vpop.permute.xlu0 %302
    %304 = vrot.lane.b32.xlu0 %v164, 24
    %v305 = vpop.permute.xlu0 %304
    %306 = vrot.lane.b32.xlu0 %v166, 24
    %v307 = vpop.permute.xlu0 %306
    %308 = vrot.lane.b32.xlu0 %v168, 24
    %v309 = vpop.permute.xlu0 %308
    %310 = vrot.lane.b32.xlu0 %v170, 24
    %v311 = vpop.permute.xlu0 %310
    %312 = vrot.lane.b32.xlu0 %v301, 24
    %v313 = vpop.permute.xlu0 %312
    %314 = vrot.lane.b32.xlu0 %v300, 24
    %v315 = vpop.permute.xlu0 %314
    %vm323 = vcmask 1044480
    %v324 = vrot.slane %v103, 3
    %v325 = vrot.slane %v105, 3
    %v326 = vsel %vm323, %v324, %v325
    %v327 = vrot.slane %v107, 3
    %v328 = vsel %vm323, %v325, %v327
    %v329 = vrot.slane %v109, 3
    %v330 = vsel %vm323, %v327, %v329
    %v331 = vrot.slane %v111, 3
    %v332 = vsel %vm323, %v329, %v331
    %v333 = vrot.slane %v113, 3
    %v334 = vsel %vm323, %v331, %v333
    %v335 = vrot.slane 0.0, 3
    %v336 = vsel %vm323, %v333, %v335
    %337 = vrot.lane.b32.xlu0 %v326, 28
    %v338 = vpop.permute.xlu0 %337
    %339 = vrot.lane.b32.xlu0 %v328, 28
    %v340 = vpop.permute.xlu0 %339
    %341 = vrot.lane.b32.xlu0 %v330, 28
    %v342 = vpop.permute.xlu0 %341
    %343 = vrot.lane.b32.xlu0 %v332, 28
    %v344 = vpop.permute.xlu0 %343
    %345 = vrot.lane.b32.xlu0 %v334, 28
    %v346 = vpop.permute.xlu0 %345
    %347 = vrot.lane.b32.xlu0 %v336, 28
    %v348 = vpop.permute.xlu0 %347
    %349 = vrot.lane.b32.xlu0 %v335, 28
    %v350 = vpop.permute.xlu0 %349
    %vm358 = vcmask 1043456
    %v359 = vrot.slane %v103, 4
    %v360 = vrot.slane %v105, 4
    %v361 = vsel %vm358, %v359, %v360
    %v362 = vrot.slane %v107, 4
    %v363 = vsel %vm358, %v360, %v362
    %v364 = vrot.slane %v109, 4
    %v365 = vsel %vm358, %v362, %v364
    %v366 = vrot.slane %v111, 4
    %v367 = vsel %vm358, %v364, %v366
    %v368 = vrot.slane %v113, 4
    %v369 = vsel %vm358, %v366, %v368
    %v370 = vrot.slane 0.0, 4
    %v371 = vsel %vm358, %v368, %v370
    %372 = vrot.lane.b32.xlu0 %v361, 32
    %v373 = vpop.permute.xlu0 %372
    %374 = vrot.lane.b32.xlu0 %v363, 32
    %v375 = vpop.permute.xlu0 %374
    %376 = vrot.lane.b32.xlu0 %v365, 32
    %v377 = vpop.permute.xlu0 %376
    %378 = vrot.lane.b32.xlu0 %v367, 32
    %v379 = vpop.permute.xlu0 %378
    %380 = vrot.lane.b32.xlu0 %v369, 32
    %v381 = vpop.permute.xlu0 %380
    %382 = vrot.lane.b32.xlu0 %v371, 32
    %v383 = vpop.permute.xlu0 %382
    %384 = vrot.lane.b32.xlu0 %v370, 32
    %v385 = vpop.permute.xlu0 %384
    %vm393 = vcmask 31744
    %v394 = vsel %vm393, %v121, %v138
    %v395 = vsel %vm393, %v103, %v140
    %v396 = vsel %vm393, %v105, %v142
    %v397 = vsel %vm393, %v107, %v144
    %v398 = vsel %vm393, %v109, %v146
    %v399 = vsel %vm393, %v111, %v148
    %v400 = vsel %vm393, %v113, %v150
    %vm401 = vcmask 64512
    %v402 = vsel %vm401, %v394, %v172
    %v403 = vsel %vm401, %v395, %v174
    %v404 = vsel %vm401, %v396, %v176
    %v405 = vsel %vm401, %v397, %v178
    %v406 = vsel %vm401, %v398, %v180
    %v407 = vsel %vm401, %v399, %v182
    %v408 = vsel %vm401, %v400, %v184
    %vm409 = vcmask 97280
    %v410 = vsel %vm409, %v402, %v207
    %v411 = vsel %vm409, %v403, %v209
    %v412 = vsel %vm409, %v404, %v211
    %v413 = vsel %vm409, %v405, %v213
    %v414 = vsel %vm409, %v406, %v215
    %v415 = vsel %vm409, %v407, %v217
    %v416 = vsel %vm409, %v408, %v219
    %vm417 = vcmask 130048
    %v418 = vsel %vm417, %v410, %v242
    %v419 = vsel %vm417, %v411, %v244
    %v420 = vsel %vm417, %v412, %v246
    %v421 = vsel %vm417, %v413, %v248
    %v422 = vsel %vm417, %v414, %v250
    %v423 = vsel %vm417, %v415, %v252
    %v424 = vsel %vm417, %v416, %v254
    %vm425 = vcmask 162816
    %v426 = vsel %vm425, %v418, %v280
    %v427 = vsel %vm425, %v419, %v282
    %v428 = vsel %vm425, %v420, %v284
    %v429 = vsel %vm425, %v421, %v286
    %v430 = vsel %vm425, %v422, %v288
    %v431 = vsel %vm425, %v423, %v290
    %v432 = vsel %vm425, %v424, %v292
    %vm433 = vcmask 195584
    %v434 = vsel %vm433, %v426, %v303
    %v435 = vsel %vm433, %v427, %v305
    %v436 = vsel %vm433, %v428, %v307
    %v437 = vsel %vm433, %v429, %v309
    %v438 = vsel %vm433, %v430, %v311
    %v439 = vsel %vm433, %v431, %v313
    %v440 = vsel %vm433, %v432, %v315
    %vm441 = vcmask 228352
    %v442 = vsel %vm441, %v434, %v338
    %v443 = vsel %vm441, %v435, %v340
    %v444 = vsel %vm441, %v436, %v342
    %v445 = vsel %vm441, %v437, %v344
    %v446 = vsel %vm441, %v438, %v346
    %v447 = vsel %vm441, %v439, %v348
    %v448 = vsel %vm441, %v440, %v350
    %vm449 = vcmask 261120
    %v450 = vsel %vm449, %v442, %v373
    %v451 = vsel %vm449, %v443, %v375
    %v452 = vsel %vm449, %v444, %v377
    %v453 = vsel %vm449, %v445, %v379
    %v454 = vsel %vm449, %v446, %v381
    %v455 = vsel %vm449, %v447, %v383
    %v456 = vsel %vm449, %v448, %v385
    %v457 = vmul.f32 %v450, %v52
    %v458 = vmul.f32 %v451, %v53
    %v459 = vmul.f32 %v452, %v54
    %v460 = vmul.f32 %v453, %v55
    %v461 = vmul.f32 %v454, %v56
    %v462 = vmul.f32 %v455, %v57
    %v463 = vmul.f32 %v456, %v58
    %v464 = vpack.c.bf16 %v458, %v457
    %v465 = vpack.c.bf16 %v460, %v459
    %v466 = vpack.c.bf16 %v462, %v461
    %v467 = vpack.c.bf16 %v463, %v463
    %v469 = vlaneseq
    %v470 = vshrl.u32 %v469, 7
    %v471 = vsub.s32 0, %v470
    %v472 = vrot.slane %v92, %v471
    %v479 = vunpack.c.l.b16 %v87
    %v480 = vunpack.c.l.b16 %v88
    %v481 = vunpack.c.l.b16 %v89
    %v482 = vunpack.c.l.b16 %v90
    %v483 = vunpack.c.l.b16 %v91
    %v484 = vpack.c.b16 %v480, %v479
    %v485 = vpack.c.b16 %v482, %v481
    %v486 = vpack.c.b16 %v483, %v483
    %vm489 = vcmask 293888
    %v491 = vsel %vm489, %v464, 0
    %v494 = vsel %vm489, %v465, 0
    %v497 = vsel %vm489, %v466, 0
    %v500 = vsel %vm489, %v467, 0
    %v503 = vsel %vm227, %v486, 0
    %505 = vmatprep.subr.bf16.mxu0 0
    %506 = vmatpush1.bf16.msra.mxu0 0
    %507 = vmatprep.subr.bf16.mxu0 0
    %508 = vmatpush1.bf16.msra.mxu0 0
    %509 = vmatprep.subr.bf16.mxu0 0
    %510 = vmatpush1.bf16.msra.mxu0 0
    %511 = vmatprep.subr.bf16.mxu0 0
    %512 = vmatpush1.bf16.msra.mxu0 0
    %513 = vmatprep.subr.bf16.mxu0 0
    %514 = vmatpush1.bf16.msra.mxu0 0
    %515 = vmatprep.subr.bf16.mxu0 0
    %516 = vmatpush1.bf16.msra.mxu0 %v503
    %517 = vmatprep.subr.bf16.mxu0 0
    %518 = vmatpush1.bf16.msra.mxu0 %v485
    %519 = vmatprep.subr.bf16.mxu0 0
    %520 = vmatpush1.bf16.msra.mxu0 %v484
    %521 = vmatprep.subr.bf16.mxu0 0
    %522 = vmatpush2.bf16.msra.mxu0 0
    %523 = vmatprep.subr.bf16.mxu0 0
    %524 = vmatpush2.bf16.msra.mxu0 0
    %525 = vmatprep.subr.bf16.mxu0 0
    %526 = vmatpush2.bf16.msra.mxu0 0
    %527 = vmatprep.subr.bf16.mxu0 0
    %528 = vmatpush2.bf16.msra.mxu0 0
    %529 = vmatprep.subr.bf16.mxu0 0
    %530 = vmatpush2.bf16.msra.mxu0 0
    %531 = vmatprep.subr.bf16.mxu0 0
    %532 = vmatpush2.bf16.msra.mxu0 0
    %533 = vmatprep.subr.bf16.mxu0 0
    %534 = vmatpush2.bf16.msra.mxu0 0
    %535 = vmatprep.subr.bf16.mxu0 0
    %536 = vmatpush2.bf16.msra.mxu0 0
    %537 = vmatprep.mubr.bf16.mxu0 0
    %538 = vmatmul.mubr.bf16.gmra.mxu0 %v491
    %v539 = vpop.f32.mrf.mxu0
    %v540 = vadd.f32 %v472, %v539
    %v541 = vpop.f32.mrf.mxu0
    %v542 = vpop.f32.mrf.mxu0
    %v543 = vadd.f32 %v472, %v542
    %v544 = vpop.f32.mrf.mxu0
    %545 = vmatprep.mubr.bf16.mxu0 0
    %546 = vmatmul.mubr.bf16.gmra.mxu0 %v494
    %v547 = vpop.f32.mrf.mxu0
    %v548 = vadd.f32 %v472, %v547
    %v549 = vpop.f32.mrf.mxu0
    %v550 = vpop.f32.mrf.mxu0
    %v551 = vadd.f32 %v472, %v550
    %v552 = vpop.f32.mrf.mxu0
    %553 = vmatprep.mubr.bf16.mxu0 0
    %554 = vmatmul.mubr.bf16.gmra.mxu0 %v497
    %v555 = vpop.f32.mrf.mxu0
    %v556 = vadd.f32 %v472, %v555
    %v557 = vpop.f32.mrf.mxu0
    %v558 = vpop.f32.mrf.mxu0
    %v559 = vadd.f32 %v472, %v558
    %v560 = vpop.f32.mrf.mxu0
    %561 = vmatprep.mubr.bf16.mxu0 0
    %562 = vmatmul.mubr.bf16.gmra.mxu0 %v500
    %v563 = vpop.f32.mrf.mxu0
    %v564 = vadd.f32 %v472, %v563
    %v565 = vpop.f32.mrf.mxu0
    %v566 = vpop.f32.mrf.mxu0
    %v567 = vpop.f32.mrf.mxu0
    %568 = vdwg.mxu0
    %v569 = vmax.f32 %v540, 0.0
    %v570 = vmax.f32 %v543, 0.0
    %v571 = vmax.f32 %v548, 0.0
    %v572 = vmax.f32 %v551, 0.0
    %v573 = vmax.f32 %v556, 0.0
    %v574 = vmax.f32 %v559, 0.0
    %v575 = vmax.f32 %v564, 0.0
    %v576 = vld [vmem:[%s6] sm:$0xf]
    %v577 = vld [vmem:[%s6 + $0x4] sm:$0xf]
    %v578 = vld [vmem:[%s6 + $0x8] sm:$0xf]
    %v579 = vld [vmem:[%s6 + $0xc] sm:$0xf]
    %v580 = vld [vmem:[%s6 + $0x10] sm:$0xf]
    %v581 = vld [vmem:[%s6 + $0x14] sm:$0xf]
    %v582 = vld [vmem:[%s6 + $0x18] sm:$0xf]
    %v583 = vld [vmem:[%s6 + $0x1c] sm:$0xf]
    %v584 = vld [vmem:[%s6 + $0x20] sm:$0xf]
    %v585 = vld [vmem:[%s7] sm:$0x1]
    %v593 = vrot.slane %v569, 2
    %v594 = vrot.slane %v570, 2
    %v595 = vsel %vm100, %v593, %v594
    %v596 = vrot.slane %v571, 2
    %v597 = vsel %vm100, %v594, %v596
    %v598 = vrot.slane %v572, 2
    %v599 = vsel %vm100, %v596, %v598
    %v600 = vrot.slane %v573, 2
    %v601 = vsel %vm100, %v598, %v600
    %v602 = vrot.slane %v574, 2
    %v603 = vsel %vm100, %v600, %v602
    %v604 = vrot.slane %v575, 2
    %v605 = vsel %vm100, %v602, %v604
    %v613 = vsel %vm100, 0.0, %v593
    %v615 = vrot.slane %v613, 1
    %v616 = vrot.slane %v595, 1
    %v617 = vsel %vm123, %v615, %v616
    %v618 = vrot.slane %v597, 1
    %v619 = vsel %vm123, %v616, %v618
    %v620 = vrot.slane %v599, 1
    %v621 = vsel %vm123, %v618, %v620
    %v622 = vrot.slane %v601, 1
    %v623 = vsel %vm123, %v620, %v622
    %v624 = vrot.slane %v603, 1
    %v625 = vsel %vm123, %v622, %v624
    %v626 = vrot.slane %v605, 1
    %v627 = vsel %vm123, %v624, %v626
    %628 = vrot.lane.b32.xlu0 %v617, 8
    %v629 = vpop.permute.xlu0 %628
    %630 = vrot.lane.b32.xlu0 %v619, 8
    %v631 = vpop.permute.xlu0 %630
    %632 = vrot.lane.b32.xlu0 %v621, 8
    %v633 = vpop.permute.xlu0 %632
    %634 = vrot.lane.b32.xlu0 %v623, 8
    %v635 = vpop.permute.xlu0 %634
    %636 = vrot.lane.b32.xlu0 %v625, 8
    %v637 = vpop.permute.xlu0 %636
    %638 = vrot.lane.b32.xlu0 %v627, 8
    %v639 = vpop.permute.xlu0 %638
    %640 = vrot.lane.b32.xlu0 %v626, 8
    %v641 = vpop.permute.xlu0 %640
    %v649 = vrot.slane %v613, 2
    %v650 = vrot.slane %v595, 2
    %v651 = vsel %vm100, %v649, %v650
    %v652 = vrot.slane %v597, 2
    %v653 = vsel %vm100, %v650, %v652
    %v654 = vrot.slane %v599, 2
    %v655 = vsel %vm100, %v652, %v654
    %v656 = vrot.slane %v601, 2
    %v657 = vsel %vm100, %v654, %v656
    %v658 = vrot.slane %v603, 2
    %v659 = vsel %vm100, %v656, %v658
    %v660 = vrot.slane %v605, 2
    %v661 = vsel %vm100, %v658, %v660
    %662 = vrot.lane.b32.xlu0 %v651, 16
    %v663 = vpop.permute.xlu0 %662
    %664 = vrot.lane.b32.xlu0 %v653, 16
    %v665 = vpop.permute.xlu0 %664
    %666 = vrot.lane.b32.xlu0 %v655, 16
    %v667 = vpop.permute.xlu0 %666
    %668 = vrot.lane.b32.xlu0 %v657, 16
    %v669 = vpop.permute.xlu0 %668
    %670 = vrot.lane.b32.xlu0 %v659, 16
    %v671 = vpop.permute.xlu0 %670
    %672 = vrot.lane.b32.xlu0 %v661, 16
    %v673 = vpop.permute.xlu0 %672
    %674 = vrot.lane.b32.xlu0 %v660, 16
    %v675 = vpop.permute.xlu0 %674
    %v683 = vrot.slane %v613, 5
    %v684 = vrot.slane %v595, 5
    %v685 = vsel %vm192, %v683, %v684
    %v686 = vrot.slane %v597, 5
    %v687 = vsel %vm192, %v684, %v686
    %v688 = vrot.slane %v599, 5
    %v689 = vsel %vm192, %v686, %v688
    %v690 = vrot.slane %v601, 5
    %v691 = vsel %vm192, %v688, %v690
    %v692 = vrot.slane %v603, 5
    %v693 = vsel %vm192, %v690, %v692
    %v694 = vrot.slane %v605, 5
    %v695 = vsel %vm192, %v692, %v694
    %696 = vrot.lane.b32.xlu0 %v685, 24
    %v697 = vpop.permute.xlu0 %696
    %698 = vrot.lane.b32.xlu0 %v687, 24
    %v699 = vpop.permute.xlu0 %698
    %700 = vrot.lane.b32.xlu0 %v689, 24
    %v701 = vpop.permute.xlu0 %700
    %702 = vrot.lane.b32.xlu0 %v691, 24
    %v703 = vpop.permute.xlu0 %702
    %704 = vrot.lane.b32.xlu0 %v693, 24
    %v705 = vpop.permute.xlu0 %704
    %706 = vrot.lane.b32.xlu0 %v695, 24
    %v707 = vpop.permute.xlu0 %706
    %708 = vrot.lane.b32.xlu0 %v694, 24
    %v709 = vpop.permute.xlu0 %708
    %v717 = vrot.slane %v613, 6
    %v718 = vrot.slane %v595, 6
    %v719 = vsel %vm227, %v717, %v718
    %v720 = vrot.slane %v597, 6
    %v721 = vsel %vm227, %v718, %v720
    %v722 = vrot.slane %v599, 6
    %v723 = vsel %vm227, %v720, %v722
    %v724 = vrot.slane %v601, 6
    %v725 = vsel %vm227, %v722, %v724
    %v726 = vrot.slane %v603, 6
    %v727 = vsel %vm227, %v724, %v726
    %v728 = vrot.slane %v605, 6
    %v729 = vsel %vm227, %v726, %v728
    %730 = vrot.lane.b32.xlu0 %v719, 32
    %v731 = vpop.permute.xlu0 %730
    %732 = vrot.lane.b32.xlu0 %v721, 32
    %v733 = vpop.permute.xlu0 %732
    %734 = vrot.lane.b32.xlu0 %v723, 32
    %v735 = vpop.permute.xlu0 %734
    %736 = vrot.lane.b32.xlu0 %v725, 32
    %v737 = vpop.permute.xlu0 %736
    %738 = vrot.lane.b32.xlu0 %v727, 32
    %v739 = vpop.permute.xlu0 %738
    %740 = vrot.lane.b32.xlu0 %v729, 32
    %v741 = vpop.permute.xlu0 %740
    %742 = vrot.lane.b32.xlu0 %v728, 32
    %v743 = vpop.permute.xlu0 %742
    %v751 = vrot.slane %v613, 7
    %v752 = vrot.slane %v595, 7
    %v753 = vsel %vm263, %v751, %v752
    %v754 = vrot.slane %v597, 7
    %v755 = vsel %vm263, %v752, %v754
    %v756 = vrot.slane %v599, 7
    %v757 = vsel %vm263, %v754, %v756
    %v758 = vrot.slane %v601, 7
    %v759 = vsel %vm263, %v756, %v758
    %v760 = vrot.slane %v603, 7
    %v761 = vsel %vm263, %v758, %v760
    %v762 = vrot.slane %v605, 7
    %v763 = vsel %vm263, %v760, %v762
    %v764 = vsel %vm263, %v762, %v277
    %765 = vrot.lane.b32.xlu0 %v753, 40
    %v766 = vpop.permute.xlu0 %765
    %767 = vrot.lane.b32.xlu0 %v755, 40
    %v768 = vpop.permute.xlu0 %767
    %769 = vrot.lane.b32.xlu0 %v757, 40
    %v770 = vpop.permute.xlu0 %769
    %771 = vrot.lane.b32.xlu0 %v759, 40
    %v772 = vpop.permute.xlu0 %771
    %773 = vrot.lane.b32.xlu0 %v761, 40
    %v774 = vpop.permute.xlu0 %773
    %775 = vrot.lane.b32.xlu0 %v763, 40
    %v776 = vpop.permute.xlu0 %775
    %777 = vrot.lane.b32.xlu0 %v764, 40
    %v778 = vpop.permute.xlu0 %777
    %v786 = vsel %vm100, %v660, %v300
    %787 = vrot.lane.b32.xlu0 %v653, 48
    %v788 = vpop.permute.xlu0 %787
    %789 = vrot.lane.b32.xlu0 %v655, 48
    %v790 = vpop.permute.xlu0 %789
    %791 = vrot.lane.b32.xlu0 %v657, 48
    %v792 = vpop.permute.xlu0 %791
    %793 = vrot.lane.b32.xlu0 %v659, 48
    %v794 = vpop.permute.xlu0 %793
    %795 = vrot.lane.b32.xlu0 %v661, 48
    %v796 = vpop.permute.xlu0 %795
    %797 = vrot.lane.b32.xlu0 %v786, 48
    %v798 = vpop.permute.xlu0 %797
    %799 = vrot.lane.b32.xlu0 %v300, 48
    %v800 = vpop.permute.xlu0 %799
    %v808 = vrot.slane %v595, 3
    %v809 = vrot.slane %v597, 3
    %v810 = vsel %vm323, %v808, %v809
    %v811 = vrot.slane %v599, 3
    %v812 = vsel %vm323, %v809, %v811
    %v813 = vrot.slane %v601, 3
    %v814 = vsel %vm323, %v811, %v813
    %v815 = vrot.slane %v603, 3
    %v816 = vsel %vm323, %v813, %v815
    %v817 = vrot.slane %v605, 3
    %v818 = vsel %vm323, %v815, %v817
    %v819 = vsel %vm323, %v817, %v335
    %820 = vrot.lane.b32.xlu0 %v810, 56
    %v821 = vpop.permute.xlu0 %820
    %822 = vrot.lane.b32.xlu0 %v812, 56
    %v823 = vpop.permute.xlu0 %822
    %824 = vrot.lane.b32.xlu0 %v814, 56
    %v825 = vpop.permute.xlu0 %824
    %826 = vrot.lane.b32.xlu0 %v816, 56
    %v827 = vpop.permute.xlu0 %826
    %828 = vrot.lane.b32.xlu0 %v818, 56
    %v829 = vpop.permute.xlu0 %828
    %830 = vrot.lane.b32.xlu0 %v819, 56
    %v831 = vpop.permute.xlu0 %830
    %832 = vrot.lane.b32.xlu0 %v335, 56
    %v833 = vpop.permute.xlu0 %832
    %v841 = vrot.slane %v595, 4
    %v842 = vrot.slane %v597, 4
    %v843 = vsel %vm358, %v841, %v842
    %v844 = vrot.slane %v599, 4
    %v845 = vsel %vm358, %v842, %v844
    %v846 = vrot.slane %v601, 4
    %v847 = vsel %vm358, %v844, %v846
    %v848 = vrot.slane %v603, 4
    %v849 = vsel %vm358, %v846, %v848
    %v850 = vrot.slane %v605, 4
    %v851 = vsel %vm358, %v848, %v850
    %v852 = vsel %vm358, %v850, %v370
    %853 = vrot.lane.b32.xlu0 %v843, 64
    %v854 = vpop.permute.xlu0 %853
    %855 = vrot.lane.b32.xlu0 %v845, 64
    %v856 = vpop.permute.xlu0 %855
    %857 = vrot.lane.b32.xlu0 %v847, 64
    %v858 = vpop.permute.xlu0 %857
    %859 = vrot.lane.b32.xlu0 %v849, 64
    %v860 = vpop.permute.xlu0 %859
    %861 = vrot.lane.b32.xlu0 %v851, 64
    %v862 = vpop.permute.xlu0 %861
    %863 = vrot.lane.b32.xlu0 %v852, 64
    %v864 = vpop.permute.xlu0 %863
    %865 = vrot.lane.b32.xlu0 %v370, 64
    %v866 = vpop.permute.xlu0 %865
    %v874 = vsel %vm401, %v613, %v629
    %v875 = vsel %vm401, %v595, %v631
    %v876 = vsel %vm401, %v597, %v633
    %v877 = vsel %vm401, %v599, %v635
    %v878 = vsel %vm401, %v601, %v637
    %v879 = vsel %vm401, %v603, %v639
    %v880 = vsel %vm401, %v605, %v641
    %v881 = vsel %vm417, %v874, %v663
    %v882 = vsel %vm417, %v875, %v665
    %v883 = vsel %vm417, %v876, %v667
    %v884 = vsel %vm417, %v877, %v669
    %v885 = vsel %vm417, %v878, %v671
    %v886 = vsel %vm417, %v879, %v673
    %v887 = vsel %vm417, %v880, %v675
    %v888 = vsel %vm433, %v881, %v697
    %v889 = vsel %vm433, %v882, %v699
    %v890 = vsel %vm433, %v883, %v701
    %v891 = vsel %vm433, %v884, %v703
    %v892 = vsel %vm433, %v885, %v705
    %v893 = vsel %vm433, %v886, %v707
    %v894 = vsel %vm433, %v887, %v709
    %v895 = vsel %vm449, %v888, %v731
    %v896 = vsel %vm449, %v889, %v733
    %v897 = vsel %vm449, %v890, %v735
    %v898 = vsel %vm449, %v891, %v737
    %v899 = vsel %vm449, %v892, %v739
    %v900 = vsel %vm449, %v893, %v741
    %v901 = vsel %vm449, %v894, %v743
    %vm902 = vcmask 326656
    %v903 = vsel %vm902, %v895, %v766
    %v904 = vsel %vm902, %v896, %v768
    %v905 = vsel %vm902, %v897, %v770
    %v906 = vsel %vm902, %v898, %v772
    %v907 = vsel %vm902, %v899, %v774
    %v908 = vsel %vm902, %v900, %v776
    %v909 = vsel %vm902, %v901, %v778
    %vm910 = vcmask 392192
    %v911 = vsel %vm910, %v903, %v788
    %v912 = vsel %vm910, %v904, %v790
    %v913 = vsel %vm910, %v905, %v792
    %v914 = vsel %vm910, %v906, %v794
    %v915 = vsel %vm910, %v907, %v796
    %v916 = vsel %vm910, %v908, %v798
    %v917 = vsel %vm910, %v909, %v800
    %vm918 = vcmask 457728
    %v919 = vsel %vm918, %v911, %v821
    %v920 = vsel %vm918, %v912, %v823
    %v921 = vsel %vm918, %v913, %v825
    %v922 = vsel %vm918, %v914, %v827
    %v923 = vsel %vm918, %v915, %v829
    %v924 = vsel %vm918, %v916, %v831
    %v925 = vsel %vm918, %v917, %v833
    %vm926 = vcmask 523264
    %v927 = vsel %vm926, %v919, %v854
    %v928 = vsel %vm926, %v920, %v856
    %v929 = vsel %vm926, %v921, %v858
    %v930 = vsel %vm926, %v922, %v860
    %v931 = vsel %vm926, %v923, %v862
    %v932 = vsel %vm926, %v924, %v864
    %v933 = vsel %vm926, %v925, %v866
    %v934 = vmul.f32 %v927, %v59
    %v935 = vmul.f32 %v928, %v60
    %v936 = vmul.f32 %v929, %v61
    %v937 = vmul.f32 %v930, %v62
    %v938 = vmul.f32 %v931, %v63
    %v939 = vmul.f32 %v932, %v64
    %v940 = vmul.f32 %v933, %v65
    %v941 = vpack.c.bf16 %v935, %v934
    %v942 = vpack.c.bf16 %v937, %v936
    %v943 = vpack.c.bf16 %v939, %v938
    %v944 = vpack.c.bf16 %v940, %v940
    %v946 = vlaneseq
    %v947 = vshrl.u32 %v946, 7
    %v948 = vsub.s32 0, %v947
    %v949 = vrot.slane %v585, %v948
    %v960 = vunpack.c.l.b16 %v576
    %v961 = vunpack.c.l.b16 %v577
    %v962 = vunpack.c.l.b16 %v578
    %v963 = vunpack.c.l.b16 %v579
    %v964 = vunpack.c.l.b16 %v580
    %v965 = vunpack.c.l.b16 %v581
    %v966 = vunpack.c.l.b16 %v582
    %v967 = vunpack.c.l.b16 %v583
    %v968 = vunpack.c.l.b16 %v584
    %v969 = vpack.c.b16 %v961, %v960
    %v970 = vpack.c.b16 %v963, %v962
    %v971 = vpack.c.b16 %v965, %v964
    %v972 = vpack.c.b16 %v967, %v966
    %v973 = vpack.c.b16 %v968, %v968
    %vm978 = vcmask 588800
    %v980 = vsel %vm978, %v941, 0
    %v983 = vsel %vm978, %v942, 0
    %v986 = vsel %vm978, %v943, 0
    %v989 = vsel %vm978, %v944, 0
    %v992 = vsel %vm358, %v973, 0
    %994 = vmatprep.subr.bf16.mxu0 0
    %995 = vmatpush1.bf16.msra.mxu0 0
    %996 = vmatprep.subr.bf16.mxu0 0
    %997 = vmatpush1.bf16.msra.mxu0 0
    %998 = vmatprep.subr.bf16.mxu0 0
    %999 = vmatpush1.bf16.msra.mxu0 0
    %1000 = vmatprep.subr.bf16.mxu0 0
    %1001 = vmatpush1.bf16.msra.mxu0 %v992
    %1002 = vmatprep.subr.bf16.mxu0 0
    %1003 = vmatpush1.bf16.msra.mxu0 %v972
    %1004 = vmatprep.subr.bf16.mxu0 0
    %1005 = vmatpush1.bf16.msra.mxu0 %v971
    %1006 = vmatprep.subr.bf16.mxu0 0
    %1007 = vmatpush1.bf16.msra.mxu0 %v970
    %1008 = vmatprep.subr.bf16.mxu0 0
    %1009 = vmatpush1.bf16.msra.mxu0 %v969
    %1010 = vmatprep.subr.bf16.mxu0 0
    %1011 = vmatpush2.bf16.msra.mxu0 0
    %1012 = vmatprep.subr.bf16.mxu0 0
    %1013 = vmatpush2.bf16.msra.mxu0 0
    %1014 = vmatprep.subr.bf16.mxu0 0
    %1015 = vmatpush2.bf16.msra.mxu0 0
    %1016 = vmatprep.subr.bf16.mxu0 0
    %1017 = vmatpush2.bf16.msra.mxu0 0
    %1018 = vmatprep.subr.bf16.mxu0 0
    %1019 = vmatpush2.bf16.msra.mxu0 0
    %1020 = vmatprep.subr.bf16.mxu0 0
    %1021 = vmatpush2.bf16.msra.mxu0 0
    %1022 = vmatprep.subr.bf16.mxu0 0
    %1023 = vmatpush2.bf16.msra.mxu0 0
    %1024 = vmatprep.subr.bf16.mxu0 0
    %1025 = vmatpush2.bf16.msra.mxu0 0
    %1026 = vmatprep.mubr.bf16.mxu0 0
    %1027 = vmatmul.mubr.bf16.gmra.mxu0 %v980
    %v1028 = vpop.f32.mrf.mxu0
    %v1029 = vadd.f32 %v949, %v1028
    %v1030 = vpop.f32.mrf.mxu0
    %v1031 = vpop.f32.mrf.mxu0
    %v1032 = vadd.f32 %v949, %v1031
    %v1033 = vpop.f32.mrf.mxu0
    %1034 = vmatprep.mubr.bf16.mxu0 0
    %1035 = vmatmul.mubr.bf16.gmra.mxu0 %v983
    %v1036 = vpop.f32.mrf.mxu0
    %v1037 = vadd.f32 %v949, %v1036
    %v1038 = vpop.f32.mrf.mxu0
    %v1039 = vpop.f32.mrf.mxu0
    %v1040 = vadd.f32 %v949, %v1039
    %v1041 = vpop.f32.mrf.mxu0
    %1042 = vmatprep.mubr.bf16.mxu0 0
    %1043 = vmatmul.mubr.bf16.gmra.mxu0 %v986
    %v1044 = vpop.f32.mrf.mxu0
    %v1045 = vadd.f32 %v949, %v1044
    %v1046 = vpop.f32.mrf.mxu0
    %v1047 = vpop.f32.mrf.mxu0
    %v1048 = vadd.f32 %v949, %v1047
    %v1049 = vpop.f32.mrf.mxu0
    %1050 = vmatprep.mubr.bf16.mxu0 0
    %1051 = vmatmul.mubr.bf16.gmra.mxu0 %v989
    %v1052 = vpop.f32.mrf.mxu0
    %v1053 = vadd.f32 %v949, %v1052
    %v1054 = vpop.f32.mrf.mxu0
    %v1055 = vpop.f32.mrf.mxu0
    %v1056 = vpop.f32.mrf.mxu0
    %1057 = vdwg.mxu0
    %v1058 = vmax.f32 %v1029, 0.0
    %v1059 = vmax.f32 %v1032, 0.0
    %v1060 = vmax.f32 %v1037, 0.0
    %v1061 = vmax.f32 %v1040, 0.0
    %v1062 = vmax.f32 %v1045, 0.0
    %v1063 = vmax.f32 %v1048, 0.0
    %v1064 = vmax.f32 %v1053, 0.0
    %s1065 = scalar_lea.vmem %s6, 36
    %v1066 = vld [vmem:[%s1065] sm:$0xf]
    %v1067 = vld [vmem:[%s1065 + $0x4] sm:$0xf]
    %v1068 = vld [vmem:[%s1065 + $0x8] sm:$0xf]
    %v1069 = vld [vmem:[%s1065 + $0xc] sm:$0xf]
    %v1070 = vld [vmem:[%s1065 + $0x10] sm:$0xf]
    %v1071 = vld [vmem:[%s1065 + $0x14] sm:$0xf]
    %v1072 = vld [vmem:[%s1065 + $0x18] sm:$0xf]
    %v1073 = vld [vmem:[%s1065 + $0x1c] sm:$0xf]
    %v1074 = vld [vmem:[%s1065 + $0x20] sm:$0xf]
    %s1075 = scalar_lea.vmem %s7, 1
    %v1076 = vld [vmem:[%s1075] sm:$0x1]
    %v1084 = vrot.slane %v1058, 2
    %v1085 = vrot.slane %v1059, 2
    %v1086 = vsel %vm100, %v1084, %v1085
    %v1087 = vrot.slane %v1060, 2
    %v1088 = vsel %vm100, %v1085, %v1087
    %v1089 = vrot.slane %v1061, 2
    %v1090 = vsel %vm100, %v1087, %v1089
    %v1091 = vrot.slane %v1062, 2
    %v1092 = vsel %vm100, %v1089, %v1091
    %v1093 = vrot.slane %v1063, 2
    %v1094 = vsel %vm100, %v1091, %v1093
    %v1095 = vrot.slane %v1064, 2
    %v1096 = vsel %vm100, %v1093, %v1095
    %v1104 = vsel %vm100, 0.0, %v1084
    %v1106 = vrot.slane %v1104, 1
    %v1107 = vrot.slane %v1086, 1
    %v1108 = vsel %vm123, %v1106, %v1107
    %v1109 = vrot.slane %v1088, 1
    %v1110 = vsel %vm123, %v1107, %v1109
    %v1111 = vrot.slane %v1090, 1
    %v1112 = vsel %vm123, %v1109, %v1111
    %v1113 = vrot.slane %v1092, 1
    %v1114 = vsel %vm123, %v1111, %v1113
    %v1115 = vrot.slane %v1094, 1
    %v1116 = vsel %vm123, %v1113, %v1115
    %v1117 = vrot.slane %v1096, 1
    %v1118 = vsel %vm123, %v1115, %v1117
    %1119 = vrot.lane.b32.xlu0 %v1108, 8
    %v1120 = vpop.permute.xlu0 %1119
    %1121 = vrot.lane.b32.xlu0 %v1110, 8
    %v1122 = vpop.permute.xlu0 %1121
    %1123 = vrot.lane.b32.xlu0 %v1112, 8
    %v1124 = vpop.permute.xlu0 %1123
    %1125 = vrot.lane.b32.xlu0 %v1114, 8
    %v1126 = vpop.permute.xlu0 %1125
    %1127 = vrot.lane.b32.xlu0 %v1116, 8
    %v1128 = vpop.permute.xlu0 %1127
    %1129 = vrot.lane.b32.xlu0 %v1118, 8
    %v1130 = vpop.permute.xlu0 %1129
    %1131 = vrot.lane.b32.xlu0 %v1117, 8
    %v1132 = vpop.permute.xlu0 %1131
    %v1140 = vrot.slane %v1104, 2
    %v1141 = vrot.slane %v1086, 2
    %v1142 = vsel %vm100, %v1140, %v1141
    %v1143 = vrot.slane %v1088, 2
    %v1144 = vsel %vm100, %v1141, %v1143
    %v1145 = vrot.slane %v1090, 2
    %v1146 = vsel %vm100, %v1143, %v1145
    %v1147 = vrot.slane %v1092, 2
    %v1148 = vsel %vm100, %v1145, %v1147
    %v1149 = vrot.slane %v1094, 2
    %v1150 = vsel %vm100, %v1147, %v1149
    %v1151 = vrot.slane %v1096, 2
    %v1152 = vsel %vm100, %v1149, %v1151
    %1153 = vrot.lane.b32.xlu0 %v1142, 16
    %v1154 = vpop.permute.xlu0 %1153
    %1155 = vrot.lane.b32.xlu0 %v1144, 16
    %v1156 = vpop.permute.xlu0 %1155
    %1157 = vrot.lane.b32.xlu0 %v1146, 16
    %v1158 = vpop.permute.xlu0 %1157
    %1159 = vrot.lane.b32.xlu0 %v1148, 16
    %v1160 = vpop.permute.xlu0 %1159
    %1161 = vrot.lane.b32.xlu0 %v1150, 16
    %v1162 = vpop.permute.xlu0 %1161
    %1163 = vrot.lane.b32.xlu0 %v1152, 16
    %v1164 = vpop.permute.xlu0 %1163
    %1165 = vrot.lane.b32.xlu0 %v1151, 16
    %v1166 = vpop.permute.xlu0 %1165
    %v1174 = vrot.slane %v1104, 5
    %v1175 = vrot.slane %v1086, 5
    %v1176 = vsel %vm192, %v1174, %v1175
    %v1177 = vrot.slane %v1088, 5
    %v1178 = vsel %vm192, %v1175, %v1177
    %v1179 = vrot.slane %v1090, 5
    %v1180 = vsel %vm192, %v1177, %v1179
    %v1181 = vrot.slane %v1092, 5
    %v1182 = vsel %vm192, %v1179, %v1181
    %v1183 = vrot.slane %v1094, 5
    %v1184 = vsel %vm192, %v1181, %v1183
    %v1185 = vrot.slane %v1096, 5
    %v1186 = vsel %vm192, %v1183, %v1185
    %1187 = vrot.lane.b32.xlu0 %v1176, 24
    %v1188 = vpop.permute.xlu0 %1187
    %1189 = vrot.lane.b32.xlu0 %v1178, 24
    %v1190 = vpop.permute.xlu0 %1189
    %1191 = vrot.lane.b32.xlu0 %v1180, 24
    %v1192 = vpop.permute.xlu0 %1191
    %1193 = vrot.lane.b32.xlu0 %v1182, 24
    %v1194 = vpop.permute.xlu0 %1193
    %1195 = vrot.lane.b32.xlu0 %v1184, 24
    %v1196 = vpop.permute.xlu0 %1195
    %1197 = vrot.lane.b32.xlu0 %v1186, 24
    %v1198 = vpop.permute.xlu0 %1197
    %1199 = vrot.lane.b32.xlu0 %v1185, 24
    %v1200 = vpop.permute.xlu0 %1199
    %v1208 = vrot.slane %v1104, 6
    %v1209 = vrot.slane %v1086, 6
    %v1210 = vsel %vm227, %v1208, %v1209
    %v1211 = vrot.slane %v1088, 6
    %v1212 = vsel %vm227, %v1209, %v1211
    %v1213 = vrot.slane %v1090, 6
    %v1214 = vsel %vm227, %v1211, %v1213
    %v1215 = vrot.slane %v1092, 6
    %v1216 = vsel %vm227, %v1213, %v1215
    %v1217 = vrot.slane %v1094, 6
    %v1218 = vsel %vm227, %v1215, %v1217
    %v1219 = vrot.slane %v1096, 6
    %v1220 = vsel %vm227, %v1217, %v1219
    %1221 = vrot.lane.b32.xlu0 %v1210, 32
    %v1222 = vpop.permute.xlu0 %1221
    %1223 = vrot.lane.b32.xlu0 %v1212, 32
    %v1224 = vpop.permute.xlu0 %1223
    %1225 = vrot.lane.b32.xlu0 %v1214, 32
    %v1226 = vpop.permute.xlu0 %1225
    %1227 = vrot.lane.b32.xlu0 %v1216, 32
    %v1228 = vpop.permute.xlu0 %1227
    %1229 = vrot.lane.b32.xlu0 %v1218, 32
    %v1230 = vpop.permute.xlu0 %1229
    %1231 = vrot.lane.b32.xlu0 %v1220, 32
    %v1232 = vpop.permute.xlu0 %1231
    %1233 = vrot.lane.b32.xlu0 %v1219, 32
    %v1234 = vpop.permute.xlu0 %1233
    %v1242 = vrot.slane %v1104, 7
    %v1243 = vrot.slane %v1086, 7
    %v1244 = vsel %vm263, %v1242, %v1243
    %v1245 = vrot.slane %v1088, 7
    %v1246 = vsel %vm263, %v1243, %v1245
    %v1247 = vrot.slane %v1090, 7
    %v1248 = vsel %vm263, %v1245, %v1247
    %v1249 = vrot.slane %v1092, 7
    %v1250 = vsel %vm263, %v1247, %v1249
    %v1251 = vrot.slane %v1094, 7
    %v1252 = vsel %vm263, %v1249, %v1251
    %v1253 = vrot.slane %v1096, 7
    %v1254 = vsel %vm263, %v1251, %v1253
    %v1255 = vsel %vm263, %v1253, %v277
    %1256 = vrot.lane.b32.xlu0 %v1244, 40
    %v1257 = vpop.permute.xlu0 %1256
    %1258 = vrot.lane.b32.xlu0 %v1246, 40
    %v1259 = vpop.permute.xlu0 %1258
    %1260 = vrot.lane.b32.xlu0 %v1248, 40
    %v1261 = vpop.permute.xlu0 %1260
    %1262 = vrot.lane.b32.xlu0 %v1250, 40
    %v1263 = vpop.permute.xlu0 %1262
    %1264 = vrot.lane.b32.xlu0 %v1252, 40
    %v1265 = vpop.permute.xlu0 %1264
    %1266 = vrot.lane.b32.xlu0 %v1254, 40
    %v1267 = vpop.permute.xlu0 %1266
    %1268 = vrot.lane.b32.xlu0 %v1255, 40
    %v1269 = vpop.permute.xlu0 %1268
    %v1277 = vsel %vm100, %v1151, %v300
    %1278 = vrot.lane.b32.xlu0 %v1144, 48
    %v1279 = vpop.permute.xlu0 %1278
    %1280 = vrot.lane.b32.xlu0 %v1146, 48
    %v1281 = vpop.permute.xlu0 %1280
    %1282 = vrot.lane.b32.xlu0 %v1148, 48
    %v1283 = vpop.permute.xlu0 %1282
    %1284 = vrot.lane.b32.xlu0 %v1150, 48
    %v1285 = vpop.permute.xlu0 %1284
    %1286 = vrot.lane.b32.xlu0 %v1152, 48
    %v1287 = vpop.permute.xlu0 %1286
    %1288 = vrot.lane.b32.xlu0 %v1277, 48
    %v1289 = vpop.permute.xlu0 %1288
    %v1296 = vrot.slane %v1086, 3
    %v1297 = vrot.slane %v1088, 3
    %v1298 = vsel %vm323, %v1296, %v1297
    %v1299 = vrot.slane %v1090, 3
    %v1300 = vsel %vm323, %v1297, %v1299
    %v1301 = vrot.slane %v1092, 3
    %v1302 = vsel %vm323, %v1299, %v1301
    %v1303 = vrot.slane %v1094, 3
    %v1304 = vsel %vm323, %v1301, %v1303
    %v1305 = vrot.slane %v1096, 3
    %v1306 = vsel %vm323, %v1303, %v1305
    %v1307 = vsel %vm323, %v1305, %v335
    %1308 = vrot.lane.b32.xlu0 %v1298, 56
    %v1309 = vpop.permute.xlu0 %1308
    %1310 = vrot.lane.b32.xlu0 %v1300, 56
    %v1311 = vpop.permute.xlu0 %1310
    %1312 = vrot.lane.b32.xlu0 %v1302, 56
    %v1313 = vpop.permute.xlu0 %1312
    %1314 = vrot.lane.b32.xlu0 %v1304, 56
    %v1315 = vpop.permute.xlu0 %1314
    %1316 = vrot.lane.b32.xlu0 %v1306, 56
    %v1317 = vpop.permute.xlu0 %1316
    %1318 = vrot.lane.b32.xlu0 %v1307, 56
    %v1319 = vpop.permute.xlu0 %1318
    %v1326 = vrot.slane %v1086, 4
    %v1327 = vrot.slane %v1088, 4
    %v1328 = vsel %vm358, %v1326, %v1327
    %v1329 = vrot.slane %v1090, 4
    %v1330 = vsel %vm358, %v1327, %v1329
    %v1331 = vrot.slane %v1092, 4
    %v1332 = vsel %vm358, %v1329, %v1331
    %v1333 = vrot.slane %v1094, 4
    %v1334 = vsel %vm358, %v1331, %v1333
    %v1335 = vrot.slane %v1096, 4
    %v1336 = vsel %vm358, %v1333, %v1335
    %v1337 = vsel %vm358, %v1335, %v370
    %1338 = vrot.lane.b32.xlu0 %v1328, 64
    %v1339 = vpop.permute.xlu0 %1338
    %1340 = vrot.lane.b32.xlu0 %v1330, 64
    %v1341 = vpop.permute.xlu0 %1340
    %1342 = vrot.lane.b32.xlu0 %v1332, 64
    %v1343 = vpop.permute.xlu0 %1342
    %1344 = vrot.lane.b32.xlu0 %v1334, 64
    %v1345 = vpop.permute.xlu0 %1344
    %1346 = vrot.lane.b32.xlu0 %v1336, 64
    %v1347 = vpop.permute.xlu0 %1346
    %1348 = vrot.lane.b32.xlu0 %v1337, 64
    %v1349 = vpop.permute.xlu0 %1348
    %v1356 = vsel %vm401, %v1104, %v1120
    %v1357 = vsel %vm401, %v1086, %v1122
    %v1358 = vsel %vm401, %v1088, %v1124
    %v1359 = vsel %vm401, %v1090, %v1126
    %v1360 = vsel %vm401, %v1092, %v1128
    %v1361 = vsel %vm401, %v1094, %v1130
    %v1362 = vsel %vm401, %v1096, %v1132
    %v1363 = vsel %vm417, %v1356, %v1154
    %v1364 = vsel %vm417, %v1357, %v1156
    %v1365 = vsel %vm417, %v1358, %v1158
    %v1366 = vsel %vm417, %v1359, %v1160
    %v1367 = vsel %vm417, %v1360, %v1162
    %v1368 = vsel %vm417, %v1361, %v1164
    %v1369 = vsel %vm417, %v1362, %v1166
    %v1370 = vsel %vm433, %v1363, %v1188
    %v1371 = vsel %vm433, %v1364, %v1190
    %v1372 = vsel %vm433, %v1365, %v1192
    %v1373 = vsel %vm433, %v1366, %v1194
    %v1374 = vsel %vm433, %v1367, %v1196
    %v1375 = vsel %vm433, %v1368, %v1198
    %v1376 = vsel %vm433, %v1369, %v1200
    %v1377 = vsel %vm449, %v1370, %v1222
    %v1378 = vsel %vm449, %v1371, %v1224
    %v1379 = vsel %vm449, %v1372, %v1226
    %v1380 = vsel %vm449, %v1373, %v1228
    %v1381 = vsel %vm449, %v1374, %v1230
    %v1382 = vsel %vm449, %v1375, %v1232
    %v1383 = vsel %vm449, %v1376, %v1234
    %v1384 = vsel %vm902, %v1377, %v1257
    %v1385 = vsel %vm902, %v1378, %v1259
    %v1386 = vsel %vm902, %v1379, %v1261
    %v1387 = vsel %vm902, %v1380, %v1263
    %v1388 = vsel %vm902, %v1381, %v1265
    %v1389 = vsel %vm902, %v1382, %v1267
    %v1390 = vsel %vm902, %v1383, %v1269
    %v1391 = vsel %vm910, %v1384, %v1279
    %v1392 = vsel %vm910, %v1385, %v1281
    %v1393 = vsel %vm910, %v1386, %v1283
    %v1394 = vsel %vm910, %v1387, %v1285
    %v1395 = vsel %vm910, %v1388, %v1287
    %v1396 = vsel %vm910, %v1389, %v1289
    %v1397 = vsel %vm910, %v1390, %v800
    %v1398 = vsel %vm918, %v1391, %v1309
    %v1399 = vsel %vm918, %v1392, %v1311
    %v1400 = vsel %vm918, %v1393, %v1313
    %v1401 = vsel %vm918, %v1394, %v1315
    %v1402 = vsel %vm918, %v1395, %v1317
    %v1403 = vsel %vm918, %v1396, %v1319
    %v1404 = vsel %vm918, %v1397, %v833
    %v1405 = vsel %vm926, %v1398, %v1339
    %v1406 = vsel %vm926, %v1399, %v1341
    %v1407 = vsel %vm926, %v1400, %v1343
    %v1408 = vsel %vm926, %v1401, %v1345
    %v1409 = vsel %vm926, %v1402, %v1347
    %v1410 = vsel %vm926, %v1403, %v1349
    %v1411 = vsel %vm926, %v1404, %v866
    %v1412 = vmul.f32 %v1405, %v59
    %v1413 = vmul.f32 %v1406, %v60
    %v1414 = vmul.f32 %v1407, %v61
    %v1415 = vmul.f32 %v1408, %v62
    %v1416 = vmul.f32 %v1409, %v63
    %v1417 = vmul.f32 %v1410, %v64
    %v1418 = vmul.f32 %v1411, %v65
    %v1419 = vpack.c.bf16 %v1413, %v1412
    %v1420 = vpack.c.bf16 %v1415, %v1414
    %v1421 = vpack.c.bf16 %v1417, %v1416
    %v1422 = vpack.c.bf16 %v1418, %v1418
    %v1424 = vlaneseq
    %v1425 = vshrl.u32 %v1424, 7
    %v1426 = vsub.s32 0, %v1425
    %v1427 = vrot.slane %v1076, %v1426
    %v1438 = vunpack.c.l.b16 %v1066
    %v1439 = vunpack.c.l.b16 %v1067
    %v1440 = vunpack.c.l.b16 %v1068
    %v1441 = vunpack.c.l.b16 %v1069
    %v1442 = vunpack.c.l.b16 %v1070
    %v1443 = vunpack.c.l.b16 %v1071
    %v1444 = vunpack.c.l.b16 %v1072
    %v1445 = vunpack.c.l.b16 %v1073
    %v1446 = vunpack.c.l.b16 %v1074
    %v1447 = vpack.c.b16 %v1439, %v1438
    %v1448 = vpack.c.b16 %v1441, %v1440
    %v1449 = vpack.c.b16 %v1443, %v1442
    %v1450 = vpack.c.b16 %v1445, %v1444
    %v1451 = vpack.c.b16 %v1446, %v1446
    %v1457 = vsel %vm978, %v1419, 0
    %v1460 = vsel %vm978, %v1420, 0
    %v1463 = vsel %vm978, %v1421, 0
    %v1466 = vsel %vm978, %v1422, 0
    %v1469 = vsel %vm358, %v1451, 0
    %1471 = vmatprep.subr.bf16.mxu0 0
    %1472 = vmatpush1.bf16.msra.mxu0 0
    %1473 = vmatprep.subr.bf16.mxu0 0
    %1474 = vmatpush1.bf16.msra.mxu0 0
    %1475 = vmatprep.subr.bf16.mxu0 0
    %1476 = vmatpush1.bf16.msra.mxu0 0
    %1477 = vmatprep.subr.bf16.mxu0 0
    %1478 = vmatpush1.bf16.msra.mxu0 %v1469
    %1479 = vmatprep.subr.bf16.mxu0 0
    %1480 = vmatpush1.bf16.msra.mxu0 %v1450
    %1481 = vmatprep.subr.bf16.mxu0 0
    %1482 = vmatpush1.bf16.msra.mxu0 %v1449
    %1483 = vmatprep.subr.bf16.mxu0 0
    %1484 = vmatpush1.bf16.msra.mxu0 %v1448
    %1485 = vmatprep.subr.bf16.mxu0 0
    %1486 = vmatpush1.bf16.msra.mxu0 %v1447
    %1487 = vmatprep.subr.bf16.mxu0 0
    %1488 = vmatpush2.bf16.msra.mxu0 0
    %1489 = vmatprep.subr.bf16.mxu0 0
    %1490 = vmatpush2.bf16.msra.mxu0 0
    %1491 = vmatprep.subr.bf16.mxu0 0
    %1492 = vmatpush2.bf16.msra.mxu0 0
    %1493 = vmatprep.subr.bf16.mxu0 0
    %1494 = vmatpush2.bf16.msra.mxu0 0
    %1495 = vmatprep.subr.bf16.mxu0 0
    %1496 = vmatpush2.bf16.msra.mxu0 0
    %1497 = vmatprep.subr.bf16.mxu0 0
    %1498 = vmatpush2.bf16.msra.mxu0 0
    %1499 = vmatprep.subr.bf16.mxu0 0
    %1500 = vmatpush2.bf16.msra.mxu0 0
    %1501 = vmatprep.subr.bf16.mxu0 0
    %1502 = vmatpush2.bf16.msra.mxu0 0
    %1503 = vmatprep.mubr.bf16.mxu0 0
    %1504 = vmatmul.mubr.bf16.gmra.mxu0 %v1457
    %v1505 = vpop.f32.mrf.mxu0
    %v1506 = vadd.f32 %v1427, %v1505
    %v1507 = vpop.f32.mrf.mxu0
    %v1508 = vpop.f32.mrf.mxu0
    %v1509 = vadd.f32 %v1427, %v1508
    %v1510 = vpop.f32.mrf.mxu0
    %1511 = vmatprep.mubr.bf16.mxu0 0
    %1512 = vmatmul.mubr.bf16.gmra.mxu0 %v1460
    %v1513 = vpop.f32.mrf.mxu0
    %v1514 = vadd.f32 %v1427, %v1513
    %v1515 = vpop.f32.mrf.mxu0
    %v1516 = vpop.f32.mrf.mxu0
    %v1517 = vadd.f32 %v1427, %v1516
    %v1518 = vpop.f32.mrf.mxu0
    %1519 = vmatprep.mubr.bf16.mxu0 0
    %1520 = vmatmul.mubr.bf16.gmra.mxu0 %v1463
    %v1521 = vpop.f32.mrf.mxu0
    %v1522 = vadd.f32 %v1427, %v1521
    %v1523 = vpop.f32.mrf.mxu0
    %v1524 = vpop.f32.mrf.mxu0
    %v1525 = vadd.f32 %v1427, %v1524
    %v1526 = vpop.f32.mrf.mxu0
    %1527 = vmatprep.mubr.bf16.mxu0 0
    %1528 = vmatmul.mubr.bf16.gmra.mxu0 %v1466
    %v1529 = vpop.f32.mrf.mxu0
    %v1530 = vadd.f32 %v1427, %v1529
    %v1531 = vpop.f32.mrf.mxu0
    %v1532 = vpop.f32.mrf.mxu0
    %v1533 = vpop.f32.mrf.mxu0
    %1534 = vdwg.mxu0
    %v1535 = vadd.f32 %v569, %v1506
    %v1536 = vadd.f32 %v570, %v1509
    %v1537 = vadd.f32 %v571, %v1514
    %v1538 = vadd.f32 %v572, %v1517
    %v1539 = vadd.f32 %v573, %v1522
    %v1540 = vadd.f32 %v574, %v1525
    %v1541 = vadd.f32 %v575, %v1530
    %v1542 = vmax.f32 %v1535, 0.0
    %v1543 = vmax.f32 %v1536, 0.0
    %v1544 = vmax.f32 %v1537, 0.0
    %v1545 = vmax.f32 %v1538, 0.0
    %v1546 = vmax.f32 %v1539, 0.0
    %v1547 = vmax.f32 %v1540, 0.0
    %v1548 = vmax.f32 %v1541, 0.0
    %s1549 = scalar_lea.vmem %s6, 72
    %v1550 = vld [vmem:[%s1549] sm:$0xf]
    %v1551 = vld [vmem:[%s1549 + $0x4] sm:$0xf]
    %v1552 = vld [vmem:[%s1549 + $0x8] sm:$0xf]
    %v1553 = vld [vmem:[%s1549 + $0xc] sm:$0xf]
    %v1554 = vld [vmem:[%s1549 + $0x10] sm:$0xf]
    %v1555 = vld [vmem:[%s1549 + $0x14] sm:$0xf]
    %v1556 = vld [vmem:[%s1549 + $0x18] sm:$0xf]
    %v1557 = vld [vmem:[%s1549 + $0x1c] sm:$0xf]
    %v1558 = vld [vmem:[%s1549 + $0x20] sm:$0xf]
    %s1559 = scalar_lea.vmem %s7, 2
    %v1560 = vld [vmem:[%s1559] sm:$0x1]
    %v1568 = vrot.slane %v1542, 2
    %v1569 = vrot.slane %v1543, 2
    %v1570 = vsel %vm100, %v1568, %v1569
    %v1571 = vrot.slane %v1544, 2
    %v1572 = vsel %vm100, %v1569, %v1571
    %v1573 = vrot.slane %v1545, 2
    %v1574 = vsel %vm100, %v1571, %v1573
    %v1575 = vrot.slane %v1546, 2
    %v1576 = vsel %vm100, %v1573, %v1575
    %v1577 = vrot.slane %v1547, 2
    %v1578 = vsel %vm100, %v1575, %v1577
    %v1579 = vrot.slane %v1548, 2
    %v1580 = vsel %vm100, %v1577, %v1579
    %v1588 = vsel %vm100, 0.0, %v1568
    %v1590 = vrot.slane %v1588, 1
    %v1591 = vrot.slane %v1570, 1
    %v1592 = vsel %vm123, %v1590, %v1591
    %v1593 = vrot.slane %v1572, 1
    %v1594 = vsel %vm123, %v1591, %v1593
    %v1595 = vrot.slane %v1574, 1
    %v1596 = vsel %vm123, %v1593, %v1595
    %v1597 = vrot.slane %v1576, 1
    %v1598 = vsel %vm123, %v1595, %v1597
    %v1599 = vrot.slane %v1578, 1
    %v1600 = vsel %vm123, %v1597, %v1599
    %v1601 = vrot.slane %v1580, 1
    %v1602 = vsel %vm123, %v1599, %v1601
    %1603 = vrot.lane.b32.xlu0 %v1592, 8
    %v1604 = vpop.permute.xlu0 %1603
    %1605 = vrot.lane.b32.xlu0 %v1594, 8
    %v1606 = vpop.permute.xlu0 %1605
    %1607 = vrot.lane.b32.xlu0 %v1596, 8
    %v1608 = vpop.permute.xlu0 %1607
    %1609 = vrot.lane.b32.xlu0 %v1598, 8
    %v1610 = vpop.permute.xlu0 %1609
    %1611 = vrot.lane.b32.xlu0 %v1600, 8
    %v1612 = vpop.permute.xlu0 %1611
    %1613 = vrot.lane.b32.xlu0 %v1602, 8
    %v1614 = vpop.permute.xlu0 %1613
    %1615 = vrot.lane.b32.xlu0 %v1601, 8
    %v1616 = vpop.permute.xlu0 %1615
    %v1624 = vrot.slane %v1588, 2
    %v1625 = vrot.slane %v1570, 2
    %v1626 = vsel %vm100, %v1624, %v1625
    %v1627 = vrot.slane %v1572, 2
    %v1628 = vsel %vm100, %v1625, %v1627
    %v1629 = vrot.slane %v1574, 2
    %v1630 = vsel %vm100, %v1627, %v1629
    %v1631 = vrot.slane %v1576, 2
    %v1632 = vsel %vm100, %v1629, %v1631
    %v1633 = vrot.slane %v1578, 2
    %v1634 = vsel %vm100, %v1631, %v1633
    %v1635 = vrot.slane %v1580, 2
    %v1636 = vsel %vm100, %v1633, %v1635
    %1637 = vrot.lane.b32.xlu0 %v1626, 16
    %v1638 = vpop.permute.xlu0 %1637
    %1639 = vrot.lane.b32.xlu0 %v1628, 16
    %v1640 = vpop.permute.xlu0 %1639
    %1641 = vrot.lane.b32.xlu0 %v1630, 16
    %v1642 = vpop.permute.xlu0 %1641
    %1643 = vrot.lane.b32.xlu0 %v1632, 16
    %v1644 = vpop.permute.xlu0 %1643
    %1645 = vrot.lane.b32.xlu0 %v1634, 16
    %v1646 = vpop.permute.xlu0 %1645
    %1647 = vrot.lane.b32.xlu0 %v1636, 16
    %v1648 = vpop.permute.xlu0 %1647
    %1649 = vrot.lane.b32.xlu0 %v1635, 16
    %v1650 = vpop.permute.xlu0 %1649
    %v1658 = vrot.slane %v1588, 5
    %v1659 = vrot.slane %v1570, 5
    %v1660 = vsel %vm192, %v1658, %v1659
    %v1661 = vrot.slane %v1572, 5
    %v1662 = vsel %vm192, %v1659, %v1661
    %v1663 = vrot.slane %v1574, 5
    %v1664 = vsel %vm192, %v1661, %v1663
    %v1665 = vrot.slane %v1576, 5
    %v1666 = vsel %vm192, %v1663, %v1665
    %v1667 = vrot.slane %v1578, 5
    %v1668 = vsel %vm192, %v1665, %v1667
    %v1669 = vrot.slane %v1580, 5
    %v1670 = vsel %vm192, %v1667, %v1669
    %1671 = vrot.lane.b32.xlu0 %v1660, 24
    %v1672 = vpop.permute.xlu0 %1671
    %1673 = vrot.lane.b32.xlu0 %v1662, 24
    %v1674 = vpop.permute.xlu0 %1673
    %1675 = vrot.lane.b32.xlu0 %v1664, 24
    %v1676 = vpop.permute.xlu0 %1675
    %1677 = vrot.lane.b32.xlu0 %v1666, 24
    %v1678 = vpop.permute.xlu0 %1677
    %1679 = vrot.lane.b32.xlu0 %v1668, 24
    %v1680 = vpop.permute.xlu0 %1679
    %1681 = vrot.lane.b32.xlu0 %v1670, 24
    %v1682 = vpop.permute.xlu0 %1681
    %1683 = vrot.lane.b32.xlu0 %v1669, 24
    %v1684 = vpop.permute.xlu0 %1683
    %v1692 = vrot.slane %v1588, 6
    %v1693 = vrot.slane %v1570, 6
    %v1694 = vsel %vm227, %v1692, %v1693
    %v1695 = vrot.slane %v1572, 6
    %v1696 = vsel %vm227, %v1693, %v1695
    %v1697 = vrot.slane %v1574, 6
    %v1698 = vsel %vm227, %v1695, %v1697
    %v1699 = vrot.slane %v1576, 6
    %v1700 = vsel %vm227, %v1697, %v1699
    %v1701 = vrot.slane %v1578, 6
    %v1702 = vsel %vm227, %v1699, %v1701
    %v1703 = vrot.slane %v1580, 6
    %v1704 = vsel %vm227, %v1701, %v1703
    %1705 = vrot.lane.b32.xlu0 %v1694, 32
    %v1706 = vpop.permute.xlu0 %1705
    %1707 = vrot.lane.b32.xlu0 %v1696, 32
    %v1708 = vpop.permute.xlu0 %1707
    %1709 = vrot.lane.b32.xlu0 %v1698, 32
    %v1710 = vpop.permute.xlu0 %1709
    %1711 = vrot.lane.b32.xlu0 %v1700, 32
    %v1712 = vpop.permute.xlu0 %1711
    %1713 = vrot.lane.b32.xlu0 %v1702, 32
    %v1714 = vpop.permute.xlu0 %1713
    %1715 = vrot.lane.b32.xlu0 %v1704, 32
    %v1716 = vpop.permute.xlu0 %1715
    %1717 = vrot.lane.b32.xlu0 %v1703, 32
    %v1718 = vpop.permute.xlu0 %1717
    %v1726 = vrot.slane %v1588, 7
    %v1727 = vrot.slane %v1570, 7
    %v1728 = vsel %vm263, %v1726, %v1727
    %v1729 = vrot.slane %v1572, 7
    %v1730 = vsel %vm263, %v1727, %v1729
    %v1731 = vrot.slane %v1574, 7
    %v1732 = vsel %vm263, %v1729, %v1731
    %v1733 = vrot.slane %v1576, 7
    %v1734 = vsel %vm263, %v1731, %v1733
    %v1735 = vrot.slane %v1578, 7
    %v1736 = vsel %vm263, %v1733, %v1735
    %v1737 = vrot.slane %v1580, 7
    %v1738 = vsel %vm263, %v1735, %v1737
    %v1739 = vsel %vm263, %v1737, %v277
    %1740 = vrot.lane.b32.xlu0 %v1728, 40
    %v1741 = vpop.permute.xlu0 %1740
    %1742 = vrot.lane.b32.xlu0 %v1730, 40
    %v1743 = vpop.permute.xlu0 %1742
    %1744 = vrot.lane.b32.xlu0 %v1732, 40
    %v1745 = vpop.permute.xlu0 %1744
    %1746 = vrot.lane.b32.xlu0 %v1734, 40
    %v1747 = vpop.permute.xlu0 %1746
    %1748 = vrot.lane.b32.xlu0 %v1736, 40
    %v1749 = vpop.permute.xlu0 %1748
    %1750 = vrot.lane.b32.xlu0 %v1738, 40
    %v1751 = vpop.permute.xlu0 %1750
    %1752 = vrot.lane.b32.xlu0 %v1739, 40
    %v1753 = vpop.permute.xlu0 %1752
    %v1761 = vsel %vm100, %v1635, %v300
    %1762 = vrot.lane.b32.xlu0 %v1628, 48
    %v1763 = vpop.permute.xlu0 %1762
    %1764 = vrot.lane.b32.xlu0 %v1630, 48
    %v1765 = vpop.permute.xlu0 %1764
    %1766 = vrot.lane.b32.xlu0 %v1632, 48
    %v1767 = vpop.permute.xlu0 %1766
    %1768 = vrot.lane.b32.xlu0 %v1634, 48
    %v1769 = vpop.permute.xlu0 %1768
    %1770 = vrot.lane.b32.xlu0 %v1636, 48
    %v1771 = vpop.permute.xlu0 %1770
    %1772 = vrot.lane.b32.xlu0 %v1761, 48
    %v1773 = vpop.permute.xlu0 %1772
    %v1780 = vrot.slane %v1570, 3
    %v1781 = vrot.slane %v1572, 3
    %v1782 = vsel %vm323, %v1780, %v1781
    %v1783 = vrot.slane %v1574, 3
    %v1784 = vsel %vm323, %v1781, %v1783
    %v1785 = vrot.slane %v1576, 3
    %v1786 = vsel %vm323, %v1783, %v1785
    %v1787 = vrot.slane %v1578, 3
    %v1788 = vsel %vm323, %v1785, %v1787
    %v1789 = vrot.slane %v1580, 3
    %v1790 = vsel %vm323, %v1787, %v1789
    %v1791 = vsel %vm323, %v1789, %v335
    %1792 = vrot.lane.b32.xlu0 %v1782, 56
    %v1793 = vpop.permute.xlu0 %1792
    %1794 = vrot.lane.b32.xlu0 %v1784, 56
    %v1795 = vpop.permute.xlu0 %1794
    %1796 = vrot.lane.b32.xlu0 %v1786, 56
    %v1797 = vpop.permute.xlu0 %1796
    %1798 = vrot.lane.b32.xlu0 %v1788, 56
    %v1799 = vpop.permute.xlu0 %1798
    %1800 = vrot.lane.b32.xlu0 %v1790, 56
    %v1801 = vpop.permute.xlu0 %1800
    %1802 = vrot.lane.b32.xlu0 %v1791, 56
    %v1803 = vpop.permute.xlu0 %1802
    %v1810 = vrot.slane %v1570, 4
    %v1811 = vrot.slane %v1572, 4
    %v1812 = vsel %vm358, %v1810, %v1811
    %v1813 = vrot.slane %v1574, 4
    %v1814 = vsel %vm358, %v1811, %v1813
    %v1815 = vrot.slane %v1576, 4
    %v1816 = vsel %vm358, %v1813, %v1815
    %v1817 = vrot.slane %v1578, 4
    %v1818 = vsel %vm358, %v1815, %v1817
    %v1819 = vrot.slane %v1580, 4
    %v1820 = vsel %vm358, %v1817, %v1819
    %v1821 = vsel %vm358, %v1819, %v370
    %1822 = vrot.lane.b32.xlu0 %v1812, 64
    %v1823 = vpop.permute.xlu0 %1822
    %1824 = vrot.lane.b32.xlu0 %v1814, 64
    %v1825 = vpop.permute.xlu0 %1824
    %1826 = vrot.lane.b32.xlu0 %v1816, 64
    %v1827 = vpop.permute.xlu0 %1826
    %1828 = vrot.lane.b32.xlu0 %v1818, 64
    %v1829 = vpop.permute.xlu0 %1828
    %1830 = vrot.lane.b32.xlu0 %v1820, 64
    %v1831 = vpop.permute.xlu0 %1830
    %1832 = vrot.lane.b32.xlu0 %v1821, 64
    %v1833 = vpop.permute.xlu0 %1832
    %v1840 = vsel %vm401, %v1588, %v1604
    %v1841 = vsel %vm401, %v1570, %v1606
    %v1842 = vsel %vm401, %v1572, %v1608
    %v1843 = vsel %vm401, %v1574, %v1610
    %v1844 = vsel %vm401, %v1576, %v1612
    %v1845 = vsel %vm401, %v1578, %v1614
    %v1846 = vsel %vm401, %v1580, %v1616
    %v1847 = vsel %vm417, %v1840, %v1638
    %v1848 = vsel %vm417, %v1841, %v1640
    %v1849 = vsel %vm417, %v1842, %v1642
    %v1850 = vsel %vm417, %v1843, %v1644
    %v1851 = vsel %vm417, %v1844, %v1646
    %v1852 = vsel %vm417, %v1845, %v1648
    %v1853 = vsel %vm417, %v1846, %v1650
    %v1854 = vsel %vm433, %v1847, %v1672
    %v1855 = vsel %vm433, %v1848, %v1674
    %v1856 = vsel %vm433, %v1849, %v1676
    %v1857 = vsel %vm433, %v1850, %v1678
    %v1858 = vsel %vm433, %v1851, %v1680
    %v1859 = vsel %vm433, %v1852, %v1682
    %v1860 = vsel %vm433, %v1853, %v1684
    %v1861 = vsel %vm449, %v1854, %v1706
    %v1862 = vsel %vm449, %v1855, %v1708
    %v1863 = vsel %vm449, %v1856, %v1710
    %v1864 = vsel %vm449, %v1857, %v1712
    %v1865 = vsel %vm449, %v1858, %v1714
    %v1866 = vsel %vm449, %v1859, %v1716
    %v1867 = vsel %vm449, %v1860, %v1718
    %v1868 = vsel %vm902, %v1861, %v1741
    %v1869 = vsel %vm902, %v1862, %v1743
    %v1870 = vsel %vm902, %v1863, %v1745
    %v1871 = vsel %vm902, %v1864, %v1747
    %v1872 = vsel %vm902, %v1865, %v1749
    %v1873 = vsel %vm902, %v1866, %v1751
    %v1874 = vsel %vm902, %v1867, %v1753
    %v1875 = vsel %vm910, %v1868, %v1763
    %v1876 = vsel %vm910, %v1869, %v1765
    %v1877 = vsel %vm910, %v1870, %v1767
    %v1878 = vsel %vm910, %v1871, %v1769
    %v1879 = vsel %vm910, %v1872, %v1771
    %v1880 = vsel %vm910, %v1873, %v1773
    %v1881 = vsel %vm910, %v1874, %v800
    %v1882 = vsel %vm918, %v1875, %v1793
    %v1883 = vsel %vm918, %v1876, %v1795
    %v1884 = vsel %vm918, %v1877, %v1797
    %v1885 = vsel %vm918, %v1878, %v1799
    %v1886 = vsel %vm918, %v1879, %v1801
    %v1887 = vsel %vm918, %v1880, %v1803
    %v1888 = vsel %vm918, %v1881, %v833
    %v1889 = vsel %vm926, %v1882, %v1823
    %v1890 = vsel %vm926, %v1883, %v1825
    %v1891 = vsel %vm926, %v1884, %v1827
    %v1892 = vsel %vm926, %v1885, %v1829
    %v1893 = vsel %vm926, %v1886, %v1831
    %v1894 = vsel %vm926, %v1887, %v1833
    %v1895 = vsel %vm926, %v1888, %v866
    %v1896 = vmul.f32 %v1889, %v59
    %v1897 = vmul.f32 %v1890, %v60
    %v1898 = vmul.f32 %v1891, %v61
    %v1899 = vmul.f32 %v1892, %v62
    %v1900 = vmul.f32 %v1893, %v63
    %v1901 = vmul.f32 %v1894, %v64
    %v1902 = vmul.f32 %v1895, %v65
    %v1903 = vpack.c.bf16 %v1897, %v1896
    %v1904 = vpack.c.bf16 %v1899, %v1898
    %v1905 = vpack.c.bf16 %v1901, %v1900
    %v1906 = vpack.c.bf16 %v1902, %v1902
    %v1908 = vlaneseq
    %v1909 = vshrl.u32 %v1908, 7
    %v1910 = vsub.s32 0, %v1909
    %v1911 = vrot.slane %v1560, %v1910
    %v1922 = vunpack.c.l.b16 %v1550
    %v1923 = vunpack.c.l.b16 %v1551
    %v1924 = vunpack.c.l.b16 %v1552
    %v1925 = vunpack.c.l.b16 %v1553
    %v1926 = vunpack.c.l.b16 %v1554
    %v1927 = vunpack.c.l.b16 %v1555
    %v1928 = vunpack.c.l.b16 %v1556
    %v1929 = vunpack.c.l.b16 %v1557
    %v1930 = vunpack.c.l.b16 %v1558
    %v1931 = vpack.c.b16 %v1923, %v1922
    %v1932 = vpack.c.b16 %v1925, %v1924
    %v1933 = vpack.c.b16 %v1927, %v1926
    %v1934 = vpack.c.b16 %v1929, %v1928
    %v1935 = vpack.c.b16 %v1930, %v1930
    %v1941 = vsel %vm978, %v1903, 0
    %v1944 = vsel %vm978, %v1904, 0
    %v1947 = vsel %vm978, %v1905, 0
    %v1950 = vsel %vm978, %v1906, 0
    %v1953 = vsel %vm358, %v1935, 0
    %1955 = vmatprep.subr.bf16.mxu0 0
    %1956 = vmatpush1.bf16.msra.mxu0 0
    %1957 = vmatprep.subr.bf16.mxu0 0
    %1958 = vmatpush1.bf16.msra.mxu0 0
    %1959 = vmatprep.subr.bf16.mxu0 0
    %1960 = vmatpush1.bf16.msra.mxu0 0
    %1961 = vmatprep.subr.bf16.mxu0 0
    %1962 = vmatpush1.bf16.msra.mxu0 %v1953
    %1963 = vmatprep.subr.bf16.mxu0 0
    %1964 = vmatpush1.bf16.msra.mxu0 %v1934
    %1965 = vmatprep.subr.bf16.mxu0 0
    %1966 = vmatpush1.bf16.msra.mxu0 %v1933
    %1967 = vmatprep.subr.bf16.mxu0 0
    %1968 = vmatpush1.bf16.msra.mxu0 %v1932
    %1969 = vmatprep.subr.bf16.mxu0 0
    %1970 = vmatpush1.bf16.msra.mxu0 %v1931
    %1971 = vmatprep.subr.bf16.mxu0 0
    %1972 = vmatpush2.bf16.msra.mxu0 0
    %1973 = vmatprep.subr.bf16.mxu0 0
    %1974 = vmatpush2.bf16.msra.mxu0 0
    %1975 = vmatprep.subr.bf16.mxu0 0
    %1976 = vmatpush2.bf16.msra.mxu0 0
    %1977 = vmatprep.subr.bf16.mxu0 0
    %1978 = vmatpush2.bf16.msra.mxu0 0
    %1979 = vmatprep.subr.bf16.mxu0 0
    %1980 = vmatpush2.bf16.msra.mxu0 0
    %1981 = vmatprep.subr.bf16.mxu0 0
    %1982 = vmatpush2.bf16.msra.mxu0 0
    %1983 = vmatprep.subr.bf16.mxu0 0
    %1984 = vmatpush2.bf16.msra.mxu0 0
    %1985 = vmatprep.subr.bf16.mxu0 0
    %1986 = vmatpush2.bf16.msra.mxu0 0
    %1987 = vmatprep.mubr.bf16.mxu0 0
    %1988 = vmatmul.mubr.bf16.gmra.mxu0 %v1941
    %v1989 = vpop.f32.mrf.mxu0
    %v1990 = vadd.f32 %v1911, %v1989
    %v1991 = vpop.f32.mrf.mxu0
    %v1992 = vpop.f32.mrf.mxu0
    %v1993 = vadd.f32 %v1911, %v1992
    %v1994 = vpop.f32.mrf.mxu0
    %1995 = vmatprep.mubr.bf16.mxu0 0
    %1996 = vmatmul.mubr.bf16.gmra.mxu0 %v1944
    %v1997 = vpop.f32.mrf.mxu0
    %v1998 = vadd.f32 %v1911, %v1997
    %v1999 = vpop.f32.mrf.mxu0
    %v2000 = vpop.f32.mrf.mxu0
    %v2001 = vadd.f32 %v1911, %v2000
    %v2002 = vpop.f32.mrf.mxu0
    %2003 = vmatprep.mubr.bf16.mxu0 0
    %2004 = vmatmul.mubr.bf16.gmra.mxu0 %v1947
    %v2005 = vpop.f32.mrf.mxu0
    %v2006 = vadd.f32 %v1911, %v2005
    %v2007 = vpop.f32.mrf.mxu0
    %v2008 = vpop.f32.mrf.mxu0
    %v2009 = vadd.f32 %v1911, %v2008
    %v2010 = vpop.f32.mrf.mxu0
    %2011 = vmatprep.mubr.bf16.mxu0 0
    %2012 = vmatmul.mubr.bf16.gmra.mxu0 %v1950
    %v2013 = vpop.f32.mrf.mxu0
    %v2014 = vadd.f32 %v1911, %v2013
    %v2015 = vpop.f32.mrf.mxu0
    %v2016 = vpop.f32.mrf.mxu0
    %v2017 = vpop.f32.mrf.mxu0
    %2018 = vdwg.mxu0
    %v2019 = vmax.f32 %v1990, 0.0
    %v2020 = vmax.f32 %v1993, 0.0
    %v2021 = vmax.f32 %v1998, 0.0
    %v2022 = vmax.f32 %v2001, 0.0
    %v2023 = vmax.f32 %v2006, 0.0
    %v2024 = vmax.f32 %v2009, 0.0
    %v2025 = vmax.f32 %v2014, 0.0
    %s2026 = scalar_lea.vmem %s6, 108
    %v2027 = vld [vmem:[%s2026] sm:$0xf]
    %v2028 = vld [vmem:[%s2026 + $0x4] sm:$0xf]
    %v2029 = vld [vmem:[%s2026 + $0x8] sm:$0xf]
    %v2030 = vld [vmem:[%s2026 + $0xc] sm:$0xf]
    %v2031 = vld [vmem:[%s2026 + $0x10] sm:$0xf]
    %v2032 = vld [vmem:[%s2026 + $0x14] sm:$0xf]
    %v2033 = vld [vmem:[%s2026 + $0x18] sm:$0xf]
    %v2034 = vld [vmem:[%s2026 + $0x1c] sm:$0xf]
    %v2035 = vld [vmem:[%s2026 + $0x20] sm:$0xf]
    %s2036 = scalar_lea.vmem %s7, 3
    %v2037 = vld [vmem:[%s2036] sm:$0x1]
    %v2045 = vrot.slane %v2019, 2
    %v2046 = vrot.slane %v2020, 2
    %v2047 = vsel %vm100, %v2045, %v2046
    %v2048 = vrot.slane %v2021, 2
    %v2049 = vsel %vm100, %v2046, %v2048
    %v2050 = vrot.slane %v2022, 2
    %v2051 = vsel %vm100, %v2048, %v2050
    %v2052 = vrot.slane %v2023, 2
    %v2053 = vsel %vm100, %v2050, %v2052
    %v2054 = vrot.slane %v2024, 2
    %v2055 = vsel %vm100, %v2052, %v2054
    %v2056 = vrot.slane %v2025, 2
    %v2057 = vsel %vm100, %v2054, %v2056
    %v2065 = vsel %vm100, 0.0, %v2045
    %v2067 = vrot.slane %v2065, 1
    %v2068 = vrot.slane %v2047, 1
    %v2069 = vsel %vm123, %v2067, %v2068
    %v2070 = vrot.slane %v2049, 1
    %v2071 = vsel %vm123, %v2068, %v2070
    %v2072 = vrot.slane %v2051, 1
    %v2073 = vsel %vm123, %v2070, %v2072
    %v2074 = vrot.slane %v2053, 1
    %v2075 = vsel %vm123, %v2072, %v2074
    %v2076 = vrot.slane %v2055, 1
    %v2077 = vsel %vm123, %v2074, %v2076
    %v2078 = vrot.slane %v2057, 1
    %v2079 = vsel %vm123, %v2076, %v2078
    %2080 = vrot.lane.b32.xlu0 %v2069, 8
    %v2081 = vpop.permute.xlu0 %2080
    %2082 = vrot.lane.b32.xlu0 %v2071, 8
    %v2083 = vpop.permute.xlu0 %2082
    %2084 = vrot.lane.b32.xlu0 %v2073, 8
    %v2085 = vpop.permute.xlu0 %2084
    %2086 = vrot.lane.b32.xlu0 %v2075, 8
    %v2087 = vpop.permute.xlu0 %2086
    %2088 = vrot.lane.b32.xlu0 %v2077, 8
    %v2089 = vpop.permute.xlu0 %2088
    %2090 = vrot.lane.b32.xlu0 %v2079, 8
    %v2091 = vpop.permute.xlu0 %2090
    %2092 = vrot.lane.b32.xlu0 %v2078, 8
    %v2093 = vpop.permute.xlu0 %2092
    %v2101 = vrot.slane %v2065, 2
    %v2102 = vrot.slane %v2047, 2
    %v2103 = vsel %vm100, %v2101, %v2102
    %v2104 = vrot.slane %v2049, 2
    %v2105 = vsel %vm100, %v2102, %v2104
    %v2106 = vrot.slane %v2051, 2
    %v2107 = vsel %vm100, %v2104, %v2106
    %v2108 = vrot.slane %v2053, 2
    %v2109 = vsel %vm100, %v2106, %v2108
    %v2110 = vrot.slane %v2055, 2
    %v2111 = vsel %vm100, %v2108, %v2110
    %v2112 = vrot.slane %v2057, 2
    %v2113 = vsel %vm100, %v2110, %v2112
    %2114 = vrot.lane.b32.xlu0 %v2103, 16
    %v2115 = vpop.permute.xlu0 %2114
    %2116 = vrot.lane.b32.xlu0 %v2105, 16
    %v2117 = vpop.permute.xlu0 %2116
    %2118 = vrot.lane.b32.xlu0 %v2107, 16
    %v2119 = vpop.permute.xlu0 %2118
    %2120 = vrot.lane.b32.xlu0 %v2109, 16
    %v2121 = vpop.permute.xlu0 %2120
    %2122 = vrot.lane.b32.xlu0 %v2111, 16
    %v2123 = vpop.permute.xlu0 %2122
    %2124 = vrot.lane.b32.xlu0 %v2113, 16
    %v2125 = vpop.permute.xlu0 %2124
    %2126 = vrot.lane.b32.xlu0 %v2112, 16
    %v2127 = vpop.permute.xlu0 %2126
    %v2135 = vrot.slane %v2065, 5
    %v2136 = vrot.slane %v2047, 5
    %v2137 = vsel %vm192, %v2135, %v2136
    %v2138 = vrot.slane %v2049, 5
    %v2139 = vsel %vm192, %v2136, %v2138
    %v2140 = vrot.slane %v2051, 5
    %v2141 = vsel %vm192, %v2138, %v2140
    %v2142 = vrot.slane %v2053, 5
    %v2143 = vsel %vm192, %v2140, %v2142
    %v2144 = vrot.slane %v2055, 5
    %v2145 = vsel %vm192, %v2142, %v2144
    %v2146 = vrot.slane %v2057, 5
    %v2147 = vsel %vm192, %v2144, %v2146
    %2148 = vrot.lane.b32.xlu0 %v2137, 24
    %v2149 = vpop.permute.xlu0 %2148
    %2150 = vrot.lane.b32.xlu0 %v2139, 24
    %v2151 = vpop.permute.xlu0 %2150
    %2152 = vrot.lane.b32.xlu0 %v2141, 24
    %v2153 = vpop.permute.xlu0 %2152
    %2154 = vrot.lane.b32.xlu0 %v2143, 24
    %v2155 = vpop.permute.xlu0 %2154
    %2156 = vrot.lane.b32.xlu0 %v2145, 24
    %v2157 = vpop.permute.xlu0 %2156
    %2158 = vrot.lane.b32.xlu0 %v2147, 24
    %v2159 = vpop.permute.xlu0 %2158
    %2160 = vrot.lane.b32.xlu0 %v2146, 24
    %v2161 = vpop.permute.xlu0 %2160
    %v2169 = vrot.slane %v2065, 6
    %v2170 = vrot.slane %v2047, 6
    %v2171 = vsel %vm227, %v2169, %v2170
    %v2172 = vrot.slane %v2049, 6
    %v2173 = vsel %vm227, %v2170, %v2172
    %v2174 = vrot.slane %v2051, 6
    %v2175 = vsel %vm227, %v2172, %v2174
    %v2176 = vrot.slane %v2053, 6
    %v2177 = vsel %vm227, %v2174, %v2176
    %v2178 = vrot.slane %v2055, 6
    %v2179 = vsel %vm227, %v2176, %v2178
    %v2180 = vrot.slane %v2057, 6
    %v2181 = vsel %vm227, %v2178, %v2180
    %2182 = vrot.lane.b32.xlu0 %v2171, 32
    %v2183 = vpop.permute.xlu0 %2182
    %2184 = vrot.lane.b32.xlu0 %v2173, 32
    %v2185 = vpop.permute.xlu0 %2184
    %2186 = vrot.lane.b32.xlu0 %v2175, 32
    %v2187 = vpop.permute.xlu0 %2186
    %2188 = vrot.lane.b32.xlu0 %v2177, 32
    %v2189 = vpop.permute.xlu0 %2188
    %2190 = vrot.lane.b32.xlu0 %v2179, 32
    %v2191 = vpop.permute.xlu0 %2190
    %2192 = vrot.lane.b32.xlu0 %v2181, 32
    %v2193 = vpop.permute.xlu0 %2192
    %2194 = vrot.lane.b32.xlu0 %v2180, 32
    %v2195 = vpop.permute.xlu0 %2194
    %v2203 = vrot.slane %v2065, 7
    %v2204 = vrot.slane %v2047, 7
    %v2205 = vsel %vm263, %v2203, %v2204
    %v2206 = vrot.slane %v2049, 7
    %v2207 = vsel %vm263, %v2204, %v2206
    %v2208 = vrot.slane %v2051, 7
    %v2209 = vsel %vm263, %v2206, %v2208
    %v2210 = vrot.slane %v2053, 7
    %v2211 = vsel %vm263, %v2208, %v2210
    %v2212 = vrot.slane %v2055, 7
    %v2213 = vsel %vm263, %v2210, %v2212
    %v2214 = vrot.slane %v2057, 7
    %v2215 = vsel %vm263, %v2212, %v2214
    %v2216 = vsel %vm263, %v2214, %v277
    %2217 = vrot.lane.b32.xlu0 %v2205, 40
    %v2218 = vpop.permute.xlu0 %2217
    %2219 = vrot.lane.b32.xlu0 %v2207, 40
    %v2220 = vpop.permute.xlu0 %2219
    %2221 = vrot.lane.b32.xlu0 %v2209, 40
    %v2222 = vpop.permute.xlu0 %2221
    %2223 = vrot.lane.b32.xlu0 %v2211, 40
    %v2224 = vpop.permute.xlu0 %2223
    %2225 = vrot.lane.b32.xlu0 %v2213, 40
    %v2226 = vpop.permute.xlu0 %2225
    %2227 = vrot.lane.b32.xlu0 %v2215, 40
    %v2228 = vpop.permute.xlu0 %2227
    %2229 = vrot.lane.b32.xlu0 %v2216, 40
    %v2230 = vpop.permute.xlu0 %2229
    %v2238 = vsel %vm100, %v2112, %v300
    %2239 = vrot.lane.b32.xlu0 %v2105, 48
    %v2240 = vpop.permute.xlu0 %2239
    %2241 = vrot.lane.b32.xlu0 %v2107, 48
    %v2242 = vpop.permute.xlu0 %2241
    %2243 = vrot.lane.b32.xlu0 %v2109, 48
    %v2244 = vpop.permute.xlu0 %2243
    %2245 = vrot.lane.b32.xlu0 %v2111, 48
    %v2246 = vpop.permute.xlu0 %2245
    %2247 = vrot.lane.b32.xlu0 %v2113, 48
    %v2248 = vpop.permute.xlu0 %2247
    %2249 = vrot.lane.b32.xlu0 %v2238, 48
    %v2250 = vpop.permute.xlu0 %2249
    %v2257 = vrot.slane %v2047, 3
    %v2258 = vrot.slane %v2049, 3
    %v2259 = vsel %vm323, %v2257, %v2258
    %v2260 = vrot.slane %v2051, 3
    %v2261 = vsel %vm323, %v2258, %v2260
    %v2262 = vrot.slane %v2053, 3
    %v2263 = vsel %vm323, %v2260, %v2262
    %v2264 = vrot.slane %v2055, 3
    %v2265 = vsel %vm323, %v2262, %v2264
    %v2266 = vrot.slane %v2057, 3
    %v2267 = vsel %vm323, %v2264, %v2266
    %v2268 = vsel %vm323, %v2266, %v335
    %2269 = vrot.lane.b32.xlu0 %v2259, 56
    %v2270 = vpop.permute.xlu0 %2269
    %2271 = vrot.lane.b32.xlu0 %v2261, 56
    %v2272 = vpop.permute.xlu0 %2271
    %2273 = vrot.lane.b32.xlu0 %v2263, 56
    %v2274 = vpop.permute.xlu0 %2273
    %2275 = vrot.lane.b32.xlu0 %v2265, 56
    %v2276 = vpop.permute.xlu0 %2275
    %2277 = vrot.lane.b32.xlu0 %v2267, 56
    %v2278 = vpop.permute.xlu0 %2277
    %2279 = vrot.lane.b32.xlu0 %v2268, 56
    %v2280 = vpop.permute.xlu0 %2279
    %v2287 = vrot.slane %v2047, 4
    %v2288 = vrot.slane %v2049, 4
    %v2289 = vsel %vm358, %v2287, %v2288
    %v2290 = vrot.slane %v2051, 4
    %v2291 = vsel %vm358, %v2288, %v2290
    %v2292 = vrot.slane %v2053, 4
    %v2293 = vsel %vm358, %v2290, %v2292
    %v2294 = vrot.slane %v2055, 4
    %v2295 = vsel %vm358, %v2292, %v2294
    %v2296 = vrot.slane %v2057, 4
    %v2297 = vsel %vm358, %v2294, %v2296
    %v2298 = vsel %vm358, %v2296, %v370
    %2299 = vrot.lane.b32.xlu0 %v2289, 64
    %v2300 = vpop.permute.xlu0 %2299
    %2301 = vrot.lane.b32.xlu0 %v2291, 64
    %v2302 = vpop.permute.xlu0 %2301
    %2303 = vrot.lane.b32.xlu0 %v2293, 64
    %v2304 = vpop.permute.xlu0 %2303
    %2305 = vrot.lane.b32.xlu0 %v2295, 64
    %v2306 = vpop.permute.xlu0 %2305
    %2307 = vrot.lane.b32.xlu0 %v2297, 64
    %v2308 = vpop.permute.xlu0 %2307
    %2309 = vrot.lane.b32.xlu0 %v2298, 64
    %v2310 = vpop.permute.xlu0 %2309
    %v2317 = vsel %vm401, %v2065, %v2081
    %v2318 = vsel %vm401, %v2047, %v2083
    %v2319 = vsel %vm401, %v2049, %v2085
    %v2320 = vsel %vm401, %v2051, %v2087
    %v2321 = vsel %vm401, %v2053, %v2089
    %v2322 = vsel %vm401, %v2055, %v2091
    %v2323 = vsel %vm401, %v2057, %v2093
    %v2324 = vsel %vm417, %v2317, %v2115
    %v2325 = vsel %vm417, %v2318, %v2117
    %v2326 = vsel %vm417, %v2319, %v2119
    %v2327 = vsel %vm417, %v2320, %v2121
    %v2328 = vsel %vm417, %v2321, %v2123
    %v2329 = vsel %vm417, %v2322, %v2125
    %v2330 = vsel %vm417, %v2323, %v2127
    %v2331 = vsel %vm433, %v2324, %v2149
    %v2332 = vsel %vm433, %v2325, %v2151
    %v2333 = vsel %vm433, %v2326, %v2153
    %v2334 = vsel %vm433, %v2327, %v2155
    %v2335 = vsel %vm433, %v2328, %v2157
    %v2336 = vsel %vm433, %v2329, %v2159
    %v2337 = vsel %vm433, %v2330, %v2161
    %v2338 = vsel %vm449, %v2331, %v2183
    %v2339 = vsel %vm449, %v2332, %v2185
    %v2340 = vsel %vm449, %v2333, %v2187
    %v2341 = vsel %vm449, %v2334, %v2189
    %v2342 = vsel %vm449, %v2335, %v2191
    %v2343 = vsel %vm449, %v2336, %v2193
    %v2344 = vsel %vm449, %v2337, %v2195
    %v2345 = vsel %vm902, %v2338, %v2218
    %v2346 = vsel %vm902, %v2339, %v2220
    %v2347 = vsel %vm902, %v2340, %v2222
    %v2348 = vsel %vm902, %v2341, %v2224
    %v2349 = vsel %vm902, %v2342, %v2226
    %v2350 = vsel %vm902, %v2343, %v2228
    %v2351 = vsel %vm902, %v2344, %v2230
    %v2352 = vsel %vm910, %v2345, %v2240
    %v2353 = vsel %vm910, %v2346, %v2242
    %v2354 = vsel %vm910, %v2347, %v2244
    %v2355 = vsel %vm910, %v2348, %v2246
    %v2356 = vsel %vm910, %v2349, %v2248
    %v2357 = vsel %vm910, %v2350, %v2250
    %v2358 = vsel %vm910, %v2351, %v800
    %v2359 = vsel %vm918, %v2352, %v2270
    %v2360 = vsel %vm918, %v2353, %v2272
    %v2361 = vsel %vm918, %v2354, %v2274
    %v2362 = vsel %vm918, %v2355, %v2276
    %v2363 = vsel %vm918, %v2356, %v2278
    %v2364 = vsel %vm918, %v2357, %v2280
    %v2365 = vsel %vm918, %v2358, %v833
    %v2366 = vsel %vm926, %v2359, %v2300
    %v2367 = vsel %vm926, %v2360, %v2302
    %v2368 = vsel %vm926, %v2361, %v2304
    %v2369 = vsel %vm926, %v2362, %v2306
    %v2370 = vsel %vm926, %v2363, %v2308
    %v2371 = vsel %vm926, %v2364, %v2310
    %v2372 = vsel %vm926, %v2365, %v866
    %v2373 = vmul.f32 %v2366, %v59
    %v2374 = vmul.f32 %v2367, %v60
    %v2375 = vmul.f32 %v2368, %v61
    %v2376 = vmul.f32 %v2369, %v62
    %v2377 = vmul.f32 %v2370, %v63
    %v2378 = vmul.f32 %v2371, %v64
    %v2379 = vmul.f32 %v2372, %v65
    %v2380 = vpack.c.bf16 %v2374, %v2373
    %v2381 = vpack.c.bf16 %v2376, %v2375
    %v2382 = vpack.c.bf16 %v2378, %v2377
    %v2383 = vpack.c.bf16 %v2379, %v2379
    %v2385 = vlaneseq
    %v2386 = vshrl.u32 %v2385, 7
    %v2387 = vsub.s32 0, %v2386
    %v2388 = vrot.slane %v2037, %v2387
    %v2399 = vunpack.c.l.b16 %v2027
    %v2400 = vunpack.c.l.b16 %v2028
    %v2401 = vunpack.c.l.b16 %v2029
    %v2402 = vunpack.c.l.b16 %v2030
    %v2403 = vunpack.c.l.b16 %v2031
    %v2404 = vunpack.c.l.b16 %v2032
    %v2405 = vunpack.c.l.b16 %v2033
    %v2406 = vunpack.c.l.b16 %v2034
    %v2407 = vunpack.c.l.b16 %v2035
    %v2408 = vpack.c.b16 %v2400, %v2399
    %v2409 = vpack.c.b16 %v2402, %v2401
    %v2410 = vpack.c.b16 %v2404, %v2403
    %v2411 = vpack.c.b16 %v2406, %v2405
    %v2412 = vpack.c.b16 %v2407, %v2407
    %v2418 = vsel %vm978, %v2380, 0
    %v2421 = vsel %vm978, %v2381, 0
    %v2424 = vsel %vm978, %v2382, 0
    %v2427 = vsel %vm978, %v2383, 0
    %v2430 = vsel %vm358, %v2412, 0
    %2432 = vmatprep.subr.bf16.mxu0 0
    %2433 = vmatpush1.bf16.msra.mxu0 0
    %2434 = vmatprep.subr.bf16.mxu0 0
    %2435 = vmatpush1.bf16.msra.mxu0 0
    %2436 = vmatprep.subr.bf16.mxu0 0
    %2437 = vmatpush1.bf16.msra.mxu0 0
    %2438 = vmatprep.subr.bf16.mxu0 0
    %2439 = vmatpush1.bf16.msra.mxu0 %v2430
    %2440 = vmatprep.subr.bf16.mxu0 0
    %2441 = vmatpush1.bf16.msra.mxu0 %v2411
    %2442 = vmatprep.subr.bf16.mxu0 0
    %2443 = vmatpush1.bf16.msra.mxu0 %v2410
    %2444 = vmatprep.subr.bf16.mxu0 0
    %2445 = vmatpush1.bf16.msra.mxu0 %v2409
    %2446 = vmatprep.subr.bf16.mxu0 0
    %2447 = vmatpush1.bf16.msra.mxu0 %v2408
    %2448 = vmatprep.subr.bf16.mxu0 0
    %2449 = vmatpush2.bf16.msra.mxu0 0
    %2450 = vmatprep.subr.bf16.mxu0 0
    %2451 = vmatpush2.bf16.msra.mxu0 0
    %2452 = vmatprep.subr.bf16.mxu0 0
    %2453 = vmatpush2.bf16.msra.mxu0 0
    %2454 = vmatprep.subr.bf16.mxu0 0
    %2455 = vmatpush2.bf16.msra.mxu0 0
    %2456 = vmatprep.subr.bf16.mxu0 0
    %2457 = vmatpush2.bf16.msra.mxu0 0
    %2458 = vmatprep.subr.bf16.mxu0 0
    %2459 = vmatpush2.bf16.msra.mxu0 0
    %2460 = vmatprep.subr.bf16.mxu0 0
    %2461 = vmatpush2.bf16.msra.mxu0 0
    %2462 = vmatprep.subr.bf16.mxu0 0
    %2463 = vmatpush2.bf16.msra.mxu0 0
    %2464 = vmatprep.mubr.bf16.mxu0 0
    %2465 = vmatmul.mubr.bf16.gmra.mxu0 %v2418
    %v2466 = vpop.f32.mrf.mxu0
    %v2467 = vadd.f32 %v2388, %v2466
    %v2468 = vpop.f32.mrf.mxu0
    %v2469 = vpop.f32.mrf.mxu0
    %v2470 = vadd.f32 %v2388, %v2469
    %v2471 = vpop.f32.mrf.mxu0
    %2472 = vmatprep.mubr.bf16.mxu0 0
    %2473 = vmatmul.mubr.bf16.gmra.mxu0 %v2421
    %v2474 = vpop.f32.mrf.mxu0
    %v2475 = vadd.f32 %v2388, %v2474
    %v2476 = vpop.f32.mrf.mxu0
    %v2477 = vpop.f32.mrf.mxu0
    %v2478 = vadd.f32 %v2388, %v2477
    %v2479 = vpop.f32.mrf.mxu0
    %2480 = vmatprep.mubr.bf16.mxu0 0
    %2481 = vmatmul.mubr.bf16.gmra.mxu0 %v2424
    %v2482 = vpop.f32.mrf.mxu0
    %v2483 = vadd.f32 %v2388, %v2482
    %v2484 = vpop.f32.mrf.mxu0
    %v2485 = vpop.f32.mrf.mxu0
    %v2486 = vadd.f32 %v2388, %v2485
    %v2487 = vpop.f32.mrf.mxu0
    %2488 = vmatprep.mubr.bf16.mxu0 0
    %2489 = vmatmul.mubr.bf16.gmra.mxu0 %v2427
    %v2490 = vpop.f32.mrf.mxu0
    %v2491 = vadd.f32 %v2388, %v2490
    %v2492 = vpop.f32.mrf.mxu0
    %v2493 = vpop.f32.mrf.mxu0
    %v2494 = vpop.f32.mrf.mxu0
    %2495 = vdwg.mxu0
    %v2496 = vadd.f32 %v1542, %v2467
    %v2497 = vadd.f32 %v1543, %v2470
    %v2498 = vadd.f32 %v1544, %v2475
    %v2499 = vadd.f32 %v1545, %v2478
    %v2500 = vadd.f32 %v1546, %v2483
    %v2501 = vadd.f32 %v1547, %v2486
    %v2502 = vadd.f32 %v1548, %v2491
    %v2503 = vmax.f32 %v2496, 0.0
    %v2504 = vmax.f32 %v2497, 0.0
    %v2505 = vmax.f32 %v2498, 0.0
    %v2506 = vmax.f32 %v2499, 0.0
    %v2507 = vmax.f32 %v2500, 0.0
    %v2508 = vmax.f32 %v2501, 0.0
    %v2509 = vmax.f32 %v2502, 0.0
    %v2510 = vld [vmem:[%s8] sm:$0xf]
    %v2511 = vld [vmem:[%s8 + $0x4] sm:$0xf]
    %v2512 = vld [vmem:[%s8 + $0x8] sm:$0xf]
    %v2513 = vld [vmem:[%s8 + $0xc] sm:$0xf]
    %v2514 = vld [vmem:[%s8 + $0x10] sm:$0xf]
    %v2515 = vld [vmem:[%s8 + $0x14] sm:$0xf]
    %v2516 = vld [vmem:[%s8 + $0x18] sm:$0xf]
    %v2517 = vld [vmem:[%s8 + $0x1c] sm:$0xf]
    %v2518 = vld [vmem:[%s8 + $0x20] sm:$0xf]
    %v2519 = vld [vmem:[%s8 + $0x24] sm:$0xf]
    %v2520 = vld [vmem:[%s8 + $0x28] sm:$0xf]
    %v2521 = vld [vmem:[%s8 + $0x2c] sm:$0xf]
    %v2522 = vld [vmem:[%s8 + $0x30] sm:$0xf]
    %v2523 = vld [vmem:[%s8 + $0x34] sm:$0xf]
    %v2524 = vld [vmem:[%s8 + $0x38] sm:$0xf]
    %v2525 = vld [vmem:[%s8 + $0x3c] sm:$0xf]
    %v2526 = vld [vmem:[%s8 + $0x40] sm:$0xf]
    %v2527 = vld [vmem:[%s8 + $0x44] sm:$0xf]
    %v2528 = vld [vmem:[%s9] sm:$0x1]
    %v2529 = vsel %vm401, %v2503, 0.0
    %v2530 = vsel %vm401, %v2504, 0.0
    %v2531 = vsel %vm401, %v2505, 0.0
    %v2532 = vsel %vm401, %v2506, 0.0
    %v2533 = vsel %vm401, %v2507, 0.0
    %v2534 = vsel %vm401, %v2508, 0.0
    %v2535 = vsel %vm401, %v2509, 0.0
    %v2543 = vrot.slane %v2529, 2
    %v2544 = vrot.slane %v2530, 2
    %v2545 = vsel %vm100, %v2543, %v2544
    %v2546 = vrot.slane %v2531, 2
    %v2547 = vsel %vm100, %v2544, %v2546
    %v2548 = vrot.slane %v2532, 2
    %v2549 = vsel %vm100, %v2546, %v2548
    %v2550 = vrot.slane %v2533, 2
    %v2551 = vsel %vm100, %v2548, %v2550
    %v2552 = vrot.slane %v2534, 2
    %v2553 = vsel %vm100, %v2550, %v2552
    %v2554 = vrot.slane %v2535, 2
    %v2555 = vsel %vm100, %v2552, %v2554
    %v2563 = vsel %vm100, 0.0, %v2543
    %v2565 = vrot.slane %v2563, 1
    %v2566 = vrot.slane %v2545, 1
    %v2567 = vsel %vm123, %v2565, %v2566
    %v2568 = vrot.slane %v2547, 1
    %v2569 = vsel %vm123, %v2566, %v2568
    %v2570 = vrot.slane %v2549, 1
    %v2571 = vsel %vm123, %v2568, %v2570
    %v2572 = vrot.slane %v2551, 1
    %v2573 = vsel %vm123, %v2570, %v2572
    %v2574 = vrot.slane %v2553, 1
    %v2575 = vsel %vm123, %v2572, %v2574
    %v2576 = vrot.slane %v2555, 1
    %v2577 = vsel %vm123, %v2574, %v2576
    %2578 = vrot.lane.b32.xlu0 %v2567, 16
    %v2579 = vpop.permute.xlu0 %2578
    %2580 = vrot.lane.b32.xlu0 %v2569, 16
    %v2581 = vpop.permute.xlu0 %2580
    %2582 = vrot.lane.b32.xlu0 %v2571, 16
    %v2583 = vpop.permute.xlu0 %2582
    %2584 = vrot.lane.b32.xlu0 %v2573, 16
    %v2585 = vpop.permute.xlu0 %2584
    %2586 = vrot.lane.b32.xlu0 %v2575, 16
    %v2587 = vpop.permute.xlu0 %2586
    %2588 = vrot.lane.b32.xlu0 %v2577, 16
    %v2589 = vpop.permute.xlu0 %2588
    %2590 = vrot.lane.b32.xlu0 %v2576, 16
    %v2591 = vpop.permute.xlu0 %2590
    %v2599 = vrot.slane %v2563, 2
    %v2600 = vrot.slane %v2545, 2
    %v2601 = vsel %vm100, %v2599, %v2600
    %v2602 = vrot.slane %v2547, 2
    %v2603 = vsel %vm100, %v2600, %v2602
    %v2604 = vrot.slane %v2549, 2
    %v2605 = vsel %vm100, %v2602, %v2604
    %v2606 = vrot.slane %v2551, 2
    %v2607 = vsel %vm100, %v2604, %v2606
    %v2608 = vrot.slane %v2553, 2
    %v2609 = vsel %vm100, %v2606, %v2608
    %v2610 = vrot.slane %v2555, 2
    %v2611 = vsel %vm100, %v2608, %v2610
    %2612 = vrot.lane.b32.xlu0 %v2601, 32
    %v2613 = vpop.permute.xlu0 %2612
    %2614 = vrot.lane.b32.xlu0 %v2603, 32
    %v2615 = vpop.permute.xlu0 %2614
    %2616 = vrot.lane.b32.xlu0 %v2605, 32
    %v2617 = vpop.permute.xlu0 %2616
    %2618 = vrot.lane.b32.xlu0 %v2607, 32
    %v2619 = vpop.permute.xlu0 %2618
    %2620 = vrot.lane.b32.xlu0 %v2609, 32
    %v2621 = vpop.permute.xlu0 %2620
    %2622 = vrot.lane.b32.xlu0 %v2611, 32
    %v2623 = vpop.permute.xlu0 %2622
    %2624 = vrot.lane.b32.xlu0 %v2610, 32
    %v2625 = vpop.permute.xlu0 %2624
    %v2633 = vrot.slane %v2563, 5
    %v2634 = vrot.slane %v2545, 5
    %v2635 = vsel %vm192, %v2633, %v2634
    %v2636 = vrot.slane %v2547, 5
    %v2637 = vsel %vm192, %v2634, %v2636
    %v2638 = vrot.slane %v2549, 5
    %v2639 = vsel %vm192, %v2636, %v2638
    %v2640 = vrot.slane %v2551, 5
    %v2641 = vsel %vm192, %v2638, %v2640
    %v2642 = vrot.slane %v2553, 5
    %v2643 = vsel %vm192, %v2640, %v2642
    %v2644 = vrot.slane %v2555, 5
    %v2645 = vsel %vm192, %v2642, %v2644
    %2646 = vrot.lane.b32.xlu0 %v2635, 48
    %v2647 = vpop.permute.xlu0 %2646
    %2648 = vrot.lane.b32.xlu0 %v2637, 48
    %v2649 = vpop.permute.xlu0 %2648
    %2650 = vrot.lane.b32.xlu0 %v2639, 48
    %v2651 = vpop.permute.xlu0 %2650
    %2652 = vrot.lane.b32.xlu0 %v2641, 48
    %v2653 = vpop.permute.xlu0 %2652
    %2654 = vrot.lane.b32.xlu0 %v2643, 48
    %v2655 = vpop.permute.xlu0 %2654
    %2656 = vrot.lane.b32.xlu0 %v2645, 48
    %v2657 = vpop.permute.xlu0 %2656
    %2658 = vrot.lane.b32.xlu0 %v2644, 48
    %v2659 = vpop.permute.xlu0 %2658
    %v2667 = vrot.slane %v2563, 6
    %v2668 = vrot.slane %v2545, 6
    %v2669 = vsel %vm227, %v2667, %v2668
    %v2670 = vrot.slane %v2547, 6
    %v2671 = vsel %vm227, %v2668, %v2670
    %v2672 = vrot.slane %v2549, 6
    %v2673 = vsel %vm227, %v2670, %v2672
    %v2674 = vrot.slane %v2551, 6
    %v2675 = vsel %vm227, %v2672, %v2674
    %v2676 = vrot.slane %v2553, 6
    %v2677 = vsel %vm227, %v2674, %v2676
    %v2678 = vrot.slane %v2555, 6
    %v2679 = vsel %vm227, %v2676, %v2678
    %2680 = vrot.lane.b32.xlu0 %v2669, 64
    %v2681 = vpop.permute.xlu0 %2680
    %2682 = vrot.lane.b32.xlu0 %v2671, 64
    %v2683 = vpop.permute.xlu0 %2682
    %2684 = vrot.lane.b32.xlu0 %v2673, 64
    %v2685 = vpop.permute.xlu0 %2684
    %2686 = vrot.lane.b32.xlu0 %v2675, 64
    %v2687 = vpop.permute.xlu0 %2686
    %2688 = vrot.lane.b32.xlu0 %v2677, 64
    %v2689 = vpop.permute.xlu0 %2688
    %2690 = vrot.lane.b32.xlu0 %v2679, 64
    %v2691 = vpop.permute.xlu0 %2690
    %2692 = vrot.lane.b32.xlu0 %v2678, 64
    %v2693 = vpop.permute.xlu0 %2692
    %v2701 = vrot.slane %v2563, 7
    %v2702 = vrot.slane %v2545, 7
    %v2703 = vsel %vm263, %v2701, %v2702
    %v2704 = vrot.slane %v2547, 7
    %v2705 = vsel %vm263, %v2702, %v2704
    %v2706 = vrot.slane %v2549, 7
    %v2707 = vsel %vm263, %v2704, %v2706
    %v2708 = vrot.slane %v2551, 7
    %v2709 = vsel %vm263, %v2706, %v2708
    %v2710 = vrot.slane %v2553, 7
    %v2711 = vsel %vm263, %v2708, %v2710
    %v2712 = vrot.slane %v2555, 7
    %v2713 = vsel %vm263, %v2710, %v2712
    %v2714 = vsel %vm263, %v2712, %v277
    %2715 = vrot.lane.b32.xlu0 %v2703, 80
    %v2716 = vpop.permute.xlu0 %2715
    %2717 = vrot.lane.b32.xlu0 %v2705, 80
    %v2718 = vpop.permute.xlu0 %2717
    %2719 = vrot.lane.b32.xlu0 %v2707, 80
    %v2720 = vpop.permute.xlu0 %2719
    %2721 = vrot.lane.b32.xlu0 %v2709, 80
    %v2722 = vpop.permute.xlu0 %2721
    %2723 = vrot.lane.b32.xlu0 %v2711, 80
    %v2724 = vpop.permute.xlu0 %2723
    %2725 = vrot.lane.b32.xlu0 %v2713, 80
    %v2726 = vpop.permute.xlu0 %2725
    %2727 = vrot.lane.b32.xlu0 %v2714, 80
    %v2728 = vpop.permute.xlu0 %2727
    %v2736 = vsel %vm100, %v2610, %v300
    %2737 = vrot.lane.b32.xlu0 %v2603, 96
    %v2738 = vpop.permute.xlu0 %2737
    %2739 = vrot.lane.b32.xlu0 %v2605, 96
    %v2740 = vpop.permute.xlu0 %2739
    %2741 = vrot.lane.b32.xlu0 %v2607, 96
    %v2742 = vpop.permute.xlu0 %2741
    %2743 = vrot.lane.b32.xlu0 %v2609, 96
    %v2744 = vpop.permute.xlu0 %2743
    %2745 = vrot.lane.b32.xlu0 %v2611, 96
    %v2746 = vpop.permute.xlu0 %2745
    %2747 = vrot.lane.b32.xlu0 %v2736, 96
    %v2748 = vpop.permute.xlu0 %2747
    %2749 = vrot.lane.b32.xlu0 %v300, 96
    %v2750 = vpop.permute.xlu0 %2749
    %v2758 = vrot.slane %v2545, 3
    %v2759 = vrot.slane %v2547, 3
    %v2760 = vsel %vm323, %v2758, %v2759
    %v2761 = vrot.slane %v2549, 3
    %v2762 = vsel %vm323, %v2759, %v2761
    %v2763 = vrot.slane %v2551, 3
    %v2764 = vsel %vm323, %v2761, %v2763
    %v2765 = vrot.slane %v2553, 3
    %v2766 = vsel %vm323, %v2763, %v2765
    %v2767 = vrot.slane %v2555, 3
    %v2768 = vsel %vm323, %v2765, %v2767
    %v2769 = vsel %vm323, %v2767, %v335
    %2770 = vrot.lane.b32.xlu0 %v2760, 112
    %v2771 = vpop.permute.xlu0 %2770
    %2772 = vrot.lane.b32.xlu0 %v2762, 112
    %v2773 = vpop.permute.xlu0 %2772
    %2774 = vrot.lane.b32.xlu0 %v2764, 112
    %v2775 = vpop.permute.xlu0 %2774
    %2776 = vrot.lane.b32.xlu0 %v2766, 112
    %v2777 = vpop.permute.xlu0 %2776
    %2778 = vrot.lane.b32.xlu0 %v2768, 112
    %v2779 = vpop.permute.xlu0 %2778
    %2780 = vrot.lane.b32.xlu0 %v2769, 112
    %v2781 = vpop.permute.xlu0 %2780
    %2782 = vrot.lane.b32.xlu0 %v335, 112
    %v2783 = vpop.permute.xlu0 %2782
    %v2791 = vrot.slane %v2545, 4
    %v2792 = vrot.slane %v2547, 4
    %v2793 = vsel %vm358, %v2791, %v2792
    %v2794 = vrot.slane %v2549, 4
    %v2795 = vsel %vm358, %v2792, %v2794
    %v2796 = vrot.slane %v2551, 4
    %v2797 = vsel %vm358, %v2794, %v2796
    %v2798 = vrot.slane %v2553, 4
    %v2799 = vsel %vm358, %v2796, %v2798
    %v2800 = vrot.slane %v2555, 4
    %v2801 = vsel %vm358, %v2798, %v2800
    %v2802 = vsel %vm358, %v2800, %v370
    %v2810 = vsel %vm417, %v2563, %v2579
    %v2811 = vsel %vm417, %v2545, %v2581
    %v2812 = vsel %vm417, %v2547, %v2583
    %v2813 = vsel %vm417, %v2549, %v2585
    %v2814 = vsel %vm417, %v2551, %v2587
    %v2815 = vsel %vm417, %v2553, %v2589
    %v2816 = vsel %vm417, %v2555, %v2591
    %v2817 = vsel %vm449, %v2810, %v2613
    %v2818 = vsel %vm449, %v2811, %v2615
    %v2819 = vsel %vm449, %v2812, %v2617
    %v2820 = vsel %vm449, %v2813, %v2619
    %v2821 = vsel %vm449, %v2814, %v2621
    %v2822 = vsel %vm449, %v2815, %v2623
    %v2823 = vsel %vm449, %v2816, %v2625
    %v2824 = vsel %vm910, %v2817, %v2647
    %v2825 = vsel %vm910, %v2818, %v2649
    %v2826 = vsel %vm910, %v2819, %v2651
    %v2827 = vsel %vm910, %v2820, %v2653
    %v2828 = vsel %vm910, %v2821, %v2655
    %v2829 = vsel %vm910, %v2822, %v2657
    %v2830 = vsel %vm910, %v2823, %v2659
    %v2831 = vsel %vm926, %v2824, %v2681
    %v2832 = vsel %vm926, %v2825, %v2683
    %v2833 = vsel %vm926, %v2826, %v2685
    %v2834 = vsel %vm926, %v2827, %v2687
    %v2835 = vsel %vm926, %v2828, %v2689
    %v2836 = vsel %vm926, %v2829, %v2691
    %v2837 = vsel %vm926, %v2830, %v2693
    %vm2838 = vcmask 654336
    %v2839 = vsel %vm2838, %v2831, %v2716
    %v2840 = vsel %vm2838, %v2832, %v2718
    %v2841 = vsel %vm2838, %v2833, %v2720
    %v2842 = vsel %vm2838, %v2834, %v2722
    %v2843 = vsel %vm2838, %v2835, %v2724
    %v2844 = vsel %vm2838, %v2836, %v2726
    %v2845 = vsel %vm2838, %v2837, %v2728
    %vm2846 = vcmask 785408
    %v2847 = vsel %vm2846, %v2839, %v2738
    %v2848 = vsel %vm2846, %v2840, %v2740
    %v2849 = vsel %vm2846, %v2841, %v2742
    %v2850 = vsel %vm2846, %v2842, %v2744
    %v2851 = vsel %vm2846, %v2843, %v2746
    %v2852 = vsel %vm2846, %v2844, %v2748
    %v2853 = vsel %vm2846, %v2845, %v2750
    %vm2854 = vcmask 916480
    %v2855 = vsel %vm2854, %v2847, %v2771
    %v2856 = vsel %vm2854, %v2848, %v2773
    %v2857 = vsel %vm2854, %v2849, %v2775
    %v2858 = vsel %vm2854, %v2850, %v2777
    %v2859 = vsel %vm2854, %v2851, %v2779
    %v2860 = vsel %vm2854, %v2852, %v2781
    %v2861 = vsel %vm2854, %v2853, %v2783
    %v2862 = vmul.f32 %v2855, %v66
    %v2863 = vmul.f32 %v2793, %v67
    %v2864 = vmul.f32 %v2856, %v68
    %v2865 = vmul.f32 %v2795, %v69
    %v2866 = vmul.f32 %v2857, %v70
    %v2867 = vmul.f32 %v2797, %v71
    %v2868 = vmul.f32 %v2858, %v72
    %v2869 = vmul.f32 %v2799, %v73
    %v2870 = vmul.f32 %v2859, %v74
    %v2871 = vmul.f32 %v2801, %v75
    %v2872 = vmul.f32 %v2860, %v76
    %v2873 = vmul.f32 %v2802, %v77
    %v2874 = vmul.f32 %v2861, %v78
    %v2875 = vmul.f32 %v370, %v79
    %v2876 = vpack.c.bf16 %v2864, %v2862
    %v2877 = vpack.c.bf16 %v2865, %v2863
    %v2878 = vpack.c.bf16 %v2868, %v2866
    %v2879 = vpack.c.bf16 %v2869, %v2867
    %v2880 = vpack.c.bf16 %v2872, %v2870
    %v2881 = vpack.c.bf16 %v2873, %v2871
    %v2882 = vpack.c.bf16 %v2874, %v2874
    %v2883 = vpack.c.bf16 %v2875, %v2875
    %v2885 = vlaneseq
    %v2886 = vshrl.u32 %v2885, 7
    %v2887 = vsub.s32 0, %v2886
    %v2888 = vrot.slane %v2528, %v2887
    %v2908 = vunpack.c.l.b16 %v2510
    %v2909 = vunpack.c.l.b16 %v2511
    %v2910 = vunpack.c.l.b16 %v2512
    %v2911 = vunpack.c.l.b16 %v2513
    %v2912 = vunpack.c.l.b16 %v2514
    %v2913 = vunpack.c.l.b16 %v2515
    %v2914 = vunpack.c.l.b16 %v2516
    %v2915 = vunpack.c.l.b16 %v2517
    %v2916 = vunpack.c.l.b16 %v2518
    %v2917 = vunpack.c.l.b16 %v2519
    %v2918 = vunpack.c.l.b16 %v2520
    %v2919 = vunpack.c.l.b16 %v2521
    %v2920 = vunpack.c.l.b16 %v2522
    %v2921 = vunpack.c.l.b16 %v2523
    %v2922 = vunpack.c.l.b16 %v2524
    %v2923 = vunpack.c.l.b16 %v2525
    %v2924 = vunpack.c.l.b16 %v2526
    %v2925 = vunpack.c.l.b16 %v2527
    %v2926 = vpack.c.b16 %v2909, %v2908
    %v2927 = vpack.c.b16 %v2911, %v2910
    %v2928 = vpack.c.b16 %v2913, %v2912
    %v2929 = vpack.c.b16 %v2915, %v2914
    %v2930 = vpack.c.b16 %v2917, %v2916
    %v2931 = vpack.c.b16 %v2919, %v2918
    %v2932 = vpack.c.b16 %v2921, %v2920
    %v2933 = vpack.c.b16 %v2923, %v2922
    %v2934 = vpack.c.b16 %v2925, %v2924
    %v2945 = vsel %vm417, %v2877, 0
    %v2948 = vsel %vm417, %v2879, 0
    %v2951 = vsel %vm417, %v2881, 0
    %v2954 = vsel %vm417, %v2883, 0
    %2956 = vmatprep.subr.bf16.mxu0 0
    %2957 = vmatpush1.bf16.msra.mxu0 %v2933
    %2958 = vmatprep.subr.bf16.mxu0 0
    %2959 = vmatpush1.bf16.msra.mxu0 %v2932
    %2960 = vmatprep.subr.bf16.mxu0 0
    %2961 = vmatpush1.bf16.msra.mxu0 %v2931
    %2962 = vmatprep.subr.bf16.mxu0 0
    %2963 = vmatpush1.bf16.msra.mxu0 %v2930
    %2964 = vmatprep.subr.bf16.mxu0 0
    %2965 = vmatpush1.bf16.msra.mxu0 %v2929
    %2966 = vmatprep.subr.bf16.mxu0 0
    %2967 = vmatpush1.bf16.msra.mxu0 %v2928
    %2968 = vmatprep.subr.bf16.mxu0 0
    %2969 = vmatpush1.bf16.msra.mxu0 %v2927
    %2970 = vmatprep.subr.bf16.mxu0 0
    %2971 = vmatpush1.bf16.msra.mxu0 %v2926
    %2972 = vmatprep.subr.bf16.mxu0 0
    %2973 = vmatpush2.bf16.msra.mxu0 0
    %2974 = vmatprep.subr.bf16.mxu0 0
    %2975 = vmatpush2.bf16.msra.mxu0 0
    %2976 = vmatprep.subr.bf16.mxu0 0
    %2977 = vmatpush2.bf16.msra.mxu0 0
    %2978 = vmatprep.subr.bf16.mxu0 0
    %2979 = vmatpush2.bf16.msra.mxu0 0
    %2980 = vmatprep.subr.bf16.mxu0 0
    %2981 = vmatpush2.bf16.msra.mxu0 0
    %2982 = vmatprep.subr.bf16.mxu0 0
    %2983 = vmatpush2.bf16.msra.mxu0 0
    %2984 = vmatprep.subr.bf16.mxu0 0
    %2985 = vmatpush2.bf16.msra.mxu0 0
    %2986 = vmatprep.subr.bf16.mxu0 0
    %2987 = vmatpush2.bf16.msra.mxu0 %v2934
    %2988 = vmatprep.mubr.bf16.mxu0 %v2945
    %2989 = vmatmul.mubr.bf16.gmra.mxu0 %v2876
    %v2990 = vpop.f32.mrf.mxu0
    %v2991 = vadd.f32 %v2888, %v2990
    %v2992 = vpop.f32.mrf.mxu0
    %v2993 = vpop.f32.mrf.mxu0
    %v2994 = vadd.f32 %v2888, %v2993
    %v2995 = vpop.f32.mrf.mxu0
    %2996 = vmatprep.mubr.bf16.mxu0 %v2948
    %2997 = vmatmul.mubr.bf16.gmra.mxu0 %v2878
    %v2998 = vpop.f32.mrf.mxu0
    %v2999 = vadd.f32 %v2888, %v2998
    %v3000 = vpop.f32.mrf.mxu0
    %v3001 = vpop.f32.mrf.mxu0
    %v3002 = vadd.f32 %v2888, %v3001
    %v3003 = vpop.f32.mrf.mxu0
    %3004 = vmatprep.mubr.bf16.mxu0 %v2951
    %3005 = vmatmul.mubr.bf16.gmra.mxu0 %v2880
    %v3006 = vpop.f32.mrf.mxu0
    %v3007 = vadd.f32 %v2888, %v3006
    %v3008 = vpop.f32.mrf.mxu0
    %v3009 = vpop.f32.mrf.mxu0
    %v3010 = vadd.f32 %v2888, %v3009
    %v3011 = vpop.f32.mrf.mxu0
    %3012 = vmatprep.mubr.bf16.mxu0 %v2954
    %3013 = vmatmul.mubr.bf16.gmra.mxu0 %v2882
    %v3014 = vpop.f32.mrf.mxu0
    %v3015 = vadd.f32 %v2888, %v3014
    %v3016 = vpop.f32.mrf.mxu0
    %v3017 = vpop.f32.mrf.mxu0
    %v3018 = vpop.f32.mrf.mxu0
    %3019 = vdwg.mxu0
    %v3020 = vxor.u32 %v2991, 2147483648
    %v3021 = vxor.u32 %v2994, 2147483648
    %v3022 = vxor.u32 %v2999, 2147483648
    %v3023 = vxor.u32 %v3002, 2147483648
    %v3024 = vxor.u32 %v3007, 2147483648
    %v3025 = vxor.u32 %v3010, 2147483648
    %v3026 = vxor.u32 %v3015, 2147483648
    %v3027 = vmul.f32 %v3020, 1.442695
    %v3028 = vpow.pop %v3027
    %v3029 = vmul.f32 %v3021, 1.442695
    %v3030 = vpow.pop %v3029
    %v3031 = vmul.f32 %v3022, 1.442695
    %v3032 = vpow.pop %v3031
    %v3033 = vmul.f32 %v3023, 1.442695
    %v3034 = vpow.pop %v3033
    %v3035 = vmul.f32 %v3024, 1.442695
    %v3036 = vpow.pop %v3035
    %v3037 = vmul.f32 %v3025, 1.442695
    %v3038 = vpow.pop %v3037
    %v3039 = vmul.f32 %v3026, 1.442695
    %v3040 = vpow.pop %v3039
    %v3041 = vadd.f32 %v3028, 1.0
    %v3042 = vadd.f32 %v3030, 1.0
    %v3043 = vadd.f32 %v3032, 1.0
    %v3044 = vadd.f32 %v3034, 1.0
    %v3045 = vadd.f32 %v3036, 1.0
    %v3046 = vadd.f32 %v3038, 1.0
    %v3047 = vadd.f32 %v3040, 1.0
    %v3048 = vrcp.pop %v3041
    %v3049 = vmul.f32 1.0, %v3048
    %v3050 = vrcp.pop %v3042
    %v3051 = vmul.f32 1.0, %v3050
    %v3052 = vrcp.pop %v3043
    %v3053 = vmul.f32 1.0, %v3052
    %v3054 = vrcp.pop %v3044
    %v3055 = vmul.f32 1.0, %v3054
    %v3056 = vrcp.pop %v3045
    %v3057 = vmul.f32 1.0, %v3056
    %v3058 = vrcp.pop %v3046
    %v3059 = vmul.f32 1.0, %v3058
    %v3060 = vrcp.pop %v3047
    %v3061 = vmul.f32 1.0, %v3060
    %v3062 = vtanh.pop %v2991
    %v3063 = vtanh.pop %v2994
    %v3064 = vtanh.pop %v2999
    %v3065 = vtanh.pop %v3002
    %v3066 = vtanh.pop %v3007
    %v3067 = vtanh.pop %v3010
    %v3068 = vtanh.pop %v3015
    %v3069 = vmul.f32 %v3049, 0.0
    %v3070 = vmul.f32 %v3051, 0.0
    %v3071 = vmul.f32 %v3053, 0.0
    %v3072 = vmul.f32 %v3055, 0.0
    %v3073 = vmul.f32 %v3057, 0.0
    %v3074 = vmul.f32 %v3059, 0.0
    %v3075 = vmul.f32 %v3061, 0.0
    %3083 = vrot.lane.b32.xlu0 %v3062, 112
    %v3084 = vpop.permute.xlu0 %3083
    %3085 = vrot.lane.b32.xlu0 %v3063, 112
    %v3086 = vpop.permute.xlu0 %3085
    %3087 = vrot.lane.b32.xlu0 %v3064, 112
    %v3088 = vpop.permute.xlu0 %3087
    %3089 = vrot.lane.b32.xlu0 %v3065, 112
    %v3090 = vpop.permute.xlu0 %3089
    %3091 = vrot.lane.b32.xlu0 %v3066, 112
    %v3092 = vpop.permute.xlu0 %3091
    %3093 = vrot.lane.b32.xlu0 %v3067, 112
    %v3094 = vpop.permute.xlu0 %3093
    %3095 = vrot.lane.b32.xlu0 %v3068, 112
    %v3096 = vpop.permute.xlu0 %3095
    %v3104 = vmul.f32 %v3049, %v3084
    %v3105 = vmul.f32 %v3051, %v3086
    %v3106 = vmul.f32 %v3053, %v3088
    %v3107 = vmul.f32 %v3055, %v3090
    %v3108 = vmul.f32 %v3057, %v3092
    %v3109 = vmul.f32 %v3059, %v3094
    %v3110 = vmul.f32 %v3061, %v3096
    %3118 = vrot.lane.b32.xlu0 %v3104, 8
    %v3119 = vpop.permute.xlu0 %3118
    %3120 = vrot.lane.b32.xlu0 %v3105, 8
    %v3121 = vpop.permute.xlu0 %3120
    %3122 = vrot.lane.b32.xlu0 %v3106, 8
    %v3123 = vpop.permute.xlu0 %3122
    %3124 = vrot.lane.b32.xlu0 %v3107, 8
    %v3125 = vpop.permute.xlu0 %3124
    %3126 = vrot.lane.b32.xlu0 %v3108, 8
    %v3127 = vpop.permute.xlu0 %3126
    %3128 = vrot.lane.b32.xlu0 %v3109, 8
    %v3129 = vpop.permute.xlu0 %3128
    %3130 = vrot.lane.b32.xlu0 %v3110, 8
    %v3131 = vpop.permute.xlu0 %3130
    %v3139 = vadd.f32 %v3069, %v3119
    %v3140 = vadd.f32 %v3070, %v3121
    %v3141 = vadd.f32 %v3071, %v3123
    %v3142 = vadd.f32 %v3072, %v3125
    %v3143 = vadd.f32 %v3073, %v3127
    %v3144 = vadd.f32 %v3074, %v3129
    %v3145 = vadd.f32 %v3075, %v3131
    %v3146 = vtanh.pop %v3139
    %v3147 = vtanh.pop %v3140
    %v3148 = vtanh.pop %v3141
    %v3149 = vtanh.pop %v3142
    %v3150 = vtanh.pop %v3143
    %v3151 = vtanh.pop %v3144
    %v3152 = vtanh.pop %v3145
    %3160 = vrot.lane.b32.xlu0 %v3146, 16
    %v3161 = vpop.permute.xlu0 %3160
    %3162 = vrot.lane.b32.xlu0 %v3147, 16
    %v3163 = vpop.permute.xlu0 %3162
    %3164 = vrot.lane.b32.xlu0 %v3148, 16
    %v3165 = vpop.permute.xlu0 %3164
    %3166 = vrot.lane.b32.xlu0 %v3149, 16
    %v3167 = vpop.permute.xlu0 %3166
    %3168 = vrot.lane.b32.xlu0 %v3150, 16
    %v3169 = vpop.permute.xlu0 %3168
    %3170 = vrot.lane.b32.xlu0 %v3151, 16
    %v3171 = vpop.permute.xlu0 %3170
    %3172 = vrot.lane.b32.xlu0 %v3152, 16
    %v3173 = vpop.permute.xlu0 %3172
    %v3181 = vmul.f32 %v3049, %v3161
    %v3182 = vmul.f32 %v3051, %v3163
    %v3183 = vmul.f32 %v3053, %v3165
    %v3184 = vmul.f32 %v3055, %v3167
    %v3185 = vmul.f32 %v3057, %v3169
    %v3186 = vmul.f32 %v3059, %v3171
    %v3187 = vmul.f32 %v3061, %v3173
    %v3188 = vmax.f32 %v3181, 0.0
    %v3189 = vmax.f32 %v3182, 0.0
    %v3190 = vmax.f32 %v3183, 0.0
    %v3191 = vmax.f32 %v3184, 0.0
    %v3192 = vmax.f32 %v3185, 0.0
    %v3193 = vmax.f32 %v3186, 0.0
    %v3194 = vmax.f32 %v3187, 0.0
    %v3195 = vpack.c.bf16 %v3189, %v3188
    %v3196 = vpack.c.bf16 %v3191, %v3190
    %v3197 = vpack.c.bf16 %v3193, %v3192
    %v3198 = vpack.c.bf16 %v3194, %v3194
    %v3199 = vld [vmem:[%s10] sm:$0xf]
    %3204 = vrot.lane.b32.xlu0 %v3195, 104
    %v3205 = vpop.permute.xlu0 %3204
    %3206 = vrot.lane.b32.xlu0 %v3196, 104
    %v3207 = vpop.permute.xlu0 %3206
    %3208 = vrot.lane.b32.xlu0 %v3197, 104
    %v3209 = vpop.permute.xlu0 %3208
    %3210 = vrot.lane.b32.xlu0 %v3198, 104
    %v3211 = vpop.permute.xlu0 %3210
    %v3213 = vsel %vm401, %v3205, 0
    %v3216 = vsel %vm401, %v3207, 0
    %v3219 = vsel %vm401, %v3209, 0
    %v3222 = vsel %vm401, %v3211, 0
    %v3225 = vsel %vm358, %v3199, 0
    %3227 = vmatprep.subr.bf16.mxu0 0
    %3228 = vmatpush1.bf16.msra.mxu0 0
    %3229 = vmatprep.subr.bf16.mxu0 0
    %3230 = vmatpush1.bf16.msra.mxu0 0
    %3231 = vmatprep.subr.bf16.mxu0 0
    %3232 = vmatpush1.bf16.msra.mxu0 0
    %3233 = vmatprep.subr.bf16.mxu0 0
    %3234 = vmatpush1.bf16.msra.mxu0 0
    %3235 = vmatprep.subr.bf16.mxu0 0
    %3236 = vmatpush1.bf16.msra.mxu0 0
    %3237 = vmatprep.subr.bf16.mxu0 0
    %3238 = vmatpush1.bf16.msra.mxu0 0
    %3239 = vmatprep.subr.bf16.mxu0 0
    %3240 = vmatpush1.bf16.msra.mxu0 0
    %3241 = vmatprep.subr.bf16.mxu0 0
    %3242 = vmatpush1.bf16.msra.mxu0 %v3225
    %3243 = vmatprep.subr.bf16.mxu0 0
    %3244 = vmatpush2.bf16.msra.mxu0 0
    %3245 = vmatprep.subr.bf16.mxu0 0
    %3246 = vmatpush2.bf16.msra.mxu0 0
    %3247 = vmatprep.subr.bf16.mxu0 0
    %3248 = vmatpush2.bf16.msra.mxu0 0
    %3249 = vmatprep.subr.bf16.mxu0 0
    %3250 = vmatpush2.bf16.msra.mxu0 0
    %3251 = vmatprep.subr.bf16.mxu0 0
    %3252 = vmatpush2.bf16.msra.mxu0 0
    %3253 = vmatprep.subr.bf16.mxu0 0
    %3254 = vmatpush2.bf16.msra.mxu0 0
    %3255 = vmatprep.subr.bf16.mxu0 0
    %3256 = vmatpush2.bf16.msra.mxu0 0
    %3257 = vmatprep.subr.bf16.mxu0 0
    %3258 = vmatpush2.bf16.msra.mxu0 0
    %3259 = vmatprep.mubr.bf16.mxu0 0
    %3260 = vmatmul.mubr.bf16.gmra.mxu0 %v3213
    %v3261 = vpop.f32.mrf.mxu0
    %v3262 = vadd.f32 0.0, %v3261
    %v3263 = vpop.f32.mrf.mxu0
    %v3264 = vpop.f32.mrf.mxu0
    %v3265 = vadd.f32 0.0, %v3264
    %v3266 = vpop.f32.mrf.mxu0
    %3267 = vmatprep.mubr.bf16.mxu0 0
    %3268 = vmatmul.mubr.bf16.gmra.mxu0 %v3216
    %v3269 = vpop.f32.mrf.mxu0
    %v3270 = vadd.f32 0.0, %v3269
    %v3271 = vpop.f32.mrf.mxu0
    %v3272 = vpop.f32.mrf.mxu0
    %v3273 = vadd.f32 0.0, %v3272
    %v3274 = vpop.f32.mrf.mxu0
    %3275 = vmatprep.mubr.bf16.mxu0 0
    %3276 = vmatmul.mubr.bf16.gmra.mxu0 %v3219
    %v3277 = vpop.f32.mrf.mxu0
    %v3278 = vadd.f32 0.0, %v3277
    %v3279 = vpop.f32.mrf.mxu0
    %v3280 = vpop.f32.mrf.mxu0
    %v3281 = vadd.f32 0.0, %v3280
    %v3282 = vpop.f32.mrf.mxu0
    %3283 = vmatprep.mubr.bf16.mxu0 0
    %3284 = vmatmul.mubr.bf16.gmra.mxu0 %v3222
    %v3285 = vpop.f32.mrf.mxu0
    %v3286 = vadd.f32 0.0, %v3285
    %v3287 = vpop.f32.mrf.mxu0
    %v3288 = vpop.f32.mrf.mxu0
    %v3289 = vpop.f32.mrf.mxu0
    %3290 = vdwg.mxu0
    %v3291 = vld [vmem:[%s11] sm:$0xff]
    %v3292 = vld [vmem:[%s11 + $0x8] sm:$0xff]
    %v3293 = vld [vmem:[%s11 + $0x10] sm:$0xff]
    %v3294 = vld [vmem:[%s11 + $0x18] sm:$0xff]
    %v3295 = vld [vmem:[%s11 + $0x20] sm:$0xff]
    %v3296 = vld [vmem:[%s11 + $0x28] sm:$0xff]
    %v3297 = vld [vmem:[%s11 + $0x30] sm:$0x3]
    %v3298 = vmul.f32 %v3262, %v3291
    %v3299 = vmul.f32 %v3265, %v3292
    %v3300 = vmul.f32 %v3270, %v3293
    %v3301 = vmul.f32 %v3273, %v3294
    %v3302 = vmul.f32 %v3278, %v3295
    %v3303 = vmul.f32 %v3281, %v3296
    %v3304 = vmul.f32 %v3286, %v3297
    %v3305 = vld [vmem:[%s12] sm:$0xff]
    %v3306 = vld [vmem:[%s12 + $0x8] sm:$0xff]
    %v3307 = vld [vmem:[%s12 + $0x10] sm:$0xff]
    %v3308 = vld [vmem:[%s12 + $0x18] sm:$0xff]
    %v3309 = vld [vmem:[%s12 + $0x20] sm:$0xff]
    %v3310 = vld [vmem:[%s12 + $0x28] sm:$0xff]
    %v3311 = vld [vmem:[%s12 + $0x30] sm:$0x3]
    %vm3312 = vcmask 408576
    %v3314 = vsel %vm3312, %v3298, 0
    %v3317 = vsel %vm3312, %v3299, 0
    %v3320 = vsel %vm3312, %v3300, 0
    %v3323 = vsel %vm3312, %v3301, 0
    %v3326 = vsel %vm3312, %v3302, 0
    %v3329 = vsel %vm3312, %v3303, 0
    %v3332 = vsel %vm3312, %v3304, 0
    %v3335 = vsel %vm227, %v3311, 0
    %3337 = vmatprep.subr.mxu0 0.0
    %3338 = vmatpush1.msra.mxu0 0.0
    %3339 = vmatprep.subr.mxu0 0.0
    %3340 = vmatpush1.msra.mxu0 0.0
    %3341 = vmatprep.subr.mxu0 0.0
    %3342 = vmatpush1.msra.mxu0 0.0
    %3343 = vmatprep.subr.mxu0 0.0
    %3344 = vmatpush1.msra.mxu0 0.0
    %3345 = vmatprep.subr.mxu0 0.0
    %3346 = vmatpush1.msra.mxu0 0.0
    %3347 = vmatprep.subr.mxu0 0.0
    %3348 = vmatpush1.msra.mxu0 0.0
    %3349 = vmatprep.subr.mxu0 0.0
    %3350 = vmatpush1.msra.mxu0 0.0
    %3351 = vmatprep.subr.mxu0 0.0
    %3352 = vmatpush1.msra.mxu0 0.0
    %3353 = vmatprep.subr.mxu0 0.0
    %3354 = vmatpush1.msra.mxu0 0.0
    %3355 = vmatprep.subr.mxu0 0.0
    %3356 = vmatpush1.msra.mxu0 %v3335
    %3357 = vmatprep.subr.mxu0 0.0
    %3358 = vmatpush1.msra.mxu0 %v3310
    %3359 = vmatprep.subr.mxu0 0.0
    %3360 = vmatpush1.msra.mxu0 %v3309
    %3361 = vmatprep.subr.mxu0 0.0
    %3362 = vmatpush1.msra.mxu0 %v3308
    %3363 = vmatprep.subr.mxu0 0.0
    %3364 = vmatpush1.msra.mxu0 %v3307
    %3365 = vmatprep.subr.mxu0 0.0
    %3366 = vmatpush1.msra.mxu0 %v3306
    %3367 = vmatprep.subr.mxu0 0.0
    %3368 = vmatpush1.msra.mxu0 %v3305
    %3369 = vmatprep.subr.mxu0 0.0
    %3370 = vmatpush2.msra.mxu0 0.0
    %3371 = vmatprep.subr.mxu0 0.0
    %3372 = vmatpush2.msra.mxu0 0.0
    %3373 = vmatprep.subr.mxu0 0.0
    %3374 = vmatpush2.msra.mxu0 0.0
    %3375 = vmatprep.subr.mxu0 0.0
    %3376 = vmatpush2.msra.mxu0 0.0
    %3377 = vmatprep.subr.mxu0 0.0
    %3378 = vmatpush2.msra.mxu0 0.0
    %3379 = vmatprep.subr.mxu0 0.0
    %3380 = vmatpush2.msra.mxu0 0.0
    %3381 = vmatprep.subr.mxu0 0.0
    %3382 = vmatpush2.msra.mxu0 0.0
    %3383 = vmatprep.subr.mxu0 0.0
    %3384 = vmatpush2.msra.mxu0 0.0
    %3385 = vmatprep.subr.mxu0 0.0
    %3386 = vmatpush2.msra.mxu0 0.0
    %3387 = vmatprep.subr.mxu0 0.0
    %3388 = vmatpush2.msra.mxu0 0.0
    %3389 = vmatprep.subr.mxu0 0.0
    %3390 = vmatpush2.msra.mxu0 0.0
    %3391 = vmatprep.subr.mxu0 0.0
    %3392 = vmatpush2.msra.mxu0 0.0
    %3393 = vmatprep.subr.mxu0 0.0
    %3394 = vmatpush2.msra.mxu0 0.0
    %3395 = vmatprep.subr.mxu0 0.0
    %3396 = vmatpush2.msra.mxu0 0.0
    %3397 = vmatprep.subr.mxu0 0.0
    %3398 = vmatpush2.msra.mxu0 0.0
    %3399 = vmatprep.subr.mxu0 0.0
    %3400 = vmatpush2.msra.mxu0 0.0
    %3401 = vmatprep.mubr.f32.mxu0 0.0
    %3402 = vmatmul.mubr.f32.gmra.mxu0 %v3314
    %v3403 = vpop.f32.mrf.mxu0
    %v3404 = vadd.f32 0.0, %v3403
    %v3405 = vpop.f32.mrf.mxu0
    %3406 = vmatprep.mubr.f32.mxu0 0.0
    %3407 = vmatmul.mubr.f32.gmra.mxu0 %v3317
    %v3408 = vpop.f32.mrf.mxu0
    %v3409 = vadd.f32 0.0, %v3408
    %v3410 = vpop.f32.mrf.mxu0
    %3411 = vmatprep.mubr.f32.mxu0 0.0
    %3412 = vmatmul.mubr.f32.gmra.mxu0 %v3320
    %v3413 = vpop.f32.mrf.mxu0
    %v3414 = vadd.f32 0.0, %v3413
    %v3415 = vpop.f32.mrf.mxu0
    %3416 = vmatprep.mubr.f32.mxu0 0.0
    %3417 = vmatmul.mubr.f32.gmra.mxu0 %v3323
    %v3418 = vpop.f32.mrf.mxu0
    %v3419 = vadd.f32 0.0, %v3418
    %v3420 = vpop.f32.mrf.mxu0
    %3421 = vmatprep.mubr.f32.mxu0 0.0
    %3422 = vmatmul.mubr.f32.gmra.mxu0 %v3326
    %v3423 = vpop.f32.mrf.mxu0
    %v3424 = vadd.f32 0.0, %v3423
    %v3425 = vpop.f32.mrf.mxu0
    %3426 = vmatprep.mubr.f32.mxu0 0.0
    %3427 = vmatmul.mubr.f32.gmra.mxu0 %v3329
    %v3428 = vpop.f32.mrf.mxu0
    %v3429 = vadd.f32 0.0, %v3428
    %v3430 = vpop.f32.mrf.mxu0
    %3431 = vmatprep.mubr.f32.mxu0 0.0
    %3432 = vmatmul.mubr.f32.gmra.mxu0 %v3332
    %v3433 = vpop.f32.mrf.mxu0
    %v3434 = vadd.f32 0.0, %v3433
    %v3435 = vpop.f32.mrf.mxu0
    %3436 = vdwg.mxu0
    %v3437 = vld [vmem:[%s13] sm:$0x3]
    %v3438 = vld [vmem:[%s14] sm:$0x1]
    %v3440 = vlaneseq
    %v3441 = vshrl.u32 %v3440, 7
    %v3442 = vsub.s32 0, %v3441
    %v3443 = vrot.slane %v3438, %v3442
    %v3446 = vsel %vm3312, %v3437, 0
    %v3449 = vsel %vm227, %v3434, 0
    %3451 = vmatprep.subr.mxu0 0.0
    %3452 = vmatpush1.msra.mxu0 0.0
    %3453 = vmatprep.subr.mxu0 0.0
    %3454 = vmatpush1.msra.mxu0 0.0
    %3455 = vmatprep.subr.mxu0 0.0
    %3456 = vmatpush1.msra.mxu0 0.0
    %3457 = vmatprep.subr.mxu0 0.0
    %3458 = vmatpush1.msra.mxu0 0.0
    %3459 = vmatprep.subr.mxu0 0.0
    %3460 = vmatpush1.msra.mxu0 0.0
    %3461 = vmatprep.subr.mxu0 0.0
    %3462 = vmatpush1.msra.mxu0 0.0
    %3463 = vmatprep.subr.mxu0 0.0
    %3464 = vmatpush1.msra.mxu0 0.0
    %3465 = vmatprep.subr.mxu0 0.0
    %3466 = vmatpush1.msra.mxu0 0.0
    %3467 = vmatprep.subr.mxu0 0.0
    %3468 = vmatpush1.msra.mxu0 0.0
    %3469 = vmatprep.subr.mxu0 0.0
    %3470 = vmatpush1.msra.mxu0 %v3449
    %3471 = vmatprep.subr.mxu0 0.0
    %3472 = vmatpush1.msra.mxu0 %v3429
    %3473 = vmatprep.subr.mxu0 0.0
    %3474 = vmatpush1.msra.mxu0 %v3424
    %3475 = vmatprep.subr.mxu0 0.0
    %3476 = vmatpush1.msra.mxu0 %v3419
    %3477 = vmatprep.subr.mxu0 0.0
    %3478 = vmatpush1.msra.mxu0 %v3414
    %3479 = vmatprep.subr.mxu0 0.0
    %3480 = vmatpush1.msra.mxu0 %v3409
    %3481 = vmatprep.subr.mxu0 0.0
    %3482 = vmatpush1.msra.mxu0 %v3404
    %3483 = vmatprep.subr.mxu0 0.0
    %3484 = vmatpush2.msra.mxu0 0.0
    %3485 = vmatprep.subr.mxu0 0.0
    %3486 = vmatpush2.msra.mxu0 0.0
    %3487 = vmatprep.subr.mxu0 0.0
    %3488 = vmatpush2.msra.mxu0 0.0
    %3489 = vmatprep.subr.mxu0 0.0
    %3490 = vmatpush2.msra.mxu0 0.0
    %3491 = vmatprep.subr.mxu0 0.0
    %3492 = vmatpush2.msra.mxu0 0.0
    %3493 = vmatprep.subr.mxu0 0.0
    %3494 = vmatpush2.msra.mxu0 0.0
    %3495 = vmatprep.subr.mxu0 0.0
    %3496 = vmatpush2.msra.mxu0 0.0
    %3497 = vmatprep.subr.mxu0 0.0
    %3498 = vmatpush2.msra.mxu0 0.0
    %3499 = vmatprep.subr.mxu0 0.0
    %3500 = vmatpush2.msra.mxu0 0.0
    %3501 = vmatprep.subr.mxu0 0.0
    %3502 = vmatpush2.msra.mxu0 0.0
    %3503 = vmatprep.subr.mxu0 0.0
    %3504 = vmatpush2.msra.mxu0 0.0
    %3505 = vmatprep.subr.mxu0 0.0
    %3506 = vmatpush2.msra.mxu0 0.0
    %3507 = vmatprep.subr.mxu0 0.0
    %3508 = vmatpush2.msra.mxu0 0.0
    %3509 = vmatprep.subr.mxu0 0.0
    %3510 = vmatpush2.msra.mxu0 0.0
    %3511 = vmatprep.subr.mxu0 0.0
    %3512 = vmatpush2.msra.mxu0 0.0
    %3513 = vmatprep.subr.mxu0 0.0
    %3514 = vmatpush2.msra.mxu0 0.0
    %3515 = vmatprep.mubr.f32.mxu0 0.0
    %3516 = vmatmul.mubr.f32.gmra.mxu0 %v3446
    %v3517 = vpop.f32.mrf.mxu0
    %v3518 = vadd.f32 %v3443, %v3517
    %v3519 = vpop.f32.mrf.mxu0
    %3520 = vdwg.mxu0
    %v3521 = vmax.f32 %v3518, 0.0
    %vm3522 = vcmask 9216
    %v3523 = vsel %vm3522, %v3521, -inf
    %3524 = vmax.xlane.f32.xlu0 %v3523
    %v3525 = vpop.xlane.xlu0 %3524
    %v3526 = vsub.f32 %v3521, %v3525
    %v3527 = vmul.f32 %v3526, 1.442695
    %v3528 = vpow.pop %v3527
    %v3529 = vsel %vm3522, %v3528, 0.0
    %3530 = vadd.xlane.f32.xlu0 %v3529
    %v3531 = vpop.xlane.xlu0 %3530
    %v3532 = vrcp.pop %v3531
    %v3533 = vmul.f32 %v3528, %v3532
    %3534 = vst.msk [vmem:[#allocation2] sm:$0x3] %vm3522, %v3533
    // Predicated region
    $region62: #{tpu_custom_call.1} parent=1 // pred_check
      _
    $region63: #{tpu_custom_call.1} parent=1 // pred_check_branch
      %3536 = sbr.rel (0) target = $region65
    $region64: #{tpu_custom_call.1} parent=1 // pred_region
      %s3538 = ssub.s32 32, 32
      %3539 = vsyncadd [#allocation3], %s3538
      %s3541 = sshll.u32 [#allocation2], 4
      %s3542 = int_to_ptr.vmem [resolvable:$true] %s3541
      %3544 = dma.vmem_to_hbm [thread:$0]  %s3542, 32, %s15, [#allocation3]
    $region65: #{tpu_custom_call.1} parent=1 // pred_fallthru
      _
    // Predicated region
    $region66: #{tpu_custom_call.1} parent=1 // pred_check
      _
    $region67: #{tpu_custom_call.1} parent=1 // pred_check_branch
      %3546 = sbr.rel (0) target = $region69
    $region68: #{tpu_custom_call.1} parent=1 // pred_region
      %3547 = dma.done [#allocation3], 32
    $region69: #{tpu_custom_call.1} parent=1 // pred_fallthru
      _
    %3548 = vsyncpa [#allocation3], 1

</llo_original>
